<compile_context>
chip_gen: v5e
topology: v5e:2x2
jax: 0.10.0
libtpu: 0.0.40
codegen_flags: <defaults>
</compile_context>

<pallas_src>
import functools
import math

import jax
import jax.numpy as jnp
from jax.experimental import pallas as pl
from jax.experimental.pallas import tpu as pltpu

_NEG_INF = -1e30  # finite masked-score bias: exp() underflows to 0, no -inf NaN hazard


def _pick_q_tile(seq_len, target):
    """Largest query tile <= target that divides seq_len (multiple of 8 sublanes)."""
    if seq_len <= target:
        return seq_len
    for t in range(min(target, seq_len), 7, -1):
        if seq_len % t == 0 and t % 8 == 0:
            return t
    return seq_len


def _vmem_limit_bytes(packed, St, Ss, D, d_ff, tq):
    """Explicit scoped-VMEM budget: resident weights + pipelined activation blocks
    + dominant live intermediates, with headroom."""
    weight_bytes = sum(int(v.size) * v.dtype.itemsize for v in packed.values())
    # per-grid-step activation blocks (double-buffered by the pipeline), all f32
    act_bytes = 2 * 4 * (St * D + Ss * D + tq * St + tq * Ss + tq * D)
    # dominant live f32 intermediates: LN(x) full, fused KV projections, one head's
    # scores, FFN hidden, accumulators
    inter_bytes = 4 * (2 * St * D + 2 * St * D + 2 * Ss * D
                       + 3 * tq * max(St, Ss) + tq * d_ff + 6 * tq * D)
    est = weight_bytes + act_bytes + inter_bytes
    return int(min(max(2 * est, 32 << 20), 96 << 20))


# ------------------------------ fused kernel --------------------------------
def _decoder_layer_kernel(n_heads, eps, causal_tgt, *refs):
    f32, bf16 = jnp.float32, jnp.bfloat16

    if causal_tgt:
        (x_ref, mem_ref, sb_ref,
         wqs_ref, bqs_ref, wkvs_ref, bkvs_ref, wos_ref, bos_ref,
         wqc_ref, bqc_ref, wkvc_ref, bkvc_ref, woc_ref, boc_ref,
         w1_ref, b1_ref, w2_ref, b2_ref,
         lns_ref, lnb_ref, o_ref) = refs
        tb_ref = None
    else:
        (x_ref, mem_ref, tb_ref, sb_ref,
         wqs_ref, bqs_ref, wkvs_ref, bkvs_ref, wos_ref, bos_ref,
         wqc_ref, bqc_ref, wkvc_ref, bkvc_ref, woc_ref, boc_ref,
         w1_ref, b1_ref, w2_ref, b2_ref,
         lns_ref, lnb_ref, o_ref) = refs

    St, D = x_ref.shape            # full target sequence (self-attn keys)
    tq = o_ref.shape[0]            # query tile handled by this grid step
    dk = D // n_heads
    q0 = pl.multiple_of(pl.program_id(1) * tq, tq)

    ln_scale = lns_ref[...]        # (3, D)
    ln_bias = lnb_ref[...]         # (3, D)

    def layer_norm(v, i):
        # torch: a * (x - mean) / (std + eps) + b, unbiased std (N-1); EUP reciprocal.
        mean = jnp.mean(v, axis=-1, keepdims=True)
        var = jnp.sum((v - mean) ** 2, axis=-1, keepdims=True) * (1.0 / (D - 1))
        inv = pl.reciprocal(jnp.sqrt(var) + eps, approx=True)
        return ln_scale[i:i + 1, :] * (v - mean) * inv + ln_bias[i:i + 1, :]

    def mha(q, k, v, bias, wo_ref):
        # q: (tq, D) with 1/sqrt(dk) pre-folded; k/v: (Sk, D); bias: (tq, Sk) additive.
        # Head output is folded through Wo's row slice into a (tq, D) accumulator:
        # no lane concat, second matmul N = D (MXU-wide) instead of dk.
        acc = jnp.zeros((q.shape[0], D), dtype=f32)
        for h in range(n_heads):
            sl = slice(h * dk, (h + 1) * dk)
            qh = q[:, sl].astype(bf16)
            kh = k[:, sl].astype(bf16)
            vh = v[:, sl].astype(bf16)
            s = jax.lax.dot_general(qh, kh, (((1,), (1,)), ((), ())),
                                    preferred_element_type=f32) + bias
            m = jnp.max(s, axis=-1, keepdims=True)
            e = jnp.exp(s - m)
            p = e * pl.reciprocal(jnp.sum(e, axis=-1, keepdims=True), approx=True)
            oh = jnp.dot(p.astype(bf16), vh, preferred_element_type=f32)
            acc = acc + jnp.dot(oh.astype(bf16), wo_ref[sl, :],
                                preferred_element_type=f32)
        return acc

    x_full = x_ref[...]                                   # (St, D) f32
    xq = x_full if tq == St else x_ref[pl.ds(q0, tq), :]  # (tq, D) residual stream

    # additive tgt bias for this query tile
    if causal_tgt:
        rows = jax.lax.broadcasted_iota(jnp.int32, (tq, St), 0) + q0
        cols = jax.lax.broadcasted_iota(jnp.int32, (tq, St), 1)
        tb = jnp.where(cols <= rows, 0.0, _NEG_INF).astype(f32)
    else:
        tb = tb_ref[...]

    # ---- sublayer 0: masked self-attention (dropout = identity) ----
    xn_full = layer_norm(x_full, 0)
    xn_q = xn_full if tq == St else layer_norm(xq, 0)
    q = jnp.dot(xn_q.astype(bf16), wqs_ref[...], preferred_element_type=f32) + bqs_ref[...]
    kv = jnp.dot(xn_full.astype(bf16), wkvs_ref[...], preferred_element_type=f32) + bkvs_ref[...]
    xq = xq + mha(q, kv[:, :D], kv[:, D:], tb, wos_ref) + bos_ref[...]

    # ---- sublayer 1: cross-attention over raw encoder memory ----
    xn_q = layer_norm(xq, 1)
    qc = jnp.dot(xn_q.astype(bf16), wqc_ref[...], preferred_element_type=f32) + bqc_ref[...]
    kvc = jnp.dot(mem_ref[...].astype(bf16), wkvc_ref[...],
                  preferred_element_type=f32) + bkvc_ref[...]
    xq = xq + mha(qc, kvc[:, :D], kvc[:, D:], sb_ref[...], woc_ref) + boc_ref[...]

    # ---- sublayer 2: position-wise feed-forward ----
    xn_q = layer_norm(xq, 2)
    hid = jnp.maximum(
        jnp.dot(xn_q.astype(bf16), w1_ref[...], preferred_element_type=f32) + b1_ref[...], 0.0)
    ff = jnp.dot(hid.astype(bf16), w2_ref[...], preferred_element_type=f32) + b2_ref[...]
    o_ref[...] = (xq + ff).astype(o_ref.dtype)


# ------------------------------ host wrapper ---------------------------------
def pack_params(params, n_heads):
    """Fuse K|V weights, fold 1/sqrt(dk) into Q, cast weights to bf16 (MXU operands),
    keep biases / LayerNorm params in f32."""
    (wq_s, bq_s, wk_s, bk_s, wv_s, bv_s, wo_s, bo_s) = params["self_attn"]
    (wq_c, bq_c, wk_c, bk_c, wv_c, bv_c, wo_c, bo_c) = params["src_attn"]
    (w1, b1, w2, b2) = params["ff"]
    (a0, c0), (a1, c1), (a2, c2) = params["ln"]

    D = wq_s.shape[0]
    dk = D // n_heads
    scale = 1.0 / math.sqrt(dk)
    f32, bf16 = jnp.float32, jnp.bfloat16

    def row(b):
        return b.reshape(1, -1).astype(f32)

    return dict(
        wq_s=(wq_s * scale).astype(bf16), bq_s=row(bq_s * scale),
        wkv_s=jnp.concatenate([wk_s, wv_s], axis=1).astype(bf16),
        bkv_s=row(jnp.concatenate([bk_s, bv_s])),
        wo_s=wo_s.astype(bf16), bo_s=row(bo_s),
        wq_c=(wq_c * scale).astype(bf16), bq_c=row(bq_c * scale),
        wkv_c=jnp.concatenate([wk_c, wv_c], axis=1).astype(bf16),
        bkv_c=row(jnp.concatenate([bk_c, bv_c])),
        wo_c=wo_c.astype(bf16), bo_c=row(bo_c),
        w1=w1.astype(bf16), b1=row(b1),
        w2=w2.astype(bf16), b2=row(b2),
        ln_scale=jnp.stack([a0, a1, a2]).astype(f32),
        ln_bias=jnp.stack([c0, c1, c2]).astype(f32),
    )


_WEIGHT_ORDER = ["wq_s", "bq_s", "wkv_s", "bkv_s", "wo_s", "bo_s",
                 "wq_c", "bq_c", "wkv_c", "bkv_c", "wo_c", "bo_c",
                 "w1", "b1", "w2", "b2", "ln_scale", "ln_bias"]


def decoder_layer_forward(x, memory, src_mask, tgt_mask, packed, n_heads,
                          eps=1e-6, q_tile=128, causal_tgt=False,
                          single_buffer_weights=True):
    B, St, D = x.shape
    Ss = memory.shape[1]
    d_ff = packed["w1"].shape[1]
    f32 = jnp.float32

    tq = _pick_q_tile(St, q_tile)
    n_qt = St // tq

    kernel = functools.partial(_decoder_layer_kernel, n_heads, eps, causal_tgt)

    def const_spec(shape):
        # Grid-invariant weights: single-buffer (double buffering only doubles VMEM).
        if single_buffer_weights:
            return pl.BlockSpec(shape, lambda b, t: (0, 0),
                                pipeline_mode=pl.Buffered(1))
        return pl.BlockSpec(shape, lambda b, t: (0, 0))

    in_specs = [
        pl.BlockSpec((None, St, D), lambda b, t: (b, 0, 0)),   # x (full: self-attn keys)
        pl.BlockSpec((None, Ss, D), lambda b, t: (b, 0, 0)),   # memory
    ]
    args = [x, memory]

    if not causal_tgt:
        tgt_bias = jnp.where(tgt_mask == 0, _NEG_INF, 0.0).astype(f32)
        in_specs.append(pl.BlockSpec((None, tq, St), lambda b, t: (b, t, 0)))
        args.append(tgt_bias)
    src_bias = jnp.where(src_mask == 0, _NEG_INF, 0.0).astype(f32)
    in_specs.append(pl.BlockSpec((None, tq, Ss), lambda b, t: (b, t, 0)))
    args.append(src_bias)

    for name in _WEIGHT_ORDER:
        w = packed[name]
        in_specs.append(const_spec(w.shape))
        args.append(w)

    vmem_limit = _vmem_limit_bytes(packed, St, Ss, D, d_ff, tq)

    return pl.pallas_call(
        kernel,
        out_shape=jax.ShapeDtypeStruct((B, St, D), f32),
        grid=(B, n_qt),
        in_specs=in_specs,
        out_specs=pl.BlockSpec((None, tq, D), lambda b, t: (b, t, 0)),
        compiler_params=pltpu.CompilerParams(
            dimension_semantics=("parallel", "parallel"),
            vmem_limit_bytes=vmem_limit),
    )(*args)


# ------------------------------ references -----------------------------------
def _reference_mirrored(x, memory, src_mask, tgt_mask, pk, n_heads, eps=1e-6):
    """Pure-JAX restatement mirroring the kernel's precision choices (bf16 MXU
    operands, f32 accumulation, folded Q scale, additive mask)."""
    f32, bf16 = jnp.float32, jnp.bfloat16
    D = x.shape[-1]
    dk = D // n_heads
    tgt_bias = jnp.where(tgt_mask == 0, _NEG_INF, 0.0).astype(f32)
    src_bias = jnp.where(src_mask == 0, _NEG_INF, 0.0).astype(f32)

    def ln(v, i):
        mean = v.mean(-1, keepdims=True)
        std = jnp.sqrt(jnp.sum((v - mean) ** 2, -1, keepdims=True) / (D - 1))
        return pk["ln_scale"][i] * (v - mean) / (std + eps) + pk["ln_bias"][i]

    def dot(a, w):
        return jnp.dot(a.astype(bf16), w, preferred_element_type=f32)

    def mha(q, k, v, bias, wo, bo):
        B, Sq, _ = q.shape
        Sk = k.shape[1]
        qh = q.reshape(B, Sq, n_heads, dk).astype(bf16)
        kh = k.reshape(B, Sk, n_heads, dk).astype(bf16)
        vh = v.reshape(B, Sk, n_heads, dk).astype(bf16)
        s = jnp.einsum("bqhd,bkhd->bhqk", qh, kh, preferred_element_type=f32) + bias[:, None]
        m = s.max(-1, keepdims=True)
        e = jnp.exp(s - m)
        p = e / e.sum(-1, keepdims=True)
        o = jnp.einsum("bhqk,bkhd->bqhd", p.astype(bf16), vh, preferred_element_type=f32)
        return dot(o.reshape(B, Sq, D), wo) + bo

    xn = ln(x, 0)
    q = dot(xn, pk["wq_s"]) + pk["bq_s"]
    kv = dot(xn, pk["wkv_s"]) + pk["bkv_s"]
    x = x + mha(q, kv[..., :D], kv[..., D:], tgt_bias, pk["wo_s"], pk["bo_s"])

    xn = ln(x, 1)
    q = dot(xn, pk["wq_c"]) + pk["bq_c"]
    kv = dot(memory, pk["wkv_c"]) + pk["bkv_c"]
    x = x + mha(q, kv[..., :D], kv[..., D:], src_bias, pk["wo_c"], pk["bo_c"])

    xn = ln(x, 2)
    hid = jnp.maximum(dot(xn, pk["w1"]) + pk["b1"], 0.0)
    return x + dot(hid, pk["w2"]) + pk["b2"]


def _reference_f32(x, memory, src_mask, tgt_mask, params, n_heads, eps=1e-6):
    """Plain-f32 torch-style reference (loose check: kernel runs bf16 MXU ops)."""
    def layer_norm(v, a, b):
        mean = v.mean(-1, keepdims=True)
        std = jnp.sqrt(jnp.sum((v - mean) ** 2, -1, keepdims=True) / (v.shape[-1] - 1))
        return a * (v - mean) / (std + eps) + b

    def mha(qin, kin, vin, mask, p8):
        wq, bq, wk, bk, wv, bv, wo, bo = p8
        B, Sq, D = qin.shape
        dk = D // n_heads
        q = (qin @ wq + bq).reshape(B, Sq, n_heads, dk).transpose(0, 2, 1, 3)
        k = (kin @ wk + bk).reshape(B, -1, n_heads, dk).transpose(0, 2, 1, 3)
        v = (vin @ wv + bv).reshape(B, -1, n_heads, dk).transpose(0, 2, 1, 3)
        s = jnp.einsum("bhqd,bhkd->bhqk", q, k) / math.sqrt(dk)
        s = jnp.where(mask[:, None] == 0, -1e9, s)
        p = jax.nn.softmax(s, axis=-1)
        o = jnp.einsum("bhqk,bhkd->bhqd", p, v).transpose(0, 2, 1, 3).reshape(B, Sq, D)
        return o @ wo + bo

    (a0, c0), (a1, c1), (a2, c2) = params["ln"]
    x = x + mha(layer_norm(x, a0, c0), layer_norm(x, a0, c0), layer_norm(x, a0, c0),
                tgt_mask, params["self_attn"])
    x = x + mha(layer_norm(x, a1, c1), memory, memory, src_mask, params["src_attn"])
    w1, b1, w2, b2 = params["ff"]
    xn = layer_norm(x, a2, c2)
    return x + (jnp.maximum(xn @ w1 + b1, 0.0) @ w2 + b2)


# --------------------------------- test ---------------------------------------
if __name__ == "__main__":
    B, St, Ss, D, H = 2, 8, 16, 32, 4      # batch, tgt seq, src seq, d_model, heads
    d_ff = 4 * D
    f32 = jnp.float32

    keys = iter(jax.random.split(jax.random.PRNGKey(0), 40))
    nk = lambda: next(keys)

    def init_linear(din, dout):
        bound = 1.0 / math.sqrt(din)       # nn.Linear default init
        w = jax.random.uniform(nk(), (din, dout), f32, -bound, bound)
        b = jax.random.uniform(nk(), (dout,), f32, -bound, bound)
        return w, b

    def init_attn():
        ws = [init_linear(D, D) for _ in range(4)]
        return tuple(t for pair in ws for t in pair)   # wq,bq,wk,bk,wv,bv,wo,bo

    def init_ln():
        return (1.0 + 0.1 * jax.random.normal(nk(), (D,), f32),
                0.1 * jax.random.normal(nk(), (D,), f32))

    w1, b1 = init_linear(D, d_ff)
    w2, b2 = init_linear(d_ff, D)
    params = {
        "self_attn": init_attn(),
        "src_attn": init_attn(),
        "ff": (w1, b1, w2, b2),
        "ln": (init_ln(), init_ln(), init_ln()),
    }
    packed = pack_params(params, H)

    # ---- case 1: single query tile, causal tgt bias generated in-kernel ----
    x = jax.random.normal(nk(), (B, St, D), f32)
    memory = jax.random.normal(nk(), (B, Ss, D), f32)
    tgt_mask = jnp.broadcast_to(jnp.tril(jnp.ones((St, St), f32)), (B, St, St))
    src_mask = jnp.ones((B, St, Ss), f32).at[1, :, Ss - 4:].set(0.0)

    single_buf = True
    try:
        out = decoder_layer_forward(x, memory, src_mask, tgt_mask, packed, H,
                                    causal_tgt=True, single_buffer_weights=True)
        out = jax.block_until_ready(out)
    except Exception:
        # TODO(synk): pl.Buffered(1) single-buffering unavailable on this jax version;
        #             fall back to default double-buffered weight BlockSpecs.
        single_buf = False
        out = decoder_layer_forward(x, memory, src_mask, tgt_mask, packed, H,
                                    causal_tgt=True, single_buffer_weights=False)
        out = jax.block_until_ready(out)

    ref_m = _reference_mirrored(x, memory, src_mask, tgt_mask, packed, H)
    ref_f = _reference_f32(x, memory, src_mask, tgt_mask, params, H)
    assert bool(jnp.allclose(out, ref_m, atol=3e-2, rtol=3e-2)), "case1: mismatch vs mirrored reference"
    assert bool(jnp.allclose(out, ref_f, atol=1e-1, rtol=1e-1)), "case1: mismatch vs f32 reference"

    # ---- case 2: query-tiled grid (grid=(B, 2)), explicit tgt mask path ----
    St2, Ss2 = 16, 24
    x2 = jax.random.normal(nk(), (B, St2, D), f32)
    memory2 = jax.random.normal(nk(), (B, Ss2, D), f32)
    tgt_mask2 = jnp.broadcast_to(jnp.tril(jnp.ones((St2, St2), f32)), (B, St2, St2))
    src_mask2 = jnp.ones((B, St2, Ss2), f32).at[0, :, Ss2 - 8:].set(0.0)

    out2 = decoder_layer_forward(x2, memory2, src_mask2, tgt_mask2, packed, H,
                                 q_tile=8, causal_tgt=False,
                                 single_buffer_weights=single_buf)
    out2 = jax.block_until_ready(out2)
    ref2_m = _reference_mirrored(x2, memory2, src_mask2, tgt_mask2, packed, H)
    ref2_f = _reference_f32(x2, memory2, src_mask2, tgt_mask2, params, H)
    assert bool(jnp.allclose(out2, ref2_m, atol=3e-2, rtol=3e-2)), "case2: mismatch vs mirrored reference"
    assert bool(jnp.allclose(out2, ref2_f, atol=1e-1, rtol=1e-1)), "case2: mismatch vs f32 reference"

    print("KERNEL_OK")
</pallas_src>

<mosaic_0001>
module attributes {stable_mosaic.version = 11 : i64} {
  func.func @_decoder_layer_kernel(%arg0: i32, %arg1: i32, %arg2: memref<1x8x32xf32, #tpu.memory_space<vmem>>, %arg3: memref<1x16x32xf32, #tpu.memory_space<vmem>>, %arg4: memref<1x8x16xf32, #tpu.memory_space<vmem>>, %arg5: memref<32x32xbf16, #tpu.memory_space<vmem>>, %arg6: memref<1x32xf32, #tpu.memory_space<vmem>>, %arg7: memref<32x64xbf16, #tpu.memory_space<vmem>>, %arg8: memref<1x64xf32, #tpu.memory_space<vmem>>, %arg9: memref<32x32xbf16, #tpu.memory_space<vmem>>, %arg10: memref<1x32xf32, #tpu.memory_space<vmem>>, %arg11: memref<32x32xbf16, #tpu.memory_space<vmem>>, %arg12: memref<1x32xf32, #tpu.memory_space<vmem>>, %arg13: memref<32x64xbf16, #tpu.memory_space<vmem>>, %arg14: memref<1x64xf32, #tpu.memory_space<vmem>>, %arg15: memref<32x32xbf16, #tpu.memory_space<vmem>>, %arg16: memref<1x32xf32, #tpu.memory_space<vmem>>, %arg17: memref<32x128xbf16, #tpu.memory_space<vmem>>, %arg18: memref<1x128xf32, #tpu.memory_space<vmem>>, %arg19: memref<128x32xbf16, #tpu.memory_space<vmem>>, %arg20: memref<1x32xf32, #tpu.memory_space<vmem>>, %arg21: memref<3x32xf32, #tpu.memory_space<vmem>>, %arg22: memref<3x32xf32, #tpu.memory_space<vmem>>, %arg23: memref<1x8x32xf32, #tpu.memory_space<vmem>>) attributes {dimension_semantics = [#tpu.dimension_semantics<parallel>, #tpu.dimension_semantics<parallel>], iteration_bounds = array<i64: 2, 1>, scalar_prefetch = 0 : i64, scratch_operands = 0 : i64, tpu.core_type = #tpu.core_type<tc>, window_params = [{transform_indices = @transform_0, window_bounds = array<i64: 1, 8, 32>}, {transform_indices = @transform_1, window_bounds = array<i64: 1, 16, 32>}, {transform_indices = @transform_2, window_bounds = array<i64: 1, 8, 16>}, {pipeline_mode = #tpu.pipeline_mode<synchronous>, transform_indices = @transform_3, window_bounds = array<i64: 32, 32>}, {pipeline_mode = #tpu.pipeline_mode<synchronous>, transform_indices = @transform_4, window_bounds = array<i64: 1, 32>}, {pipeline_mode = #tpu.pipeline_mode<synchronous>, transform_indices = @transform_5, window_bounds = array<i64: 32, 64>}, {pipeline_mode = #tpu.pipeline_mode<synchronous>, transform_indices = @transform_6, window_bounds = array<i64: 1, 64>}, {pipeline_mode = #tpu.pipeline_mode<synchronous>, transform_indices = @transform_7, window_bounds = array<i64: 32, 32>}, {pipeline_mode = #tpu.pipeline_mode<synchronous>, transform_indices = @transform_8, window_bounds = array<i64: 1, 32>}, {pipeline_mode = #tpu.pipeline_mode<synchronous>, transform_indices = @transform_9, window_bounds = array<i64: 32, 32>}, {pipeline_mode = #tpu.pipeline_mode<synchronous>, transform_indices = @transform_10, window_bounds = array<i64: 1, 32>}, {pipeline_mode = #tpu.pipeline_mode<synchronous>, transform_indices = @transform_11, window_bounds = array<i64: 32, 64>}, {pipeline_mode = #tpu.pipeline_mode<synchronous>, transform_indices = @transform_12, window_bounds = array<i64: 1, 64>}, {pipeline_mode = #tpu.pipeline_mode<synchronous>, transform_indices = @transform_13, window_bounds = array<i64: 32, 32>}, {pipeline_mode = #tpu.pipeline_mode<synchronous>, transform_indices = @transform_14, window_bounds = array<i64: 1, 32>}, {pipeline_mode = #tpu.pipeline_mode<synchronous>, transform_indices = @transform_15, window_bounds = array<i64: 32, 128>}, {pipeline_mode = #tpu.pipeline_mode<synchronous>, transform_indices = @transform_16, window_bounds = array<i64: 1, 128>}, {pipeline_mode = #tpu.pipeline_mode<synchronous>, transform_indices = @transform_17, window_bounds = array<i64: 128, 32>}, {pipeline_mode = #tpu.pipeline_mode<synchronous>, transform_indices = @transform_18, window_bounds = array<i64: 1, 32>}, {pipeline_mode = #tpu.pipeline_mode<synchronous>, transform_indices = @transform_19, window_bounds = array<i64: 3, 32>}, {pipeline_mode = #tpu.pipeline_mode<synchronous>, transform_indices = @transform_20, window_bounds = array<i64: 3, 32>}, {transform_indices = @transform_21, window_bounds = array<i64: 1, 8, 32>}]} {
    %c8_i32 = arith.constant 8 : i32
    %0 = arith.muli %arg1, %c8_i32 : i32
    %1 = tpu.assume_multiple %0, 8 : i32
    %c0 = arith.constant 0 : index
    %c0_0 = arith.constant 0 : index
    %2 = vector.load %arg21[%c0, %c0_0] : memref<3x32xf32, #tpu.memory_space<vmem>>, vector<3x32xf32>
    %c0_1 = arith.constant 0 : index
    %c0_2 = arith.constant 0 : index
    %3 = vector.load %arg22[%c0_1, %c0_2] : memref<3x32xf32, #tpu.memory_space<vmem>>, vector<3x32xf32>
    %c0_3 = arith.constant 0 : index
    %c0_4 = arith.constant 0 : index
    %c0_5 = arith.constant 0 : index
    %4 = vector.load %arg2[%c0_3, %c0_4, %c0_5] : memref<1x8x32xf32, #tpu.memory_space<vmem>>, vector<1x8x32xf32>
    %5 = vector.shape_cast %4 : vector<1x8x32xf32> to vector<8x32xf32>
    %6 = tpu.iota {dimensions = array<i32: 0>} : vector<8x8xi32>
    %7 = vector.broadcast %1 : i32 to vector<8x8xi32>
    %8 = arith.addi %6, %7 : vector<8x8xi32>
    %9 = tpu.iota {dimensions = array<i32: 1>} : vector<8x8xi32>
    %10 = arith.cmpi sle, %9, %8 : vector<8x8xi32>
    %cst = arith.constant 0.000000e+00 : f32
    %cst_6 = arith.constant -1.000000e+30 : f32
    %11 = vector.broadcast %cst : f32 to vector<8x8xf32>
    %12 = vector.broadcast %cst_6 : f32 to vector<8x8xf32>
    %13 = arith.select %10, %11, %12 : vector<8x8xi1>, vector<8x8xf32>
    %cst_7 = arith.constant dense<0.000000e+00> : vector<8xf32>
    %14 = vector.multi_reduction <add>, %5, %cst_7 [1] : vector<8x32xf32> to vector<8xf32>
    %15 = vector.shape_cast %14 : vector<8xf32> to vector<8x1xf32>
    %cst_8 = arith.constant 3.200000e+01 : f32
    %16 = vector.broadcast %cst_8 : f32 to vector<8x1xf32>
    %17 = arith.divf %15, %16 : vector<8x1xf32>
    %18 = vector.broadcast %17 : vector<8x1xf32> to vector<8x32xf32>
    %19 = arith.subf %5, %18 : vector<8x32xf32>
    %20 = arith.mulf %19, %19 : vector<8x32xf32>
    %cst_9 = arith.constant dense<0.000000e+00> : vector<8xf32>
    %21 = vector.multi_reduction <add>, %20, %cst_9 [1] : vector<8x32xf32> to vector<8xf32>
    %22 = vector.shape_cast %21 : vector<8xf32> to vector<8x1xf32>
    %cst_10 = arith.constant 0.0322580636 : f32
    %23 = vector.broadcast %cst_10 : f32 to vector<8x1xf32>
    %24 = arith.mulf %22, %23 : vector<8x1xf32>
    %25 = math.sqrt %24 : vector<8x1xf32>
    %cst_11 = arith.constant 9.99999997E-7 : f32
    %26 = vector.broadcast %cst_11 : f32 to vector<8x1xf32>
    %27 = arith.addf %25, %26 : vector<8x1xf32>
    %28 = tpu.reciprocal %27 {approx = true} : vector<8x1xf32> -> vector<8x1xf32>
    %29 = vector.extract_strided_slice %2 {offsets = [0, 0], sizes = [1, 32], strides = [1, 1]} : vector<3x32xf32> to vector<1x32xf32>
    %30 = vector.broadcast %17 : vector<8x1xf32> to vector<8x32xf32>
    %31 = arith.subf %5, %30 : vector<8x32xf32>
    %32 = vector.broadcast %29 : vector<1x32xf32> to vector<8x32xf32>
    %33 = arith.mulf %32, %31 : vector<8x32xf32>
    %34 = vector.broadcast %28 : vector<8x1xf32> to vector<8x32xf32>
    %35 = arith.mulf %33, %34 : vector<8x32xf32>
    %36 = vector.extract_strided_slice %3 {offsets = [0, 0], sizes = [1, 32], strides = [1, 1]} : vector<3x32xf32> to vector<1x32xf32>
    %37 = vector.broadcast %36 : vector<1x32xf32> to vector<8x32xf32>
    %38 = arith.addf %35, %37 : vector<8x32xf32>
    %39 = arith.truncf %38 : vector<8x32xf32> to vector<8x32xbf16>
    %c0_12 = arith.constant 0 : index
    %c0_13 = arith.constant 0 : index
    %40 = vector.load %arg5[%c0_12, %c0_13] : memref<32x32xbf16, #tpu.memory_space<vmem>>, vector<32x32xbf16>
    %cst_14 = arith.constant dense<0.000000e+00> : vector<8x32xf32>
    %41 = tpu.matmul %39, %40, %cst_14 {dimension_numbers = #tpu.dot_dimension_numbers<[1], [0], [0], [1], [0, 0, 1, 1], [], []>} : vector<8x32xbf16>, vector<32x32xbf16>, vector<8x32xf32> -> vector<8x32xf32>
    %c0_15 = arith.constant 0 : index
    %c0_16 = arith.constant 0 : index
    %42 = vector.load %arg6[%c0_15, %c0_16] : memref<1x32xf32, #tpu.memory_space<vmem>>, vector<1x32xf32>
    %43 = vector.broadcast %42 : vector<1x32xf32> to vector<8x32xf32>
    %44 = arith.addf %41, %43 : vector<8x32xf32>
    %45 = arith.truncf %38 : vector<8x32xf32> to vector<8x32xbf16>
    %c0_17 = arith.constant 0 : index
    %c0_18 = arith.constant 0 : index
    %46 = vector.load %arg7[%c0_17, %c0_18] : memref<32x64xbf16, #tpu.memory_space<vmem>>, vector<32x64xbf16>
    %cst_19 = arith.constant dense<0.000000e+00> : vector<8x64xf32>
    %47 = tpu.matmul %45, %46, %cst_19 {dimension_numbers = #tpu.dot_dimension_numbers<[1], [0], [0], [1], [0, 0, 1, 1], [], []>} : vector<8x32xbf16>, vector<32x64xbf16>, vector<8x64xf32> -> vector<8x64xf32>
    %c0_20 = arith.constant 0 : index
    %c0_21 = arith.constant 0 : index
    %48 = vector.load %arg8[%c0_20, %c0_21] : memref<1x64xf32, #tpu.memory_space<vmem>>, vector<1x64xf32>
    %49 = vector.broadcast %48 : vector<1x64xf32> to vector<8x64xf32>
    %50 = arith.addf %47, %49 : vector<8x64xf32>
    %51 = vector.extract_strided_slice %50 {offsets = [0, 0], sizes = [8, 32], strides = [1, 1]} : vector<8x64xf32> to vector<8x32xf32>
    %52 = vector.extract_strided_slice %50 {offsets = [0, 32], sizes = [8, 32], strides = [1, 1]} : vector<8x64xf32> to vector<8x32xf32>
    %cst_22 = arith.constant 0.000000e+00 : f32
    %53 = vector.broadcast %cst_22 : f32 to vector<8x32xf32>
    %54 = vector.extract_strided_slice %44 {offsets = [0, 0], sizes = [8, 8], strides = [1, 1]} : vector<8x32xf32> to vector<8x8xf32>
    %55 = arith.truncf %54 : vector<8x8xf32> to vector<8x8xbf16>
    %56 = vector.extract_strided_slice %51 {offsets = [0, 0], sizes = [8, 8], strides = [1, 1]} : vector<8x32xf32> to vector<8x8xf32>
    %57 = arith.truncf %56 : vector<8x8xf32> to vector<8x8xbf16>
    %58 = vector.extract_strided_slice %52 {offsets = [0, 0], sizes = [8, 8], strides = [1, 1]} : vector<8x32xf32> to vector<8x8xf32>
    %59 = arith.truncf %58 : vector<8x8xf32> to vector<8x8xbf16>
    %cst_23 = arith.constant dense<0.000000e+00> : vector<8x8xf32>
    %60 = tpu.matmul %55, %57, %cst_23 {dimension_numbers = #tpu.dot_dimension_numbers<[1], [1], [0], [0], [0, 0, 1, 0], [], []>} : vector<8x8xbf16>, vector<8x8xbf16>, vector<8x8xf32> -> vector<8x8xf32>
    %61 = arith.addf %60, %13 : vector<8x8xf32>
    %cst_24 = arith.constant dense<0xFF800000> : vector<8xf32>
    %62 = vector.multi_reduction <maximumf>, %61, %cst_24 [1] : vector<8x8xf32> to vector<8xf32>
    %63 = vector.shape_cast %62 : vector<8xf32> to vector<8x1xf32>
    %64 = vector.broadcast %63 : vector<8x1xf32> to vector<8x8xf32>
    %65 = arith.subf %61, %64 : vector<8x8xf32>
    %66 = math.exp %65 : vector<8x8xf32>
    %cst_25 = arith.constant dense<0.000000e+00> : vector<8xf32>
    %67 = vector.multi_reduction <add>, %66, %cst_25 [1] : vector<8x8xf32> to vector<8xf32>
    %68 = vector.shape_cast %67 : vector<8xf32> to vector<8x1xf32>
    %69 = tpu.reciprocal %68 {approx = true} : vector<8x1xf32> -> vector<8x1xf32>
    %70 = vector.broadcast %69 : vector<8x1xf32> to vector<8x8xf32>
    %71 = arith.mulf %66, %70 : vector<8x8xf32>
    %72 = arith.truncf %71 : vector<8x8xf32> to vector<8x8xbf16>
    %cst_26 = arith.constant dense<0.000000e+00> : vector<8x8xf32>
    %73 = tpu.matmul %72, %59, %cst_26 {dimension_numbers = #tpu.dot_dimension_numbers<[1], [0], [0], [1], [0, 0, 1, 1], [], []>} : vector<8x8xbf16>, vector<8x8xbf16>, vector<8x8xf32> -> vector<8x8xf32>
    %74 = arith.truncf %73 : vector<8x8xf32> to vector<8x8xbf16>
    %c0_27 = arith.constant 0 : index
    %c0_28 = arith.constant 0 : index
    %75 = vector.load %arg9[%c0_27, %c0_28] : memref<32x32xbf16, #tpu.memory_space<vmem>>, vector<8x32xbf16>
    %cst_29 = arith.constant dense<0.000000e+00> : vector<8x32xf32>
    %76 = tpu.matmul %74, %75, %cst_29 {dimension_numbers = #tpu.dot_dimension_numbers<[1], [0], [0], [1], [0, 0, 1, 1], [], []>} : vector<8x8xbf16>, vector<8x32xbf16>, vector<8x32xf32> -> vector<8x32xf32>
    %77 = arith.addf %53, %76 : vector<8x32xf32>
    %78 = vector.extract_strided_slice %44 {offsets = [0, 8], sizes = [8, 8], strides = [1, 1]} : vector<8x32xf32> to vector<8x8xf32>
    %79 = arith.truncf %78 : vector<8x8xf32> to vector<8x8xbf16>
    %80 = vector.extract_strided_slice %51 {offsets = [0, 8], sizes = [8, 8], strides = [1, 1]} : vector<8x32xf32> to vector<8x8xf32>
    %81 = arith.truncf %80 : vector<8x8xf32> to vector<8x8xbf16>
    %82 = vector.extract_strided_slice %52 {offsets = [0, 8], sizes = [8, 8], strides = [1, 1]} : vector<8x32xf32> to vector<8x8xf32>
    %83 = arith.truncf %82 : vector<8x8xf32> to vector<8x8xbf16>
    %cst_30 = arith.constant dense<0.000000e+00> : vector<8x8xf32>
    %84 = tpu.matmul %79, %81, %cst_30 {dimension_numbers = #tpu.dot_dimension_numbers<[1], [1], [0], [0], [0, 0, 1, 0], [], []>} : vector<8x8xbf16>, vector<8x8xbf16>, vector<8x8xf32> -> vector<8x8xf32>
    %85 = arith.addf %84, %13 : vector<8x8xf32>
    %cst_31 = arith.constant dense<0xFF800000> : vector<8xf32>
    %86 = vector.multi_reduction <maximumf>, %85, %cst_31 [1] : vector<8x8xf32> to vector<8xf32>
    %87 = vector.shape_cast %86 : vector<8xf32> to vector<8x1xf32>
    %88 = vector.broadcast %87 : vector<8x1xf32> to vector<8x8xf32>
    %89 = arith.subf %85, %88 : vector<8x8xf32>
    %90 = math.exp %89 : vector<8x8xf32>
    %cst_32 = arith.constant dense<0.000000e+00> : vector<8xf32>
    %91 = vector.multi_reduction <add>, %90, %cst_32 [1] : vector<8x8xf32> to vector<8xf32>
    %92 = vector.shape_cast %91 : vector<8xf32> to vector<8x1xf32>
    %93 = tpu.reciprocal %92 {approx = true} : vector<8x1xf32> -> vector<8x1xf32>
    %94 = vector.broadcast %93 : vector<8x1xf32> to vector<8x8xf32>
    %95 = arith.mulf %90, %94 : vector<8x8xf32>
    %96 = arith.truncf %95 : vector<8x8xf32> to vector<8x8xbf16>
    %cst_33 = arith.constant dense<0.000000e+00> : vector<8x8xf32>
    %97 = tpu.matmul %96, %83, %cst_33 {dimension_numbers = #tpu.dot_dimension_numbers<[1], [0], [0], [1], [0, 0, 1, 1], [], []>} : vector<8x8xbf16>, vector<8x8xbf16>, vector<8x8xf32> -> vector<8x8xf32>
    %98 = arith.truncf %97 : vector<8x8xf32> to vector<8x8xbf16>
    %c8 = arith.constant 8 : index
    %c0_34 = arith.constant 0 : index
    %99 = vector.load %arg9[%c8, %c0_34] : memref<32x32xbf16, #tpu.memory_space<vmem>>, vector<8x32xbf16>
    %cst_35 = arith.constant dense<0.000000e+00> : vector<8x32xf32>
    %100 = tpu.matmul %98, %99, %cst_35 {dimension_numbers = #tpu.dot_dimension_numbers<[1], [0], [0], [1], [0, 0, 1, 1], [], []>} : vector<8x8xbf16>, vector<8x32xbf16>, vector<8x32xf32> -> vector<8x32xf32>
    %101 = arith.addf %77, %100 : vector<8x32xf32>
    %102 = vector.extract_strided_slice %44 {offsets = [0, 16], sizes = [8, 8], strides = [1, 1]} : vector<8x32xf32> to vector<8x8xf32>
    %103 = arith.truncf %102 : vector<8x8xf32> to vector<8x8xbf16>
    %104 = vector.extract_strided_slice %51 {offsets = [0, 16], sizes = [8, 8], strides = [1, 1]} : vector<8x32xf32> to vector<8x8xf32>
    %105 = arith.truncf %104 : vector<8x8xf32> to vector<8x8xbf16>
    %106 = vector.extract_strided_slice %52 {offsets = [0, 16], sizes = [8, 8], strides = [1, 1]} : vector<8x32xf32> to vector<8x8xf32>
    %107 = arith.truncf %106 : vector<8x8xf32> to vector<8x8xbf16>
    %cst_36 = arith.constant dense<0.000000e+00> : vector<8x8xf32>
    %108 = tpu.matmul %103, %105, %cst_36 {dimension_numbers = #tpu.dot_dimension_numbers<[1], [1], [0], [0], [0, 0, 1, 0], [], []>} : vector<8x8xbf16>, vector<8x8xbf16>, vector<8x8xf32> -> vector<8x8xf32>
    %109 = arith.addf %108, %13 : vector<8x8xf32>
    %cst_37 = arith.constant dense<0xFF800000> : vector<8xf32>
    %110 = vector.multi_reduction <maximumf>, %109, %cst_37 [1] : vector<8x8xf32> to vector<8xf32>
    %111 = vector.shape_cast %110 : vector<8xf32> to vector<8x1xf32>
    %112 = vector.broadcast %111 : vector<8x1xf32> to vector<8x8xf32>
    %113 = arith.subf %109, %112 : vector<8x8xf32>
    %114 = math.exp %113 : vector<8x8xf32>
    %cst_38 = arith.constant dense<0.000000e+00> : vector<8xf32>
    %115 = vector.multi_reduction <add>, %114, %cst_38 [1] : vector<8x8xf32> to vector<8xf32>
    %116 = vector.shape_cast %115 : vector<8xf32> to vector<8x1xf32>
    %117 = tpu.reciprocal %116 {approx = true} : vector<8x1xf32> -> vector<8x1xf32>
    %118 = vector.broadcast %117 : vector<8x1xf32> to vector<8x8xf32>
    %119 = arith.mulf %114, %118 : vector<8x8xf32>
    %120 = arith.truncf %119 : vector<8x8xf32> to vector<8x8xbf16>
    %cst_39 = arith.constant dense<0.000000e+00> : vector<8x8xf32>
    %121 = tpu.matmul %120, %107, %cst_39 {dimension_numbers = #tpu.dot_dimension_numbers<[1], [0], [0], [1], [0, 0, 1, 1], [], []>} : vector<8x8xbf16>, vector<8x8xbf16>, vector<8x8xf32> -> vector<8x8xf32>
    %122 = arith.truncf %121 : vector<8x8xf32> to vector<8x8xbf16>
    %c16 = arith.constant 16 : index
    %c0_40 = arith.constant 0 : index
    %123 = vector.load %arg9[%c16, %c0_40] : memref<32x32xbf16, #tpu.memory_space<vmem>>, vector<8x32xbf16>
    %cst_41 = arith.constant dense<0.000000e+00> : vector<8x32xf32>
    %124 = tpu.matmul %122, %123, %cst_41 {dimension_numbers = #tpu.dot_dimension_numbers<[1], [0], [0], [1], [0, 0, 1, 1], [], []>} : vector<8x8xbf16>, vector<8x32xbf16>, vector<8x32xf32> -> vector<8x32xf32>
    %125 = arith.addf %101, %124 : vector<8x32xf32>
    %126 = vector.extract_strided_slice %44 {offsets = [0, 24], sizes = [8, 8], strides = [1, 1]} : vector<8x32xf32> to vector<8x8xf32>
    %127 = arith.truncf %126 : vector<8x8xf32> to vector<8x8xbf16>
    %128 = vector.extract_strided_slice %51 {offsets = [0, 24], sizes = [8, 8], strides = [1, 1]} : vector<8x32xf32> to vector<8x8xf32>
    %129 = arith.truncf %128 : vector<8x8xf32> to vector<8x8xbf16>
    %130 = vector.extract_strided_slice %52 {offsets = [0, 24], sizes = [8, 8], strides = [1, 1]} : vector<8x32xf32> to vector<8x8xf32>
    %131 = arith.truncf %130 : vector<8x8xf32> to vector<8x8xbf16>
    %cst_42 = arith.constant dense<0.000000e+00> : vector<8x8xf32>
    %132 = tpu.matmul %127, %129, %cst_42 {dimension_numbers = #tpu.dot_dimension_numbers<[1], [1], [0], [0], [0, 0, 1, 0], [], []>} : vector<8x8xbf16>, vector<8x8xbf16>, vector<8x8xf32> -> vector<8x8xf32>
    %133 = arith.addf %132, %13 : vector<8x8xf32>
    %cst_43 = arith.constant dense<0xFF800000> : vector<8xf32>
    %134 = vector.multi_reduction <maximumf>, %133, %cst_43 [1] : vector<8x8xf32> to vector<8xf32>
    %135 = vector.shape_cast %134 : vector<8xf32> to vector<8x1xf32>
    %136 = vector.broadcast %135 : vector<8x1xf32> to vector<8x8xf32>
    %137 = arith.subf %133, %136 : vector<8x8xf32>
    %138 = math.exp %137 : vector<8x8xf32>
    %cst_44 = arith.constant dense<0.000000e+00> : vector<8xf32>
    %139 = vector.multi_reduction <add>, %138, %cst_44 [1] : vector<8x8xf32> to vector<8xf32>
    %140 = vector.shape_cast %139 : vector<8xf32> to vector<8x1xf32>
    %141 = tpu.reciprocal %140 {approx = true} : vector<8x1xf32> -> vector<8x1xf32>
    %142 = vector.broadcast %141 : vector<8x1xf32> to vector<8x8xf32>
    %143 = arith.mulf %138, %142 : vector<8x8xf32>
    %144 = arith.truncf %143 : vector<8x8xf32> to vector<8x8xbf16>
    %cst_45 = arith.constant dense<0.000000e+00> : vector<8x8xf32>
    %145 = tpu.matmul %144, %131, %cst_45 {dimension_numbers = #tpu.dot_dimension_numbers<[1], [0], [0], [1], [0, 0, 1, 1], [], []>} : vector<8x8xbf16>, vector<8x8xbf16>, vector<8x8xf32> -> vector<8x8xf32>
    %146 = arith.truncf %145 : vector<8x8xf32> to vector<8x8xbf16>
    %c24 = arith.constant 24 : index
    %c0_46 = arith.constant 0 : index
    %147 = vector.load %arg9[%c24, %c0_46] : memref<32x32xbf16, #tpu.memory_space<vmem>>, vector<8x32xbf16>
    %cst_47 = arith.constant dense<0.000000e+00> : vector<8x32xf32>
    %148 = tpu.matmul %146, %147, %cst_47 {dimension_numbers = #tpu.dot_dimension_numbers<[1], [0], [0], [1], [0, 0, 1, 1], [], []>} : vector<8x8xbf16>, vector<8x32xbf16>, vector<8x32xf32> -> vector<8x32xf32>
    %149 = arith.addf %125, %148 : vector<8x32xf32>
    %150 = arith.addf %5, %149 : vector<8x32xf32>
    %c0_48 = arith.constant 0 : index
    %c0_49 = arith.constant 0 : index
    %151 = vector.load %arg10[%c0_48, %c0_49] : memref<1x32xf32, #tpu.memory_space<vmem>>, vector<1x32xf32>
    %152 = vector.broadcast %151 : vector<1x32xf32> to vector<8x32xf32>
    %153 = arith.addf %150, %152 : vector<8x32xf32>
    %cst_50 = arith.constant dense<0.000000e+00> : vector<8xf32>
    %154 = vector.multi_reduction <add>, %153, %cst_50 [1] : vector<8x32xf32> to vector<8xf32>
    %155 = vector.shape_cast %154 : vector<8xf32> to vector<8x1xf32>
    %cst_51 = arith.constant 3.200000e+01 : f32
    %156 = vector.broadcast %cst_51 : f32 to vector<8x1xf32>
    %157 = arith.divf %155, %156 : vector<8x1xf32>
    %158 = vector.broadcast %157 : vector<8x1xf32> to vector<8x32xf32>
    %159 = arith.subf %153, %158 : vector<8x32xf32>
    %160 = arith.mulf %159, %159 : vector<8x32xf32>
    %cst_52 = arith.constant dense<0.000000e+00> : vector<8xf32>
    %161 = vector.multi_reduction <add>, %160, %cst_52 [1] : vector<8x32xf32> to vector<8xf32>
    %162 = vector.shape_cast %161 : vector<8xf32> to vector<8x1xf32>
    %cst_53 = arith.constant 0.0322580636 : f32
    %163 = vector.broadcast %cst_53 : f32 to vector<8x1xf32>
    %164 = arith.mulf %162, %163 : vector<8x1xf32>
    %165 = math.sqrt %164 : vector<8x1xf32>
    %cst_54 = arith.constant 9.99999997E-7 : f32
    %166 = vector.broadcast %cst_54 : f32 to vector<8x1xf32>
    %167 = arith.addf %165, %166 : vector<8x1xf32>
    %168 = tpu.reciprocal %167 {approx = true} : vector<8x1xf32> -> vector<8x1xf32>
    %169 = vector.extract_strided_slice %2 {offsets = [1, 0], sizes = [1, 32], strides = [1, 1]} : vector<3x32xf32> to vector<1x32xf32>
    %170 = vector.broadcast %157 : vector<8x1xf32> to vector<8x32xf32>
    %171 = arith.subf %153, %170 : vector<8x32xf32>
    %172 = vector.broadcast %169 : vector<1x32xf32> to vector<8x32xf32>
    %173 = arith.mulf %172, %171 : vector<8x32xf32>
    %174 = vector.broadcast %168 : vector<8x1xf32> to vector<8x32xf32>
    %175 = arith.mulf %173, %174 : vector<8x32xf32>
    %176 = vector.extract_strided_slice %3 {offsets = [1, 0], sizes = [1, 32], strides = [1, 1]} : vector<3x32xf32> to vector<1x32xf32>
    %177 = vector.broadcast %176 : vector<1x32xf32> to vector<8x32xf32>
    %178 = arith.addf %175, %177 : vector<8x32xf32>
    %179 = arith.truncf %178 : vector<8x32xf32> to vector<8x32xbf16>
    %c0_55 = arith.constant 0 : index
    %c0_56 = arith.constant 0 : index
    %180 = vector.load %arg11[%c0_55, %c0_56] : memref<32x32xbf16, #tpu.memory_space<vmem>>, vector<32x32xbf16>
    %cst_57 = arith.constant dense<0.000000e+00> : vector<8x32xf32>
    %181 = tpu.matmul %179, %180, %cst_57 {dimension_numbers = #tpu.dot_dimension_numbers<[1], [0], [0], [1], [0, 0, 1, 1], [], []>} : vector<8x32xbf16>, vector<32x32xbf16>, vector<8x32xf32> -> vector<8x32xf32>
    %c0_58 = arith.constant 0 : index
    %c0_59 = arith.constant 0 : index
    %182 = vector.load %arg12[%c0_58, %c0_59] : memref<1x32xf32, #tpu.memory_space<vmem>>, vector<1x32xf32>
    %183 = vector.broadcast %182 : vector<1x32xf32> to vector<8x32xf32>
    %184 = arith.addf %181, %183 : vector<8x32xf32>
    %c0_60 = arith.constant 0 : index
    %c0_61 = arith.constant 0 : index
    %c0_62 = arith.constant 0 : index
    %185 = vector.load %arg3[%c0_60, %c0_61, %c0_62] : memref<1x16x32xf32, #tpu.memory_space<vmem>>, vector<1x16x32xf32>
    %186 = vector.shape_cast %185 : vector<1x16x32xf32> to vector<16x32xf32>
    %187 = arith.truncf %186 : vector<16x32xf32> to vector<16x32xbf16>
    %c0_63 = arith.constant 0 : index
    %c0_64 = arith.constant 0 : index
    %188 = vector.load %arg13[%c0_63, %c0_64] : memref<32x64xbf16, #tpu.memory_space<vmem>>, vector<32x64xbf16>
    %cst_65 = arith.constant dense<0.000000e+00> : vector<16x64xf32>
    %189 = tpu.matmul %187, %188, %cst_65 {dimension_numbers = #tpu.dot_dimension_numbers<[1], [0], [0], [1], [0, 0, 1, 1], [], []>} : vector<16x32xbf16>, vector<32x64xbf16>, vector<16x64xf32> -> vector<16x64xf32>
    %c0_66 = arith.constant 0 : index
    %c0_67 = arith.constant 0 : index
    %190 = vector.load %arg14[%c0_66, %c0_67] : memref<1x64xf32, #tpu.memory_space<vmem>>, vector<1x64xf32>
    %191 = vector.broadcast %190 : vector<1x64xf32> to vector<16x64xf32>
    %192 = arith.addf %189, %191 : vector<16x64xf32>
    %193 = vector.extract_strided_slice %192 {offsets = [0, 0], sizes = [16, 32], strides = [1, 1]} : vector<16x64xf32> to vector<16x32xf32>
    %194 = vector.extract_strided_slice %192 {offsets = [0, 32], sizes = [16, 32], strides = [1, 1]} : vector<16x64xf32> to vector<16x32xf32>
    %c0_68 = arith.constant 0 : index
    %c0_69 = arith.constant 0 : index
    %c0_70 = arith.constant 0 : index
    %195 = vector.load %arg4[%c0_68, %c0_69, %c0_70] : memref<1x8x16xf32, #tpu.memory_space<vmem>>, vector<1x8x16xf32>
    %196 = vector.shape_cast %195 : vector<1x8x16xf32> to vector<8x16xf32>
    %cst_71 = arith.constant 0.000000e+00 : f32
    %197 = vector.broadcast %cst_71 : f32 to vector<8x32xf32>
    %198 = vector.extract_strided_slice %184 {offsets = [0, 0], sizes = [8, 8], strides = [1, 1]} : vector<8x32xf32> to vector<8x8xf32>
    %199 = arith.truncf %198 : vector<8x8xf32> to vector<8x8xbf16>
    %200 = vector.extract_strided_slice %193 {offsets = [0, 0], sizes = [16, 8], strides = [1, 1]} : vector<16x32xf32> to vector<16x8xf32>
    %201 = arith.truncf %200 : vector<16x8xf32> to vector<16x8xbf16>
    %202 = vector.extract_strided_slice %194 {offsets = [0, 0], sizes = [16, 8], strides = [1, 1]} : vector<16x32xf32> to vector<16x8xf32>
    %203 = arith.truncf %202 : vector<16x8xf32> to vector<16x8xbf16>
    %cst_72 = arith.constant dense<0.000000e+00> : vector<8x16xf32>
    %204 = tpu.matmul %199, %201, %cst_72 {dimension_numbers = #tpu.dot_dimension_numbers<[1], [1], [0], [0], [0, 0, 1, 0], [], []>} : vector<8x8xbf16>, vector<16x8xbf16>, vector<8x16xf32> -> vector<8x16xf32>
    %205 = arith.addf %204, %196 : vector<8x16xf32>
    %cst_73 = arith.constant dense<0xFF800000> : vector<8xf32>
    %206 = vector.multi_reduction <maximumf>, %205, %cst_73 [1] : vector<8x16xf32> to vector<8xf32>
    %207 = vector.shape_cast %206 : vector<8xf32> to vector<8x1xf32>
    %208 = vector.broadcast %207 : vector<8x1xf32> to vector<8x16xf32>
    %209 = arith.subf %205, %208 : vector<8x16xf32>
    %210 = math.exp %209 : vector<8x16xf32>
    %cst_74 = arith.constant dense<0.000000e+00> : vector<8xf32>
    %211 = vector.multi_reduction <add>, %210, %cst_74 [1] : vector<8x16xf32> to vector<8xf32>
    %212 = vector.shape_cast %211 : vector<8xf32> to vector<8x1xf32>
    %213 = tpu.reciprocal %212 {approx = true} : vector<8x1xf32> -> vector<8x1xf32>
    %214 = vector.broadcast %213 : vector<8x1xf32> to vector<8x16xf32>
    %215 = arith.mulf %210, %214 : vector<8x16xf32>
    %216 = arith.truncf %215 : vector<8x16xf32> to vector<8x16xbf16>
    %cst_75 = arith.constant dense<0.000000e+00> : vector<8x8xf32>
    %217 = tpu.matmul %216, %203, %cst_75 {dimension_numbers = #tpu.dot_dimension_numbers<[1], [0], [0], [1], [0, 0, 1, 1], [], []>} : vector<8x16xbf16>, vector<16x8xbf16>, vector<8x8xf32> -> vector<8x8xf32>
    %218 = arith.truncf %217 : vector<8x8xf32> to vector<8x8xbf16>
    %c0_76 = arith.constant 0 : index
    %c0_77 = arith.constant 0 : index
    %219 = vector.load %arg15[%c0_76, %c0_77] : memref<32x32xbf16, #tpu.memory_space<vmem>>, vector<8x32xbf16>
    %cst_78 = arith.constant dense<0.000000e+00> : vector<8x32xf32>
    %220 = tpu.matmul %218, %219, %cst_78 {dimension_numbers = #tpu.dot_dimension_numbers<[1], [0], [0], [1], [0, 0, 1, 1], [], []>} : vector<8x8xbf16>, vector<8x32xbf16>, vector<8x32xf32> -> vector<8x32xf32>
    %221 = arith.addf %197, %220 : vector<8x32xf32>
    %222 = vector.extract_strided_slice %184 {offsets = [0, 8], sizes = [8, 8], strides = [1, 1]} : vector<8x32xf32> to vector<8x8xf32>
    %223 = arith.truncf %222 : vector<8x8xf32> to vector<8x8xbf16>
    %224 = vector.extract_strided_slice %193 {offsets = [0, 8], sizes = [16, 8], strides = [1, 1]} : vector<16x32xf32> to vector<16x8xf32>
    %225 = arith.truncf %224 : vector<16x8xf32> to vector<16x8xbf16>
    %226 = vector.extract_strided_slice %194 {offsets = [0, 8], sizes = [16, 8], strides = [1, 1]} : vector<16x32xf32> to vector<16x8xf32>
    %227 = arith.truncf %226 : vector<16x8xf32> to vector<16x8xbf16>
    %cst_79 = arith.constant dense<0.000000e+00> : vector<8x16xf32>
    %228 = tpu.matmul %223, %225, %cst_79 {dimension_numbers = #tpu.dot_dimension_numbers<[1], [1], [0], [0], [0, 0, 1, 0], [], []>} : vector<8x8xbf16>, vector<16x8xbf16>, vector<8x16xf32> -> vector<8x16xf32>
    %229 = arith.addf %228, %196 : vector<8x16xf32>
    %cst_80 = arith.constant dense<0xFF800000> : vector<8xf32>
    %230 = vector.multi_reduction <maximumf>, %229, %cst_80 [1] : vector<8x16xf32> to vector<8xf32>
    %231 = vector.shape_cast %230 : vector<8xf32> to vector<8x1xf32>
    %232 = vector.broadcast %231 : vector<8x1xf32> to vector<8x16xf32>
    %233 = arith.subf %229, %232 : vector<8x16xf32>
    %234 = math.exp %233 : vector<8x16xf32>
    %cst_81 = arith.constant dense<0.000000e+00> : vector<8xf32>
    %235 = vector.multi_reduction <add>, %234, %cst_81 [1] : vector<8x16xf32> to vector<8xf32>
    %236 = vector.shape_cast %235 : vector<8xf32> to vector<8x1xf32>
    %237 = tpu.reciprocal %236 {approx = true} : vector<8x1xf32> -> vector<8x1xf32>
    %238 = vector.broadcast %237 : vector<8x1xf32> to vector<8x16xf32>
    %239 = arith.mulf %234, %238 : vector<8x16xf32>
    %240 = arith.truncf %239 : vector<8x16xf32> to vector<8x16xbf16>
    %cst_82 = arith.constant dense<0.000000e+00> : vector<8x8xf32>
    %241 = tpu.matmul %240, %227, %cst_82 {dimension_numbers = #tpu.dot_dimension_numbers<[1], [0], [0], [1], [0, 0, 1, 1], [], []>} : vector<8x16xbf16>, vector<16x8xbf16>, vector<8x8xf32> -> vector<8x8xf32>
    %242 = arith.truncf %241 : vector<8x8xf32> to vector<8x8xbf16>
    %c8_83 = arith.constant 8 : index
    %c0_84 = arith.constant 0 : index
    %243 = vector.load %arg15[%c8_83, %c0_84] : memref<32x32xbf16, #tpu.memory_space<vmem>>, vector<8x32xbf16>
    %cst_85 = arith.constant dense<0.000000e+00> : vector<8x32xf32>
    %244 = tpu.matmul %242, %243, %cst_85 {dimension_numbers = #tpu.dot_dimension_numbers<[1], [0], [0], [1], [0, 0, 1, 1], [], []>} : vector<8x8xbf16>, vector<8x32xbf16>, vector<8x32xf32> -> vector<8x32xf32>
    %245 = arith.addf %221, %244 : vector<8x32xf32>
    %246 = vector.extract_strided_slice %184 {offsets = [0, 16], sizes = [8, 8], strides = [1, 1]} : vector<8x32xf32> to vector<8x8xf32>
    %247 = arith.truncf %246 : vector<8x8xf32> to vector<8x8xbf16>
    %248 = vector.extract_strided_slice %193 {offsets = [0, 16], sizes = [16, 8], strides = [1, 1]} : vector<16x32xf32> to vector<16x8xf32>
    %249 = arith.truncf %248 : vector<16x8xf32> to vector<16x8xbf16>
    %250 = vector.extract_strided_slice %194 {offsets = [0, 16], sizes = [16, 8], strides = [1, 1]} : vector<16x32xf32> to vector<16x8xf32>
    %251 = arith.truncf %250 : vector<16x8xf32> to vector<16x8xbf16>
    %cst_86 = arith.constant dense<0.000000e+00> : vector<8x16xf32>
    %252 = tpu.matmul %247, %249, %cst_86 {dimension_numbers = #tpu.dot_dimension_numbers<[1], [1], [0], [0], [0, 0, 1, 0], [], []>} : vector<8x8xbf16>, vector<16x8xbf16>, vector<8x16xf32> -> vector<8x16xf32>
    %253 = arith.addf %252, %196 : vector<8x16xf32>
    %cst_87 = arith.constant dense<0xFF800000> : vector<8xf32>
    %254 = vector.multi_reduction <maximumf>, %253, %cst_87 [1] : vector<8x16xf32> to vector<8xf32>
    %255 = vector.shape_cast %254 : vector<8xf32> to vector<8x1xf32>
    %256 = vector.broadcast %255 : vector<8x1xf32> to vector<8x16xf32>
    %257 = arith.subf %253, %256 : vector<8x16xf32>
    %258 = math.exp %257 : vector<8x16xf32>
    %cst_88 = arith.constant dense<0.000000e+00> : vector<8xf32>
    %259 = vector.multi_reduction <add>, %258, %cst_88 [1] : vector<8x16xf32> to vector<8xf32>
    %260 = vector.shape_cast %259 : vector<8xf32> to vector<8x1xf32>
    %261 = tpu.reciprocal %260 {approx = true} : vector<8x1xf32> -> vector<8x1xf32>
    %262 = vector.broadcast %261 : vector<8x1xf32> to vector<8x16xf32>
    %263 = arith.mulf %258, %262 : vector<8x16xf32>
    %264 = arith.truncf %263 : vector<8x16xf32> to vector<8x16xbf16>
    %cst_89 = arith.constant dense<0.000000e+00> : vector<8x8xf32>
    %265 = tpu.matmul %264, %251, %cst_89 {dimension_numbers = #tpu.dot_dimension_numbers<[1], [0], [0], [1], [0, 0, 1, 1], [], []>} : vector<8x16xbf16>, vector<16x8xbf16>, vector<8x8xf32> -> vector<8x8xf32>
    %266 = arith.truncf %265 : vector<8x8xf32> to vector<8x8xbf16>
    %c16_90 = arith.constant 16 : index
    %c0_91 = arith.constant 0 : index
    %267 = vector.load %arg15[%c16_90, %c0_91] : memref<32x32xbf16, #tpu.memory_space<vmem>>, vector<8x32xbf16>
    %cst_92 = arith.constant dense<0.000000e+00> : vector<8x32xf32>
    %268 = tpu.matmul %266, %267, %cst_92 {dimension_numbers = #tpu.dot_dimension_numbers<[1], [0], [0], [1], [0, 0, 1, 1], [], []>} : vector<8x8xbf16>, vector<8x32xbf16>, vector<8x32xf32> -> vector<8x32xf32>
    %269 = arith.addf %245, %268 : vector<8x32xf32>
    %270 = vector.extract_strided_slice %184 {offsets = [0, 24], sizes = [8, 8], strides = [1, 1]} : vector<8x32xf32> to vector<8x8xf32>
    %271 = arith.truncf %270 : vector<8x8xf32> to vector<8x8xbf16>
    %272 = vector.extract_strided_slice %193 {offsets = [0, 24], sizes = [16, 8], strides = [1, 1]} : vector<16x32xf32> to vector<16x8xf32>
    %273 = arith.truncf %272 : vector<16x8xf32> to vector<16x8xbf16>
    %274 = vector.extract_strided_slice %194 {offsets = [0, 24], sizes = [16, 8], strides = [1, 1]} : vector<16x32xf32> to vector<16x8xf32>
    %275 = arith.truncf %274 : vector<16x8xf32> to vector<16x8xbf16>
    %cst_93 = arith.constant dense<0.000000e+00> : vector<8x16xf32>
    %276 = tpu.matmul %271, %273, %cst_93 {dimension_numbers = #tpu.dot_dimension_numbers<[1], [1], [0], [0], [0, 0, 1, 0], [], []>} : vector<8x8xbf16>, vector<16x8xbf16>, vector<8x16xf32> -> vector<8x16xf32>
    %277 = arith.addf %276, %196 : vector<8x16xf32>
    %cst_94 = arith.constant dense<0xFF800000> : vector<8xf32>
    %278 = vector.multi_reduction <maximumf>, %277, %cst_94 [1] : vector<8x16xf32> to vector<8xf32>
    %279 = vector.shape_cast %278 : vector<8xf32> to vector<8x1xf32>
    %280 = vector.broadcast %279 : vector<8x1xf32> to vector<8x16xf32>
    %281 = arith.subf %277, %280 : vector<8x16xf32>
    %282 = math.exp %281 : vector<8x16xf32>
    %cst_95 = arith.constant dense<0.000000e+00> : vector<8xf32>
    %283 = vector.multi_reduction <add>, %282, %cst_95 [1] : vector<8x16xf32> to vector<8xf32>
    %284 = vector.shape_cast %283 : vector<8xf32> to vector<8x1xf32>
    %285 = tpu.reciprocal %284 {approx = true} : vector<8x1xf32> -> vector<8x1xf32>
    %286 = vector.broadcast %285 : vector<8x1xf32> to vector<8x16xf32>
    %287 = arith.mulf %282, %286 : vector<8x16xf32>
    %288 = arith.truncf %287 : vector<8x16xf32> to vector<8x16xbf16>
    %cst_96 = arith.constant dense<0.000000e+00> : vector<8x8xf32>
    %289 = tpu.matmul %288, %275, %cst_96 {dimension_numbers = #tpu.dot_dimension_numbers<[1], [0], [0], [1], [0, 0, 1, 1], [], []>} : vector<8x16xbf16>, vector<16x8xbf16>, vector<8x8xf32> -> vector<8x8xf32>
    %290 = arith.truncf %289 : vector<8x8xf32> to vector<8x8xbf16>
    %c24_97 = arith.constant 24 : index
    %c0_98 = arith.constant 0 : index
    %291 = vector.load %arg15[%c24_97, %c0_98] : memref<32x32xbf16, #tpu.memory_space<vmem>>, vector<8x32xbf16>
    %cst_99 = arith.constant dense<0.000000e+00> : vector<8x32xf32>
    %292 = tpu.matmul %290, %291, %cst_99 {dimension_numbers = #tpu.dot_dimension_numbers<[1], [0], [0], [1], [0, 0, 1, 1], [], []>} : vector<8x8xbf16>, vector<8x32xbf16>, vector<8x32xf32> -> vector<8x32xf32>
    %293 = arith.addf %269, %292 : vector<8x32xf32>
    %294 = arith.addf %153, %293 : vector<8x32xf32>
    %c0_100 = arith.constant 0 : index
    %c0_101 = arith.constant 0 : index
    %295 = vector.load %arg16[%c0_100, %c0_101] : memref<1x32xf32, #tpu.memory_space<vmem>>, vector<1x32xf32>
    %296 = vector.broadcast %295 : vector<1x32xf32> to vector<8x32xf32>
    %297 = arith.addf %294, %296 : vector<8x32xf32>
    %cst_102 = arith.constant dense<0.000000e+00> : vector<8xf32>
    %298 = vector.multi_reduction <add>, %297, %cst_102 [1] : vector<8x32xf32> to vector<8xf32>
    %299 = vector.shape_cast %298 : vector<8xf32> to vector<8x1xf32>
    %cst_103 = arith.constant 3.200000e+01 : f32
    %300 = vector.broadcast %cst_103 : f32 to vector<8x1xf32>
    %301 = arith.divf %299, %300 : vector<8x1xf32>
    %302 = vector.broadcast %301 : vector<8x1xf32> to vector<8x32xf32>
    %303 = arith.subf %297, %302 : vector<8x32xf32>
    %304 = arith.mulf %303, %303 : vector<8x32xf32>
    %cst_104 = arith.constant dense<0.000000e+00> : vector<8xf32>
    %305 = vector.multi_reduction <add>, %304, %cst_104 [1] : vector<8x32xf32> to vector<8xf32>
    %306 = vector.shape_cast %305 : vector<8xf32> to vector<8x1xf32>
    %cst_105 = arith.constant 0.0322580636 : f32
    %307 = vector.broadcast %cst_105 : f32 to vector<8x1xf32>
    %308 = arith.mulf %306, %307 : vector<8x1xf32>
    %309 = math.sqrt %308 : vector<8x1xf32>
    %cst_106 = arith.constant 9.99999997E-7 : f32
    %310 = vector.broadcast %cst_106 : f32 to vector<8x1xf32>
    %311 = arith.addf %309, %310 : vector<8x1xf32>
    %312 = tpu.reciprocal %311 {approx = true} : vector<8x1xf32> -> vector<8x1xf32>
    %313 = vector.extract_strided_slice %2 {offsets = [2, 0], sizes = [1, 32], strides = [1, 1]} : vector<3x32xf32> to vector<1x32xf32>
    %314 = vector.broadcast %301 : vector<8x1xf32> to vector<8x32xf32>
    %315 = arith.subf %297, %314 : vector<8x32xf32>
    %316 = vector.broadcast %313 : vector<1x32xf32> to vector<8x32xf32>
    %317 = arith.mulf %316, %315 : vector<8x32xf32>
    %318 = vector.broadcast %312 : vector<8x1xf32> to vector<8x32xf32>
    %319 = arith.mulf %317, %318 : vector<8x32xf32>
    %320 = vector.extract_strided_slice %3 {offsets = [2, 0], sizes = [1, 32], strides = [1, 1]} : vector<3x32xf32> to vector<1x32xf32>
    %321 = vector.broadcast %320 : vector<1x32xf32> to vector<8x32xf32>
    %322 = arith.addf %319, %321 : vector<8x32xf32>
    %323 = arith.truncf %322 : vector<8x32xf32> to vector<8x32xbf16>
    %c0_107 = arith.constant 0 : index
    %c0_108 = arith.constant 0 : index
    %324 = vector.load %arg17[%c0_107, %c0_108] : memref<32x128xbf16, #tpu.memory_space<vmem>>, vector<32x128xbf16>
    %cst_109 = arith.constant dense<0.000000e+00> : vector<8x128xf32>
    %325 = tpu.matmul %323, %324, %cst_109 {dimension_numbers = #tpu.dot_dimension_numbers<[1], [0], [0], [1], [0, 0, 1, 1], [], []>} : vector<8x32xbf16>, vector<32x128xbf16>, vector<8x128xf32> -> vector<8x128xf32>
    %c0_110 = arith.constant 0 : index
    %c0_111 = arith.constant 0 : index
    %326 = vector.load %arg18[%c0_110, %c0_111] : memref<1x128xf32, #tpu.memory_space<vmem>>, vector<1x128xf32>
    %327 = vector.broadcast %326 : vector<1x128xf32> to vector<8x128xf32>
    %328 = arith.addf %325, %327 : vector<8x128xf32>
    %cst_112 = arith.constant 0.000000e+00 : f32
    %329 = vector.broadcast %cst_112 : f32 to vector<8x128xf32>
    %330 = arith.maximumf %328, %329 : vector<8x128xf32>
    %331 = arith.truncf %330 : vector<8x128xf32> to vector<8x128xbf16>
    %c0_113 = arith.constant 0 : index
    %c0_114 = arith.constant 0 : index
    %332 = vector.load %arg19[%c0_113, %c0_114] : memref<128x32xbf16, #tpu.memory_space<vmem>>, vector<128x32xbf16>
    %cst_115 = arith.constant dense<0.000000e+00> : vector<8x32xf32>
    %333 = tpu.matmul %331, %332, %cst_115 {dimension_numbers = #tpu.dot_dimension_numbers<[1], [0], [0], [1], [0, 0, 1, 1], [], []>} : vector<8x128xbf16>, vector<128x32xbf16>, vector<8x32xf32> -> vector<8x32xf32>
    %c0_116 = arith.constant 0 : index
    %c0_117 = arith.constant 0 : index
    %334 = vector.load %arg20[%c0_116, %c0_117] : memref<1x32xf32, #tpu.memory_space<vmem>>, vector<1x32xf32>
    %335 = vector.broadcast %334 : vector<1x32xf32> to vector<8x32xf32>
    %336 = arith.addf %333, %335 : vector<8x32xf32>
    %337 = arith.addf %297, %336 : vector<8x32xf32>
    %c0_118 = arith.constant 0 : index
    %c0_119 = arith.constant 0 : index
    %c0_120 = arith.constant 0 : index
    %338 = vector.load %arg23[%c0_118, %c0_119, %c0_120] : memref<1x8x32xf32, #tpu.memory_space<vmem>>, vector<1x8x32xf32>
    %339 = vector.shape_cast %338 : vector<1x8x32xf32> to vector<8x32xf32>
    %340 = vector.shape_cast %337 : vector<8x32xf32> to vector<1x8x32xf32>
    tpu.vector_store %arg23[%c0_118, %c0_119, %c0_120], %340 {strides = array<i32>} : memref<1x8x32xf32, #tpu.memory_space<vmem>>, vector<1x8x32xf32>,
    return
  }
  func.func @transform_0(%arg0: i32, %arg1: i32) -> (i32, i32, i32) {
    %c0_i32 = arith.constant 0 : i32
    %c0_i32_0 = arith.constant 0 : i32
    %c0_i32_1 = arith.constant 0 : i32
    return %arg0, %c0_i32, %c0_i32_0 : i32, i32, i32
  }
  func.func @transform_1(%arg0: i32, %arg1: i32) -> (i32, i32, i32) {
    %c0_i32 = arith.constant 0 : i32
    %c0_i32_0 = arith.constant 0 : i32
    %c0_i32_1 = arith.constant 0 : i32
    return %arg0, %c0_i32, %c0_i32_0 : i32, i32, i32
  }
  func.func @transform_2(%arg0: i32, %arg1: i32) -> (i32, i32, i32) {
    %c0_i32 = arith.constant 0 : i32
    %c0_i32_0 = arith.constant 0 : i32
    return %arg0, %arg1, %c0_i32 : i32, i32, i32
  }
  func.func @transform_3(%arg0: i32, %arg1: i32) -> (i32, i32) {
    %c0_i32 = arith.constant 0 : i32
    %c0_i32_0 = arith.constant 0 : i32
    %c0_i32_1 = arith.constant 0 : i32
    return %c0_i32, %c0_i32_0 : i32, i32
  }
  func.func @transform_4(%arg0: i32, %arg1: i32) -> (i32, i32) {
    %c0_i32 = arith.constant 0 : i32
    %c0_i32_0 = arith.constant 0 : i32
    %c0_i32_1 = arith.constant 0 : i32
    return %c0_i32, %c0_i32_0 : i32, i32
  }
  func.func @transform_5(%arg0: i32, %arg1: i32) -> (i32, i32) {
    %c0_i32 = arith.constant 0 : i32
    %c0_i32_0 = arith.constant 0 : i32
    %c0_i32_1 = arith.constant 0 : i32
    return %c0_i32, %c0_i32_0 : i32, i32
  }
  func.func @transform_6(%arg0: i32, %arg1: i32) -> (i32, i32) {
    %c0_i32 = arith.constant 0 : i32
    %c0_i32_0 = arith.constant 0 : i32
    %c0_i32_1 = arith.constant 0 : i32
    return %c0_i32, %c0_i32_0 : i32, i32
  }
  func.func @transform_7(%arg0: i32, %arg1: i32) -> (i32, i32) {
    %c0_i32 = arith.constant 0 : i32
    %c0_i32_0 = arith.constant 0 : i32
    %c0_i32_1 = arith.constant 0 : i32
    return %c0_i32, %c0_i32_0 : i32, i32
  }
  func.func @transform_8(%arg0: i32, %arg1: i32) -> (i32, i32) {
    %c0_i32 = arith.constant 0 : i32
    %c0_i32_0 = arith.constant 0 : i32
    %c0_i32_1 = arith.constant 0 : i32
    return %c0_i32, %c0_i32_0 : i32, i32
  }
  func.func @transform_9(%arg0: i32, %arg1: i32) -> (i32, i32) {
    %c0_i32 = arith.constant 0 : i32
    %c0_i32_0 = arith.constant 0 : i32
    %c0_i32_1 = arith.constant 0 : i32
    return %c0_i32, %c0_i32_0 : i32, i32
  }
  func.func @transform_10(%arg0: i32, %arg1: i32) -> (i32, i32) {
    %c0_i32 = arith.constant 0 : i32
    %c0_i32_0 = arith.constant 0 : i32
    %c0_i32_1 = arith.constant 0 : i32
    return %c0_i32, %c0_i32_0 : i32, i32
  }
  func.func @transform_11(%arg0: i32, %arg1: i32) -> (i32, i32) {
    %c0_i32 = arith.constant 0 : i32
    %c0_i32_0 = arith.constant 0 : i32
    %c0_i32_1 = arith.constant 0 : i32
    return %c0_i32, %c0_i32_0 : i32, i32
  }
  func.func @transform_12(%arg0: i32, %arg1: i32) -> (i32, i32) {
    %c0_i32 = arith.constant 0 : i32
    %c0_i32_0 = arith.constant 0 : i32
    %c0_i32_1 = arith.constant 0 : i32
    return %c0_i32, %c0_i32_0 : i32, i32
  }
  func.func @transform_13(%arg0: i32, %arg1: i32) -> (i32, i32) {
    %c0_i32 = arith.constant 0 : i32
    %c0_i32_0 = arith.constant 0 : i32
    %c0_i32_1 = arith.constant 0 : i32
    return %c0_i32, %c0_i32_0 : i32, i32
  }
  func.func @transform_14(%arg0: i32, %arg1: i32) -> (i32, i32) {
    %c0_i32 = arith.constant 0 : i32
    %c0_i32_0 = arith.constant 0 : i32
    %c0_i32_1 = arith.constant 0 : i32
    return %c0_i32, %c0_i32_0 : i32, i32
  }
  func.func @transform_15(%arg0: i32, %arg1: i32) -> (i32, i32) {
    %c0_i32 = arith.constant 0 : i32
    %c0_i32_0 = arith.constant 0 : i32
    %c0_i32_1 = arith.constant 0 : i32
    return %c0_i32, %c0_i32_0 : i32, i32
  }
  func.func @transform_16(%arg0: i32, %arg1: i32) -> (i32, i32) {
    %c0_i32 = arith.constant 0 : i32
    %c0_i32_0 = arith.constant 0 : i32
    %c0_i32_1 = arith.constant 0 : i32
    return %c0_i32, %c0_i32_0 : i32, i32
  }
  func.func @transform_17(%arg0: i32, %arg1: i32) -> (i32, i32) {
    %c0_i32 = arith.constant 0 : i32
    %c0_i32_0 = arith.constant 0 : i32
    %c0_i32_1 = arith.constant 0 : i32
    return %c0_i32, %c0_i32_0 : i32, i32
  }
  func.func @transform_18(%arg0: i32, %arg1: i32) -> (i32, i32) {
    %c0_i32 = arith.constant 0 : i32
    %c0_i32_0 = arith.constant 0 : i32
    %c0_i32_1 = arith.constant 0 : i32
    return %c0_i32, %c0_i32_0 : i32, i32
  }
  func.func @transform_19(%arg0: i32, %arg1: i32) -> (i32, i32) {
    %c0_i32 = arith.constant 0 : i32
    %c0_i32_0 = arith.constant 0 : i32
    %c0_i32_1 = arith.constant 0 : i32
    return %c0_i32, %c0_i32_0 : i32, i32
  }
  func.func @transform_20(%arg0: i32, %arg1: i32) -> (i32, i32) {
    %c0_i32 = arith.constant 0 : i32
    %c0_i32_0 = arith.constant 0 : i32
    %c0_i32_1 = arith.constant 0 : i32
    return %c0_i32, %c0_i32_0 : i32, i32
  }
  func.func @transform_21(%arg0: i32, %arg1: i32) -> (i32, i32, i32) {
    %c0_i32 = arith.constant 0 : i32
    %c0_i32_0 = arith.constant 0 : i32
    return %arg0, %arg1, %c0_i32 : i32, i32, i32
  }
}

module attributes {stable_mosaic.version = 11 : i64} {
  func.func @_decoder_layer_kernel(%arg0: i32, %arg1: i32, %arg2: memref<1x8x32xf32, #tpu.memory_space<vmem>>, %arg3: memref<1x16x32xf32, #tpu.memory_space<vmem>>, %arg4: memref<1x8x16xf32, #tpu.memory_space<vmem>>, %arg5: memref<32x32xbf16, #tpu.memory_space<vmem>>, %arg6: memref<1x32xf32, #tpu.memory_space<vmem>>, %arg7: memref<32x64xbf16, #tpu.memory_space<vmem>>, %arg8: memref<1x64xf32, #tpu.memory_space<vmem>>, %arg9: memref<32x32xbf16, #tpu.memory_space<vmem>>, %arg10: memref<1x32xf32, #tpu.memory_space<vmem>>, %arg11: memref<32x32xbf16, #tpu.memory_space<vmem>>, %arg12: memref<1x32xf32, #tpu.memory_space<vmem>>, %arg13: memref<32x64xbf16, #tpu.memory_space<vmem>>, %arg14: memref<1x64xf32, #tpu.memory_space<vmem>>, %arg15: memref<32x32xbf16, #tpu.memory_space<vmem>>, %arg16: memref<1x32xf32, #tpu.memory_space<vmem>>, %arg17: memref<32x128xbf16, #tpu.memory_space<vmem>>, %arg18: memref<1x128xf32, #tpu.memory_space<vmem>>, %arg19: memref<128x32xbf16, #tpu.memory_space<vmem>>, %arg20: memref<1x32xf32, #tpu.memory_space<vmem>>, %arg21: memref<3x32xf32, #tpu.memory_space<vmem>>, %arg22: memref<3x32xf32, #tpu.memory_space<vmem>>, %arg23: memref<1x8x32xf32, #tpu.memory_space<vmem>>) attributes {dimension_semantics = [#tpu.dimension_semantics<parallel>, #tpu.dimension_semantics<parallel>], iteration_bounds = array<i64: 2, 1>, scalar_prefetch = 0 : i64, scratch_operands = 0 : i64, tpu.core_type = #tpu.core_type<tc>, window_params = [{transform_indices = @transform_0, window_bounds = array<i64: 1, 8, 32>}, {transform_indices = @transform_1, window_bounds = array<i64: 1, 16, 32>}, {transform_indices = @transform_2, window_bounds = array<i64: 1, 8, 16>}, {pipeline_mode = #tpu.pipeline_mode<synchronous>, transform_indices = @transform_3, window_bounds = array<i64: 32, 32>}, {pipeline_mode = #tpu.pipeline_mode<synchronous>, transform_indices = @transform_4, window_bounds = array<i64: 1, 32>}, {pipeline_mode = #tpu.pipeline_mode<synchronous>, transform_indices = @transform_5, window_bounds = array<i64: 32, 64>}, {pipeline_mode = #tpu.pipeline_mode<synchronous>, transform_indices = @transform_6, window_bounds = array<i64: 1, 64>}, {pipeline_mode = #tpu.pipeline_mode<synchronous>, transform_indices = @transform_7, window_bounds = array<i64: 32, 32>}, {pipeline_mode = #tpu.pipeline_mode<synchronous>, transform_indices = @transform_8, window_bounds = array<i64: 1, 32>}, {pipeline_mode = #tpu.pipeline_mode<synchronous>, transform_indices = @transform_9, window_bounds = array<i64: 32, 32>}, {pipeline_mode = #tpu.pipeline_mode<synchronous>, transform_indices = @transform_10, window_bounds = array<i64: 1, 32>}, {pipeline_mode = #tpu.pipeline_mode<synchronous>, transform_indices = @transform_11, window_bounds = array<i64: 32, 64>}, {pipeline_mode = #tpu.pipeline_mode<synchronous>, transform_indices = @transform_12, window_bounds = array<i64: 1, 64>}, {pipeline_mode = #tpu.pipeline_mode<synchronous>, transform_indices = @transform_13, window_bounds = array<i64: 32, 32>}, {pipeline_mode = #tpu.pipeline_mode<synchronous>, transform_indices = @transform_14, window_bounds = array<i64: 1, 32>}, {pipeline_mode = #tpu.pipeline_mode<synchronous>, transform_indices = @transform_15, window_bounds = array<i64: 32, 128>}, {pipeline_mode = #tpu.pipeline_mode<synchronous>, transform_indices = @transform_16, window_bounds = array<i64: 1, 128>}, {pipeline_mode = #tpu.pipeline_mode<synchronous>, transform_indices = @transform_17, window_bounds = array<i64: 128, 32>}, {pipeline_mode = #tpu.pipeline_mode<synchronous>, transform_indices = @transform_18, window_bounds = array<i64: 1, 32>}, {pipeline_mode = #tpu.pipeline_mode<synchronous>, transform_indices = @transform_19, window_bounds = array<i64: 3, 32>}, {pipeline_mode = #tpu.pipeline_mode<synchronous>, transform_indices = @transform_20, window_bounds = array<i64: 3, 32>}, {transform_indices = @transform_21, window_bounds = array<i64: 1, 8, 32>}]} {
    %c8_i32 = arith.constant 8 : i32
    %0 = arith.muli %arg1, %c8_i32 : i32
    %1 = tpu.assume_multiple %0, 8 : i32
    %c0 = arith.constant 0 : index
    %c0_0 = arith.constant 0 : index
    %2 = vector.load %arg21[%c0, %c0_0] : memref<3x32xf32, #tpu.memory_space<vmem>>, vector<3x32xf32>
    %c0_1 = arith.constant 0 : index
    %c0_2 = arith.constant 0 : index
    %3 = vector.load %arg22[%c0_1, %c0_2] : memref<3x32xf32, #tpu.memory_space<vmem>>, vector<3x32xf32>
    %c0_3 = arith.constant 0 : index
    %c0_4 = arith.constant 0 : index
    %c0_5 = arith.constant 0 : index
    %4 = vector.load %arg2[%c0_3, %c0_4, %c0_5] : memref<1x8x32xf32, #tpu.memory_space<vmem>>, vector<1x8x32xf32>
    %5 = vector.shape_cast %4 : vector<1x8x32xf32> to vector<8x32xf32>
    %6 = tpu.iota {dimensions = array<i32: 0>} : vector<8x8xi32>
    %7 = vector.broadcast %1 : i32 to vector<8x8xi32>
    %8 = arith.addi %6, %7 : vector<8x8xi32>
    %9 = tpu.iota {dimensions = array<i32: 1>} : vector<8x8xi32>
    %10 = arith.cmpi sle, %9, %8 : vector<8x8xi32>
    %cst = arith.constant 0.000000e+00 : f32
    %cst_6 = arith.constant -1.000000e+30 : f32
    %11 = vector.broadcast %cst : f32 to vector<8x8xf32>
    %12 = vector.broadcast %cst_6 : f32 to vector<8x8xf32>
    %13 = arith.select %10, %11, %12 : vector<8x8xi1>, vector<8x8xf32>
    %cst_7 = arith.constant dense<0.000000e+00> : vector<8xf32>
    %14 = vector.multi_reduction <add>, %5, %cst_7 [1] : vector<8x32xf32> to vector<8xf32>
    %15 = vector.shape_cast %14 : vector<8xf32> to vector<8x1xf32>
    %cst_8 = arith.constant 3.200000e+01 : f32
    %16 = vector.broadcast %cst_8 : f32 to vector<8x1xf32>
    %17 = arith.divf %15, %16 : vector<8x1xf32>
    %18 = vector.broadcast %17 : vector<8x1xf32> to vector<8x32xf32>
    %19 = arith.subf %5, %18 : vector<8x32xf32>
    %20 = arith.mulf %19, %19 : vector<8x32xf32>
    %cst_9 = arith.constant dense<0.000000e+00> : vector<8xf32>
    %21 = vector.multi_reduction <add>, %20, %cst_9 [1] : vector<8x32xf32> to vector<8xf32>
    %22 = vector.shape_cast %21 : vector<8xf32> to vector<8x1xf32>
    %cst_10 = arith.constant 0.0322580636 : f32
    %23 = vector.broadcast %cst_10 : f32 to vector<8x1xf32>
    %24 = arith.mulf %22, %23 : vector<8x1xf32>
    %25 = math.sqrt %24 : vector<8x1xf32>
    %cst_11 = arith.constant 9.99999997E-7 : f32
    %26 = vector.broadcast %cst_11 : f32 to vector<8x1xf32>
    %27 = arith.addf %25, %26 : vector<8x1xf32>
    %28 = tpu.reciprocal %27 {approx = true} : vector<8x1xf32> -> vector<8x1xf32>
    %29 = vector.extract_strided_slice %2 {offsets = [0, 0], sizes = [1, 32], strides = [1, 1]} : vector<3x32xf32> to vector<1x32xf32>
    %30 = vector.broadcast %17 : vector<8x1xf32> to vector<8x32xf32>
    %31 = arith.subf %5, %30 : vector<8x32xf32>
    %32 = vector.broadcast %29 : vector<1x32xf32> to vector<8x32xf32>
    %33 = arith.mulf %32, %31 : vector<8x32xf32>
    %34 = vector.broadcast %28 : vector<8x1xf32> to vector<8x32xf32>
    %35 = arith.mulf %33, %34 : vector<8x32xf32>
    %36 = vector.extract_strided_slice %3 {offsets = [0, 0], sizes = [1, 32], strides = [1, 1]} : vector<3x32xf32> to vector<1x32xf32>
    %37 = vector.broadcast %36 : vector<1x32xf32> to vector<8x32xf32>
    %38 = arith.addf %35, %37 : vector<8x32xf32>
    %39 = arith.truncf %38 : vector<8x32xf32> to vector<8x32xbf16>
    %c0_12 = arith.constant 0 : index
    %c0_13 = arith.constant 0 : index
    %40 = vector.load %arg5[%c0_12, %c0_13] : memref<32x32xbf16, #tpu.memory_space<vmem>>, vector<32x32xbf16>
    %cst_14 = arith.constant dense<0.000000e+00> : vector<8x32xf32>
    %41 = tpu.matmul %39, %40, %cst_14 {dimension_numbers = #tpu.dot_dimension_numbers<[1], [0], [0], [1], [0, 0, 1, 1], [], []>} : vector<8x32xbf16>, vector<32x32xbf16>, vector<8x32xf32> -> vector<8x32xf32>
    %c0_15 = arith.constant 0 : index
    %c0_16 = arith.constant 0 : index
    %42 = vector.load %arg6[%c0_15, %c0_16] : memref<1x32xf32, #tpu.memory_space<vmem>>, vector<1x32xf32>
    %43 = vector.broadcast %42 : vector<1x32xf32> to vector<8x32xf32>
    %44 = arith.addf %41, %43 : vector<8x32xf32>
    %45 = arith.truncf %38 : vector<8x32xf32> to vector<8x32xbf16>
    %c0_17 = arith.constant 0 : index
    %c0_18 = arith.constant 0 : index
    %46 = vector.load %arg7[%c0_17, %c0_18] : memref<32x64xbf16, #tpu.memory_space<vmem>>, vector<32x64xbf16>
    %cst_19 = arith.constant dense<0.000000e+00> : vector<8x64xf32>
    %47 = tpu.matmul %45, %46, %cst_19 {dimension_numbers = #tpu.dot_dimension_numbers<[1], [0], [0], [1], [0, 0, 1, 1], [], []>} : vector<8x32xbf16>, vector<32x64xbf16>, vector<8x64xf32> -> vector<8x64xf32>
    %c0_20 = arith.constant 0 : index
    %c0_21 = arith.constant 0 : index
    %48 = vector.load %arg8[%c0_20, %c0_21] : memref<1x64xf32, #tpu.memory_space<vmem>>, vector<1x64xf32>
    %49 = vector.broadcast %48 : vector<1x64xf32> to vector<8x64xf32>
    %50 = arith.addf %47, %49 : vector<8x64xf32>
    %51 = vector.extract_strided_slice %50 {offsets = [0, 0], sizes = [8, 32], strides = [1, 1]} : vector<8x64xf32> to vector<8x32xf32>
    %52 = vector.extract_strided_slice %50 {offsets = [0, 32], sizes = [8, 32], strides = [1, 1]} : vector<8x64xf32> to vector<8x32xf32>
    %cst_22 = arith.constant 0.000000e+00 : f32
    %53 = vector.broadcast %cst_22 : f32 to vector<8x32xf32>
    %54 = vector.extract_strided_slice %44 {offsets = [0, 0], sizes = [8, 8], strides = [1, 1]} : vector<8x32xf32> to vector<8x8xf32>
    %55 = arith.truncf %54 : vector<8x8xf32> to vector<8x8xbf16>
    %56 = vector.extract_strided_slice %51 {offsets = [0, 0], sizes = [8, 8], strides = [1, 1]} : vector<8x32xf32> to vector<8x8xf32>
    %57 = arith.truncf %56 : vector<8x8xf32> to vector<8x8xbf16>
    %58 = vector.extract_strided_slice %52 {offsets = [0, 0], sizes = [8, 8], strides = [1, 1]} : vector<8x32xf32> to vector<8x8xf32>
    %59 = arith.truncf %58 : vector<8x8xf32> to vector<8x8xbf16>
    %cst_23 = arith.constant dense<0.000000e+00> : vector<8x8xf32>
    %60 = tpu.matmul %55, %57, %cst_23 {dimension_numbers = #tpu.dot_dimension_numbers<[1], [1], [0], [0], [0, 0, 1, 0], [], []>} : vector<8x8xbf16>, vector<8x8xbf16>, vector<8x8xf32> -> vector<8x8xf32>
    %61 = arith.addf %60, %13 : vector<8x8xf32>
    %cst_24 = arith.constant dense<0xFF800000> : vector<8xf32>
    %62 = vector.multi_reduction <maximumf>, %61, %cst_24 [1] : vector<8x8xf32> to vector<8xf32>
    %63 = vector.shape_cast %62 : vector<8xf32> to vector<8x1xf32>
    %64 = vector.broadcast %63 : vector<8x1xf32> to vector<8x8xf32>
    %65 = arith.subf %61, %64 : vector<8x8xf32>
    %66 = math.exp %65 : vector<8x8xf32>
    %cst_25 = arith.constant dense<0.000000e+00> : vector<8xf32>
    %67 = vector.multi_reduction <add>, %66, %cst_25 [1] : vector<8x8xf32> to vector<8xf32>
    %68 = vector.shape_cast %67 : vector<8xf32> to vector<8x1xf32>
    %69 = tpu.reciprocal %68 {approx = true} : vector<8x1xf32> -> vector<8x1xf32>
    %70 = vector.broadcast %69 : vector<8x1xf32> to vector<8x8xf32>
    %71 = arith.mulf %66, %70 : vector<8x8xf32>
    %72 = arith.truncf %71 : vector<8x8xf32> to vector<8x8xbf16>
    %cst_26 = arith.constant dense<0.000000e+00> : vector<8x8xf32>
    %73 = tpu.matmul %72, %59, %cst_26 {dimension_numbers = #tpu.dot_dimension_numbers<[1], [0], [0], [1], [0, 0, 1, 1], [], []>} : vector<8x8xbf16>, vector<8x8xbf16>, vector<8x8xf32> -> vector<8x8xf32>
    %74 = arith.truncf %73 : vector<8x8xf32> to vector<8x8xbf16>
    %c0_27 = arith.constant 0 : index
    %c0_28 = arith.constant 0 : index
    %75 = vector.load %arg9[%c0_27, %c0_28] : memref<32x32xbf16, #tpu.memory_space<vmem>>, vector<8x32xbf16>
    %cst_29 = arith.constant dense<0.000000e+00> : vector<8x32xf32>
    %76 = tpu.matmul %74, %75, %cst_29 {dimension_numbers = #tpu.dot_dimension_numbers<[1], [0], [0], [1], [0, 0, 1, 1], [], []>} : vector<8x8xbf16>, vector<8x32xbf16>, vector<8x32xf32> -> vector<8x32xf32>
    %77 = arith.addf %53, %76 : vector<8x32xf32>
    %78 = vector.extract_strided_slice %44 {offsets = [0, 8], sizes = [8, 8], strides = [1, 1]} : vector<8x32xf32> to vector<8x8xf32>
    %79 = arith.truncf %78 : vector<8x8xf32> to vector<8x8xbf16>
    %80 = vector.extract_strided_slice %51 {offsets = [0, 8], sizes = [8, 8], strides = [1, 1]} : vector<8x32xf32> to vector<8x8xf32>
    %81 = arith.truncf %80 : vector<8x8xf32> to vector<8x8xbf16>
    %82 = vector.extract_strided_slice %52 {offsets = [0, 8], sizes = [8, 8], strides = [1, 1]} : vector<8x32xf32> to vector<8x8xf32>
    %83 = arith.truncf %82 : vector<8x8xf32> to vector<8x8xbf16>
    %cst_30 = arith.constant dense<0.000000e+00> : vector<8x8xf32>
    %84 = tpu.matmul %79, %81, %cst_30 {dimension_numbers = #tpu.dot_dimension_numbers<[1], [1], [0], [0], [0, 0, 1, 0], [], []>} : vector<8x8xbf16>, vector<8x8xbf16>, vector<8x8xf32> -> vector<8x8xf32>
    %85 = arith.addf %84, %13 : vector<8x8xf32>
    %cst_31 = arith.constant dense<0xFF800000> : vector<8xf32>
    %86 = vector.multi_reduction <maximumf>, %85, %cst_31 [1] : vector<8x8xf32> to vector<8xf32>
    %87 = vector.shape_cast %86 : vector<8xf32> to vector<8x1xf32>
    %88 = vector.broadcast %87 : vector<8x1xf32> to vector<8x8xf32>
    %89 = arith.subf %85, %88 : vector<8x8xf32>
    %90 = math.exp %89 : vector<8x8xf32>
    %cst_32 = arith.constant dense<0.000000e+00> : vector<8xf32>
    %91 = vector.multi_reduction <add>, %90, %cst_32 [1] : vector<8x8xf32> to vector<8xf32>
    %92 = vector.shape_cast %91 : vector<8xf32> to vector<8x1xf32>
    %93 = tpu.reciprocal %92 {approx = true} : vector<8x1xf32> -> vector<8x1xf32>
    %94 = vector.broadcast %93 : vector<8x1xf32> to vector<8x8xf32>
    %95 = arith.mulf %90, %94 : vector<8x8xf32>
    %96 = arith.truncf %95 : vector<8x8xf32> to vector<8x8xbf16>
    %cst_33 = arith.constant dense<0.000000e+00> : vector<8x8xf32>
    %97 = tpu.matmul %96, %83, %cst_33 {dimension_numbers = #tpu.dot_dimension_numbers<[1], [0], [0], [1], [0, 0, 1, 1], [], []>} : vector<8x8xbf16>, vector<8x8xbf16>, vector<8x8xf32> -> vector<8x8xf32>
    %98 = arith.truncf %97 : vector<8x8xf32> to vector<8x8xbf16>
    %c8 = arith.constant 8 : index
    %c0_34 = arith.constant 0 : index
    %99 = vector.load %arg9[%c8, %c0_34] : memref<32x32xbf16, #tpu.memory_space<vmem>>, vector<8x32xbf16>
    %cst_35 = arith.constant dense<0.000000e+00> : vector<8x32xf32>
    %100 = tpu.matmul %98, %99, %cst_35 {dimension_numbers = #tpu.dot_dimension_numbers<[1], [0], [0], [1], [0, 0, 1, 1], [], []>} : vector<8x8xbf16>, vector<8x32xbf16>, vector<8x32xf32> -> vector<8x32xf32>
    %101 = arith.addf %77, %100 : vector<8x32xf32>
    %102 = vector.extract_strided_slice %44 {offsets = [0, 16], sizes = [8, 8], strides = [1, 1]} : vector<8x32xf32> to vector<8x8xf32>
    %103 = arith.truncf %102 : vector<8x8xf32> to vector<8x8xbf16>
    %104 = vector.extract_strided_slice %51 {offsets = [0, 16], sizes = [8, 8], strides = [1, 1]} : vector<8x32xf32> to vector<8x8xf32>
    %105 = arith.truncf %104 : vector<8x8xf32> to vector<8x8xbf16>
    %106 = vector.extract_strided_slice %52 {offsets = [0, 16], sizes = [8, 8], strides = [1, 1]} : vector<8x32xf32> to vector<8x8xf32>
    %107 = arith.truncf %106 : vector<8x8xf32> to vector<8x8xbf16>
    %cst_36 = arith.constant dense<0.000000e+00> : vector<8x8xf32>
    %108 = tpu.matmul %103, %105, %cst_36 {dimension_numbers = #tpu.dot_dimension_numbers<[1], [1], [0], [0], [0, 0, 1, 0], [], []>} : vector<8x8xbf16>, vector<8x8xbf16>, vector<8x8xf32> -> vector<8x8xf32>
    %109 = arith.addf %108, %13 : vector<8x8xf32>
    %cst_37 = arith.constant dense<0xFF800000> : vector<8xf32>
    %110 = vector.multi_reduction <maximumf>, %109, %cst_37 [1] : vector<8x8xf32> to vector<8xf32>
    %111 = vector.shape_cast %110 : vector<8xf32> to vector<8x1xf32>
    %112 = vector.broadcast %111 : vector<8x1xf32> to vector<8x8xf32>
    %113 = arith.subf %109, %112 : vector<8x8xf32>
    %114 = math.exp %113 : vector<8x8xf32>
    %cst_38 = arith.constant dense<0.000000e+00> : vector<8xf32>
    %115 = vector.multi_reduction <add>, %114, %cst_38 [1] : vector<8x8xf32> to vector<8xf32>
    %116 = vector.shape_cast %115 : vector<8xf32> to vector<8x1xf32>
    %117 = tpu.reciprocal %116 {approx = true} : vector<8x1xf32> -> vector<8x1xf32>
    %118 = vector.broadcast %117 : vector<8x1xf32> to vector<8x8xf32>
    %119 = arith.mulf %114, %118 : vector<8x8xf32>
    %120 = arith.truncf %119 : vector<8x8xf32> to vector<8x8xbf16>
    %cst_39 = arith.constant dense<0.000000e+00> : vector<8x8xf32>
    %121 = tpu.matmul %120, %107, %cst_39 {dimension_numbers = #tpu.dot_dimension_numbers<[1], [0], [0], [1], [0, 0, 1, 1], [], []>} : vector<8x8xbf16>, vector<8x8xbf16>, vector<8x8xf32> -> vector<8x8xf32>
    %122 = arith.truncf %121 : vector<8x8xf32> to vector<8x8xbf16>
    %c16 = arith.constant 16 : index
    %c0_40 = arith.constant 0 : index
    %123 = vector.load %arg9[%c16, %c0_40] : memref<32x32xbf16, #tpu.memory_space<vmem>>, vector<8x32xbf16>
    %cst_41 = arith.constant dense<0.000000e+00> : vector<8x32xf32>
    %124 = tpu.matmul %122, %123, %cst_41 {dimension_numbers = #tpu.dot_dimension_numbers<[1], [0], [0], [1], [0, 0, 1, 1], [], []>} : vector<8x8xbf16>, vector<8x32xbf16>, vector<8x32xf32> -> vector<8x32xf32>
    %125 = arith.addf %101, %124 : vector<8x32xf32>
    %126 = vector.extract_strided_slice %44 {offsets = [0, 24], sizes = [8, 8], strides = [1, 1]} : vector<8x32xf32> to vector<8x8xf32>
    %127 = arith.truncf %126 : vector<8x8xf32> to vector<8x8xbf16>
    %128 = vector.extract_strided_slice %51 {offsets = [0, 24], sizes = [8, 8], strides = [1, 1]} : vector<8x32xf32> to vector<8x8xf32>
    %129 = arith.truncf %128 : vector<8x8xf32> to vector<8x8xbf16>
    %130 = vector.extract_strided_slice %52 {offsets = [0, 24], sizes = [8, 8], strides = [1, 1]} : vector<8x32xf32> to vector<8x8xf32>
    %131 = arith.truncf %130 : vector<8x8xf32> to vector<8x8xbf16>
    %cst_42 = arith.constant dense<0.000000e+00> : vector<8x8xf32>
    %132 = tpu.matmul %127, %129, %cst_42 {dimension_numbers = #tpu.dot_dimension_numbers<[1], [1], [0], [0], [0, 0, 1, 0], [], []>} : vector<8x8xbf16>, vector<8x8xbf16>, vector<8x8xf32> -> vector<8x8xf32>
    %133 = arith.addf %132, %13 : vector<8x8xf32>
    %cst_43 = arith.constant dense<0xFF800000> : vector<8xf32>
    %134 = vector.multi_reduction <maximumf>, %133, %cst_43 [1] : vector<8x8xf32> to vector<8xf32>
    %135 = vector.shape_cast %134 : vector<8xf32> to vector<8x1xf32>
    %136 = vector.broadcast %135 : vector<8x1xf32> to vector<8x8xf32>
    %137 = arith.subf %133, %136 : vector<8x8xf32>
    %138 = math.exp %137 : vector<8x8xf32>
    %cst_44 = arith.constant dense<0.000000e+00> : vector<8xf32>
    %139 = vector.multi_reduction <add>, %138, %cst_44 [1] : vector<8x8xf32> to vector<8xf32>
    %140 = vector.shape_cast %139 : vector<8xf32> to vector<8x1xf32>
    %141 = tpu.reciprocal %140 {approx = true} : vector<8x1xf32> -> vector<8x1xf32>
    %142 = vector.broadcast %141 : vector<8x1xf32> to vector<8x8xf32>
    %143 = arith.mulf %138, %142 : vector<8x8xf32>
    %144 = arith.truncf %143 : vector<8x8xf32> to vector<8x8xbf16>
    %cst_45 = arith.constant dense<0.000000e+00> : vector<8x8xf32>
    %145 = tpu.matmul %144, %131, %cst_45 {dimension_numbers = #tpu.dot_dimension_numbers<[1], [0], [0], [1], [0, 0, 1, 1], [], []>} : vector<8x8xbf16>, vector<8x8xbf16>, vector<8x8xf32> -> vector<8x8xf32>
    %146 = arith.truncf %145 : vector<8x8xf32> to vector<8x8xbf16>
    %c24 = arith.constant 24 : index
    %c0_46 = arith.constant 0 : index
    %147 = vector.load %arg9[%c24, %c0_46] : memref<32x32xbf16, #tpu.memory_space<vmem>>, vector<8x32xbf16>
    %cst_47 = arith.constant dense<0.000000e+00> : vector<8x32xf32>
    %148 = tpu.matmul %146, %147, %cst_47 {dimension_numbers = #tpu.dot_dimension_numbers<[1], [0], [0], [1], [0, 0, 1, 1], [], []>} : vector<8x8xbf16>, vector<8x32xbf16>, vector<8x32xf32> -> vector<8x32xf32>
    %149 = arith.addf %125, %148 : vector<8x32xf32>
    %150 = arith.addf %5, %149 : vector<8x32xf32>
    %c0_48 = arith.constant 0 : index
    %c0_49 = arith.constant 0 : index
    %151 = vector.load %arg10[%c0_48, %c0_49] : memref<1x32xf32, #tpu.memory_space<vmem>>, vector<1x32xf32>
    %152 = vector.broadcast %151 : vector<1x32xf32> to vector<8x32xf32>
    %153 = arith.addf %150, %152 : vector<8x32xf32>
    %cst_50 = arith.constant dense<0.000000e+00> : vector<8xf32>
    %154 = vector.multi_reduction <add>, %153, %cst_50 [1] : vector<8x32xf32> to vector<8xf32>
    %155 = vector.shape_cast %154 : vector<8xf32> to vector<8x1xf32>
    %cst_51 = arith.constant 3.200000e+01 : f32
    %156 = vector.broadcast %cst_51 : f32 to vector<8x1xf32>
    %157 = arith.divf %155, %156 : vector<8x1xf32>
    %158 = vector.broadcast %157 : vector<8x1xf32> to vector<8x32xf32>
    %159 = arith.subf %153, %158 : vector<8x32xf32>
    %160 = arith.mulf %159, %159 : vector<8x32xf32>
    %cst_52 = arith.constant dense<0.000000e+00> : vector<8xf32>
    %161 = vector.multi_reduction <add>, %160, %cst_52 [1] : vector<8x32xf32> to vector<8xf32>
    %162 = vector.shape_cast %161 : vector<8xf32> to vector<8x1xf32>
    %cst_53 = arith.constant 0.0322580636 : f32
    %163 = vector.broadcast %cst_53 : f32 to vector<8x1xf32>
    %164 = arith.mulf %162, %163 : vector<8x1xf32>
    %165 = math.sqrt %164 : vector<8x1xf32>
    %cst_54 = arith.constant 9.99999997E-7 : f32
    %166 = vector.broadcast %cst_54 : f32 to vector<8x1xf32>
    %167 = arith.addf %165, %166 : vector<8x1xf32>
    %168 = tpu.reciprocal %167 {approx = true} : vector<8x1xf32> -> vector<8x1xf32>
    %169 = vector.extract_strided_slice %2 {offsets = [1, 0], sizes = [1, 32], strides = [1, 1]} : vector<3x32xf32> to vector<1x32xf32>
    %170 = vector.broadcast %157 : vector<8x1xf32> to vector<8x32xf32>
    %171 = arith.subf %153, %170 : vector<8x32xf32>
    %172 = vector.broadcast %169 : vector<1x32xf32> to vector<8x32xf32>
    %173 = arith.mulf %172, %171 : vector<8x32xf32>
    %174 = vector.broadcast %168 : vector<8x1xf32> to vector<8x32xf32>
    %175 = arith.mulf %173, %174 : vector<8x32xf32>
    %176 = vector.extract_strided_slice %3 {offsets = [1, 0], sizes = [1, 32], strides = [1, 1]} : vector<3x32xf32> to vector<1x32xf32>
    %177 = vector.broadcast %176 : vector<1x32xf32> to vector<8x32xf32>
    %178 = arith.addf %175, %177 : vector<8x32xf32>
    %179 = arith.truncf %178 : vector<8x32xf32> to vector<8x32xbf16>
    %c0_55 = arith.constant 0 : index
    %c0_56 = arith.constant 0 : index
    %180 = vector.load %arg11[%c0_55, %c0_56] : memref<32x32xbf16, #tpu.memory_space<vmem>>, vector<32x32xbf16>
    %cst_57 = arith.constant dense<0.000000e+00> : vector<8x32xf32>
    %181 = tpu.matmul %179, %180, %cst_57 {dimension_numbers = #tpu.dot_dimension_numbers<[1], [0], [0], [1], [0, 0, 1, 1], [], []>} : vector<8x32xbf16>, vector<32x32xbf16>, vector<8x32xf32> -> vector<8x32xf32>
    %c0_58 = arith.constant 0 : index
    %c0_59 = arith.constant 0 : index
    %182 = vector.load %arg12[%c0_58, %c0_59] : memref<1x32xf32, #tpu.memory_space<vmem>>, vector<1x32xf32>
    %183 = vector.broadcast %182 : vector<1x32xf32> to vector<8x32xf32>
    %184 = arith.addf %181, %183 : vector<8x32xf32>
    %c0_60 = arith.constant 0 : index
    %c0_61 = arith.constant 0 : index
    %c0_62 = arith.constant 0 : index
    %185 = vector.load %arg3[%c0_60, %c0_61, %c0_62] : memref<1x16x32xf32, #tpu.memory_space<vmem>>, vector<1x16x32xf32>
    %186 = vector.shape_cast %185 : vector<1x16x32xf32> to vector<16x32xf32>
    %187 = arith.truncf %186 : vector<16x32xf32> to vector<16x32xbf16>
    %c0_63 = arith.constant 0 : index
    %c0_64 = arith.constant 0 : index
    %188 = vector.load %arg13[%c0_63, %c0_64] : memref<32x64xbf16, #tpu.memory_space<vmem>>, vector<32x64xbf16>
    %cst_65 = arith.constant dense<0.000000e+00> : vector<16x64xf32>
    %189 = tpu.matmul %187, %188, %cst_65 {dimension_numbers = #tpu.dot_dimension_numbers<[1], [0], [0], [1], [0, 0, 1, 1], [], []>} : vector<16x32xbf16>, vector<32x64xbf16>, vector<16x64xf32> -> vector<16x64xf32>
    %c0_66 = arith.constant 0 : index
    %c0_67 = arith.constant 0 : index
    %190 = vector.load %arg14[%c0_66, %c0_67] : memref<1x64xf32, #tpu.memory_space<vmem>>, vector<1x64xf32>
    %191 = vector.broadcast %190 : vector<1x64xf32> to vector<16x64xf32>
    %192 = arith.addf %189, %191 : vector<16x64xf32>
    %193 = vector.extract_strided_slice %192 {offsets = [0, 0], sizes = [16, 32], strides = [1, 1]} : vector<16x64xf32> to vector<16x32xf32>
    %194 = vector.extract_strided_slice %192 {offsets = [0, 32], sizes = [16, 32], strides = [1, 1]} : vector<16x64xf32> to vector<16x32xf32>
    %c0_68 = arith.constant 0 : index
    %c0_69 = arith.constant 0 : index
    %c0_70 = arith.constant 0 : index
    %195 = vector.load %arg4[%c0_68, %c0_69, %c0_70] : memref<1x8x16xf32, #tpu.memory_space<vmem>>, vector<1x8x16xf32>
    %196 = vector.shape_cast %195 : vector<1x8x16xf32> to vector<8x16xf32>
    %cst_71 = arith.constant 0.000000e+00 : f32
    %197 = vector.broadcast %cst_71 : f32 to vector<8x32xf32>
    %198 = vector.extract_strided_slice %184 {offsets = [0, 0], sizes = [8, 8], strides = [1, 1]} : vector<8x32xf32> to vector<8x8xf32>
    %199 = arith.truncf %198 : vector<8x8xf32> to vector<8x8xbf16>
    %200 = vector.extract_strided_slice %193 {offsets = [0, 0], sizes = [16, 8], strides = [1, 1]} : vector<16x32xf32> to vector<16x8xf32>
    %201 = arith.truncf %200 : vector<16x8xf32> to vector<16x8xbf16>
    %202 = vector.extract_strided_slice %194 {offsets = [0, 0], sizes = [16, 8], strides = [1, 1]} : vector<16x32xf32> to vector<16x8xf32>
    %203 = arith.truncf %202 : vector<16x8xf32> to vector<16x8xbf16>
    %cst_72 = arith.constant dense<0.000000e+00> : vector<8x16xf32>
    %204 = tpu.matmul %199, %201, %cst_72 {dimension_numbers = #tpu.dot_dimension_numbers<[1], [1], [0], [0], [0, 0, 1, 0], [], []>} : vector<8x8xbf16>, vector<16x8xbf16>, vector<8x16xf32> -> vector<8x16xf32>
    %205 = arith.addf %204, %196 : vector<8x16xf32>
    %cst_73 = arith.constant dense<0xFF800000> : vector<8xf32>
    %206 = vector.multi_reduction <maximumf>, %205, %cst_73 [1] : vector<8x16xf32> to vector<8xf32>
    %207 = vector.shape_cast %206 : vector<8xf32> to vector<8x1xf32>
    %208 = vector.broadcast %207 : vector<8x1xf32> to vector<8x16xf32>
    %209 = arith.subf %205, %208 : vector<8x16xf32>
    %210 = math.exp %209 : vector<8x16xf32>
    %cst_74 = arith.constant dense<0.000000e+00> : vector<8xf32>
    %211 = vector.multi_reduction <add>, %210, %cst_74 [1] : vector<8x16xf32> to vector<8xf32>
    %212 = vector.shape_cast %211 : vector<8xf32> to vector<8x1xf32>
    %213 = tpu.reciprocal %212 {approx = true} : vector<8x1xf32> -> vector<8x1xf32>
    %214 = vector.broadcast %213 : vector<8x1xf32> to vector<8x16xf32>
    %215 = arith.mulf %210, %214 : vector<8x16xf32>
    %216 = arith.truncf %215 : vector<8x16xf32> to vector<8x16xbf16>
    %cst_75 = arith.constant dense<0.000000e+00> : vector<8x8xf32>
    %217 = tpu.matmul %216, %203, %cst_75 {dimension_numbers = #tpu.dot_dimension_numbers<[1], [0], [0], [1], [0, 0, 1, 1], [], []>} : vector<8x16xbf16>, vector<16x8xbf16>, vector<8x8xf32> -> vector<8x8xf32>
    %218 = arith.truncf %217 : vector<8x8xf32> to vector<8x8xbf16>
    %c0_76 = arith.constant 0 : index
    %c0_77 = arith.constant 0 : index
    %219 = vector.load %arg15[%c0_76, %c0_77] : memref<32x32xbf16, #tpu.memory_space<vmem>>, vector<8x32xbf16>
    %cst_78 = arith.constant dense<0.000000e+00> : vector<8x32xf32>
    %220 = tpu.matmul %218, %219, %cst_78 {dimension_numbers = #tpu.dot_dimension_numbers<[1], [0], [0], [1], [0, 0, 1, 1], [], []>} : vector<8x8xbf16>, vector<8x32xbf16>, vector<8x32xf32> -> vector<8x32xf32>
    %221 = arith.addf %197, %220 : vector<8x32xf32>
    %222 = vector.extract_strided_slice %184 {offsets = [0, 8], sizes = [8, 8], strides = [1, 1]} : vector<8x32xf32> to vector<8x8xf32>
    %223 = arith.truncf %222 : vector<8x8xf32> to vector<8x8xbf16>
    %224 = vector.extract_strided_slice %193 {offsets = [0, 8], sizes = [16, 8], strides = [1, 1]} : vector<16x32xf32> to vector<16x8xf32>
    %225 = arith.truncf %224 : vector<16x8xf32> to vector<16x8xbf16>
    %226 = vector.extract_strided_slice %194 {offsets = [0, 8], sizes = [16, 8], strides = [1, 1]} : vector<16x32xf32> to vector<16x8xf32>
    %227 = arith.truncf %226 : vector<16x8xf32> to vector<16x8xbf16>
    %cst_79 = arith.constant dense<0.000000e+00> : vector<8x16xf32>
    %228 = tpu.matmul %223, %225, %cst_79 {dimension_numbers = #tpu.dot_dimension_numbers<[1], [1], [0], [0], [0, 0, 1, 0], [], []>} : vector<8x8xbf16>, vector<16x8xbf16>, vector<8x16xf32> -> vector<8x16xf32>
    %229 = arith.addf %228, %196 : vector<8x16xf32>
    %cst_80 = arith.constant dense<0xFF800000> : vector<8xf32>
    %230 = vector.multi_reduction <maximumf>, %229, %cst_80 [1] : vector<8x16xf32> to vector<8xf32>
    %231 = vector.shape_cast %230 : vector<8xf32> to vector<8x1xf32>
    %232 = vector.broadcast %231 : vector<8x1xf32> to vector<8x16xf32>
    %233 = arith.subf %229, %232 : vector<8x16xf32>
    %234 = math.exp %233 : vector<8x16xf32>
    %cst_81 = arith.constant dense<0.000000e+00> : vector<8xf32>
    %235 = vector.multi_reduction <add>, %234, %cst_81 [1] : vector<8x16xf32> to vector<8xf32>
    %236 = vector.shape_cast %235 : vector<8xf32> to vector<8x1xf32>
    %237 = tpu.reciprocal %236 {approx = true} : vector<8x1xf32> -> vector<8x1xf32>
    %238 = vector.broadcast %237 : vector<8x1xf32> to vector<8x16xf32>
    %239 = arith.mulf %234, %238 : vector<8x16xf32>
    %240 = arith.truncf %239 : vector<8x16xf32> to vector<8x16xbf16>
    %cst_82 = arith.constant dense<0.000000e+00> : vector<8x8xf32>
    %241 = tpu.matmul %240, %227, %cst_82 {dimension_numbers = #tpu.dot_dimension_numbers<[1], [0], [0], [1], [0, 0, 1, 1], [], []>} : vector<8x16xbf16>, vector<16x8xbf16>, vector<8x8xf32> -> vector<8x8xf32>
    %242 = arith.truncf %241 : vector<8x8xf32> to vector<8x8xbf16>
    %c8_83 = arith.constant 8 : index
    %c0_84 = arith.constant 0 : index
    %243 = vector.load %arg15[%c8_83, %c0_84] : memref<32x32xbf16, #tpu.memory_space<vmem>>, vector<8x32xbf16>
    %cst_85 = arith.constant dense<0.000000e+00> : vector<8x32xf32>
    %244 = tpu.matmul %242, %243, %cst_85 {dimension_numbers = #tpu.dot_dimension_numbers<[1], [0], [0], [1], [0, 0, 1, 1], [], []>} : vector<8x8xbf16>, vector<8x32xbf16>, vector<8x32xf32> -> vector<8x32xf32>
    %245 = arith.addf %221, %244 : vector<8x32xf32>
    %246 = vector.extract_strided_slice %184 {offsets = [0, 16], sizes = [8, 8], strides = [1, 1]} : vector<8x32xf32> to vector<8x8xf32>
    %247 = arith.truncf %246 : vector<8x8xf32> to vector<8x8xbf16>
    %248 = vector.extract_strided_slice %193 {offsets = [0, 16], sizes = [16, 8], strides = [1, 1]} : vector<16x32xf32> to vector<16x8xf32>
    %249 = arith.truncf %248 : vector<16x8xf32> to vector<16x8xbf16>
    %250 = vector.extract_strided_slice %194 {offsets = [0, 16], sizes = [16, 8], strides = [1, 1]} : vector<16x32xf32> to vector<16x8xf32>
    %251 = arith.truncf %250 : vector<16x8xf32> to vector<16x8xbf16>
    %cst_86 = arith.constant dense<0.000000e+00> : vector<8x16xf32>
    %252 = tpu.matmul %247, %249, %cst_86 {dimension_numbers = #tpu.dot_dimension_numbers<[1], [1], [0], [0], [0, 0, 1, 0], [], []>} : vector<8x8xbf16>, vector<16x8xbf16>, vector<8x16xf32> -> vector<8x16xf32>
    %253 = arith.addf %252, %196 : vector<8x16xf32>
    %cst_87 = arith.constant dense<0xFF800000> : vector<8xf32>
    %254 = vector.multi_reduction <maximumf>, %253, %cst_87 [1] : vector<8x16xf32> to vector<8xf32>
    %255 = vector.shape_cast %254 : vector<8xf32> to vector<8x1xf32>
    %256 = vector.broadcast %255 : vector<8x1xf32> to vector<8x16xf32>
    %257 = arith.subf %253, %256 : vector<8x16xf32>
    %258 = math.exp %257 : vector<8x16xf32>
    %cst_88 = arith.constant dense<0.000000e+00> : vector<8xf32>
    %259 = vector.multi_reduction <add>, %258, %cst_88 [1] : vector<8x16xf32> to vector<8xf32>
    %260 = vector.shape_cast %259 : vector<8xf32> to vector<8x1xf32>
    %261 = tpu.reciprocal %260 {approx = true} : vector<8x1xf32> -> vector<8x1xf32>
    %262 = vector.broadcast %261 : vector<8x1xf32> to vector<8x16xf32>
    %263 = arith.mulf %258, %262 : vector<8x16xf32>
    %264 = arith.truncf %263 : vector<8x16xf32> to vector<8x16xbf16>
    %cst_89 = arith.constant dense<0.000000e+00> : vector<8x8xf32>
    %265 = tpu.matmul %264, %251, %cst_89 {dimension_numbers = #tpu.dot_dimension_numbers<[1], [0], [0], [1], [0, 0, 1, 1], [], []>} : vector<8x16xbf16>, vector<16x8xbf16>, vector<8x8xf32> -> vector<8x8xf32>
    %266 = arith.truncf %265 : vector<8x8xf32> to vector<8x8xbf16>
    %c16_90 = arith.constant 16 : index
    %c0_91 = arith.constant 0 : index
    %267 = vector.load %arg15[%c16_90, %c0_91] : memref<32x32xbf16, #tpu.memory_space<vmem>>, vector<8x32xbf16>
    %cst_92 = arith.constant dense<0.000000e+00> : vector<8x32xf32>
    %268 = tpu.matmul %266, %267, %cst_92 {dimension_numbers = #tpu.dot_dimension_numbers<[1], [0], [0], [1], [0, 0, 1, 1], [], []>} : vector<8x8xbf16>, vector<8x32xbf16>, vector<8x32xf32> -> vector<8x32xf32>
    %269 = arith.addf %245, %268 : vector<8x32xf32>
    %270 = vector.extract_strided_slice %184 {offsets = [0, 24], sizes = [8, 8], strides = [1, 1]} : vector<8x32xf32> to vector<8x8xf32>
    %271 = arith.truncf %270 : vector<8x8xf32> to vector<8x8xbf16>
    %272 = vector.extract_strided_slice %193 {offsets = [0, 24], sizes = [16, 8], strides = [1, 1]} : vector<16x32xf32> to vector<16x8xf32>
    %273 = arith.truncf %272 : vector<16x8xf32> to vector<16x8xbf16>
    %274 = vector.extract_strided_slice %194 {offsets = [0, 24], sizes = [16, 8], strides = [1, 1]} : vector<16x32xf32> to vector<16x8xf32>
    %275 = arith.truncf %274 : vector<16x8xf32> to vector<16x8xbf16>
    %cst_93 = arith.constant dense<0.000000e+00> : vector<8x16xf32>
    %276 = tpu.matmul %271, %273, %cst_93 {dimension_numbers = #tpu.dot_dimension_numbers<[1], [1], [0], [0], [0, 0, 1, 0], [], []>} : vector<8x8xbf16>, vector<16x8xbf16>, vector<8x16xf32> -> vector<8x16xf32>
    %277 = arith.addf %276, %196 : vector<8x16xf32>
    %cst_94 = arith.constant dense<0xFF800000> : vector<8xf32>
    %278 = vector.multi_reduction <maximumf>, %277, %cst_94 [1] : vector<8x16xf32> to vector<8xf32>
    %279 = vector.shape_cast %278 : vector<8xf32> to vector<8x1xf32>
    %280 = vector.broadcast %279 : vector<8x1xf32> to vector<8x16xf32>
    %281 = arith.subf %277, %280 : vector<8x16xf32>
    %282 = math.exp %281 : vector<8x16xf32>
    %cst_95 = arith.constant dense<0.000000e+00> : vector<8xf32>
    %283 = vector.multi_reduction <add>, %282, %cst_95 [1] : vector<8x16xf32> to vector<8xf32>
    %284 = vector.shape_cast %283 : vector<8xf32> to vector<8x1xf32>
    %285 = tpu.reciprocal %284 {approx = true} : vector<8x1xf32> -> vector<8x1xf32>
    %286 = vector.broadcast %285 : vector<8x1xf32> to vector<8x16xf32>
    %287 = arith.mulf %282, %286 : vector<8x16xf32>
    %288 = arith.truncf %287 : vector<8x16xf32> to vector<8x16xbf16>
    %cst_96 = arith.constant dense<0.000000e+00> : vector<8x8xf32>
    %289 = tpu.matmul %288, %275, %cst_96 {dimension_numbers = #tpu.dot_dimension_numbers<[1], [0], [0], [1], [0, 0, 1, 1], [], []>} : vector<8x16xbf16>, vector<16x8xbf16>, vector<8x8xf32> -> vector<8x8xf32>
    %290 = arith.truncf %289 : vector<8x8xf32> to vector<8x8xbf16>
    %c24_97 = arith.constant 24 : index
    %c0_98 = arith.constant 0 : index
    %291 = vector.load %arg15[%c24_97, %c0_98] : memref<32x32xbf16, #tpu.memory_space<vmem>>, vector<8x32xbf16>
    %cst_99 = arith.constant dense<0.000000e+00> : vector<8x32xf32>
    %292 = tpu.matmul %290, %291, %cst_99 {dimension_numbers = #tpu.dot_dimension_numbers<[1], [0], [0], [1], [0, 0, 1, 1], [], []>} : vector<8x8xbf16>, vector<8x32xbf16>, vector<8x32xf32> -> vector<8x32xf32>
    %293 = arith.addf %269, %292 : vector<8x32xf32>
    %294 = arith.addf %153, %293 : vector<8x32xf32>
    %c0_100 = arith.constant 0 : index
    %c0_101 = arith.constant 0 : index
    %295 = vector.load %arg16[%c0_100, %c0_101] : memref<1x32xf32, #tpu.memory_space<vmem>>, vector<1x32xf32>
    %296 = vector.broadcast %295 : vector<1x32xf32> to vector<8x32xf32>
    %297 = arith.addf %294, %296 : vector<8x32xf32>
    %cst_102 = arith.constant dense<0.000000e+00> : vector<8xf32>
    %298 = vector.multi_reduction <add>, %297, %cst_102 [1] : vector<8x32xf32> to vector<8xf32>
    %299 = vector.shape_cast %298 : vector<8xf32> to vector<8x1xf32>
    %cst_103 = arith.constant 3.200000e+01 : f32
    %300 = vector.broadcast %cst_103 : f32 to vector<8x1xf32>
    %301 = arith.divf %299, %300 : vector<8x1xf32>
    %302 = vector.broadcast %301 : vector<8x1xf32> to vector<8x32xf32>
    %303 = arith.subf %297, %302 : vector<8x32xf32>
    %304 = arith.mulf %303, %303 : vector<8x32xf32>
    %cst_104 = arith.constant dense<0.000000e+00> : vector<8xf32>
    %305 = vector.multi_reduction <add>, %304, %cst_104 [1] : vector<8x32xf32> to vector<8xf32>
    %306 = vector.shape_cast %305 : vector<8xf32> to vector<8x1xf32>
    %cst_105 = arith.constant 0.0322580636 : f32
    %307 = vector.broadcast %cst_105 : f32 to vector<8x1xf32>
    %308 = arith.mulf %306, %307 : vector<8x1xf32>
    %309 = math.sqrt %308 : vector<8x1xf32>
    %cst_106 = arith.constant 9.99999997E-7 : f32
    %310 = vector.broadcast %cst_106 : f32 to vector<8x1xf32>
    %311 = arith.addf %309, %310 : vector<8x1xf32>
    %312 = tpu.reciprocal %311 {approx = true} : vector<8x1xf32> -> vector<8x1xf32>
    %313 = vector.extract_strided_slice %2 {offsets = [2, 0], sizes = [1, 32], strides = [1, 1]} : vector<3x32xf32> to vector<1x32xf32>
    %314 = vector.broadcast %301 : vector<8x1xf32> to vector<8x32xf32>
    %315 = arith.subf %297, %314 : vector<8x32xf32>
    %316 = vector.broadcast %313 : vector<1x32xf32> to vector<8x32xf32>
    %317 = arith.mulf %316, %315 : vector<8x32xf32>
    %318 = vector.broadcast %312 : vector<8x1xf32> to vector<8x32xf32>
    %319 = arith.mulf %317, %318 : vector<8x32xf32>
    %320 = vector.extract_strided_slice %3 {offsets = [2, 0], sizes = [1, 32], strides = [1, 1]} : vector<3x32xf32> to vector<1x32xf32>
    %321 = vector.broadcast %320 : vector<1x32xf32> to vector<8x32xf32>
    %322 = arith.addf %319, %321 : vector<8x32xf32>
    %323 = arith.truncf %322 : vector<8x32xf32> to vector<8x32xbf16>
    %c0_107 = arith.constant 0 : index
    %c0_108 = arith.constant 0 : index
    %324 = vector.load %arg17[%c0_107, %c0_108] : memref<32x128xbf16, #tpu.memory_space<vmem>>, vector<32x128xbf16>
    %cst_109 = arith.constant dense<0.000000e+00> : vector<8x128xf32>
    %325 = tpu.matmul %323, %324, %cst_109 {dimension_numbers = #tpu.dot_dimension_numbers<[1], [0], [0], [1], [0, 0, 1, 1], [], []>} : vector<8x32xbf16>, vector<32x128xbf16>, vector<8x128xf32> -> vector<8x128xf32>
    %c0_110 = arith.constant 0 : index
    %c0_111 = arith.constant 0 : index
    %326 = vector.load %arg18[%c0_110, %c0_111] : memref<1x128xf32, #tpu.memory_space<vmem>>, vector<1x128xf32>
    %327 = vector.broadcast %326 : vector<1x128xf32> to vector<8x128xf32>
    %328 = arith.addf %325, %327 : vector<8x128xf32>
    %cst_112 = arith.constant 0.000000e+00 : f32
    %329 = vector.broadcast %cst_112 : f32 to vector<8x128xf32>
    %330 = arith.maximumf %328, %329 : vector<8x128xf32>
    %331 = arith.truncf %330 : vector<8x128xf32> to vector<8x128xbf16>
    %c0_113 = arith.constant 0 : index
    %c0_114 = arith.constant 0 : index
    %332 = vector.load %arg19[%c0_113, %c0_114] : memref<128x32xbf16, #tpu.memory_space<vmem>>, vector<128x32xbf16>
    %cst_115 = arith.constant dense<0.000000e+00> : vector<8x32xf32>
    %333 = tpu.matmul %331, %332, %cst_115 {dimension_numbers = #tpu.dot_dimension_numbers<[1], [0], [0], [1], [0, 0, 1, 1], [], []>} : vector<8x128xbf16>, vector<128x32xbf16>, vector<8x32xf32> -> vector<8x32xf32>
    %c0_116 = arith.constant 0 : index
    %c0_117 = arith.constant 0 : index
    %334 = vector.load %arg20[%c0_116, %c0_117] : memref<1x32xf32, #tpu.memory_space<vmem>>, vector<1x32xf32>
    %335 = vector.broadcast %334 : vector<1x32xf32> to vector<8x32xf32>
    %336 = arith.addf %333, %335 : vector<8x32xf32>
    %337 = arith.addf %297, %336 : vector<8x32xf32>
    %c0_118 = arith.constant 0 : index
    %c0_119 = arith.constant 0 : index
    %c0_120 = arith.constant 0 : index
    %338 = vector.load %arg23[%c0_118, %c0_119, %c0_120] : memref<1x8x32xf32, #tpu.memory_space<vmem>>, vector<1x8x32xf32>
    %339 = vector.shape_cast %338 : vector<1x8x32xf32> to vector<8x32xf32>
    %340 = vector.shape_cast %337 : vector<8x32xf32> to vector<1x8x32xf32>
    tpu.vector_store %arg23[%c0_118, %c0_119, %c0_120], %340 {strides = array<i32>} : memref<1x8x32xf32, #tpu.memory_space<vmem>>, vector<1x8x32xf32>,
    return
  }
  func.func @transform_0(%arg0: i32, %arg1: i32) -> (i32, i32, i32) {
    %c0_i32 = arith.constant 0 : i32
    %c0_i32_0 = arith.constant 0 : i32
    %c0_i32_1 = arith.constant 0 : i32
    return %arg0, %c0_i32, %c0_i32_0 : i32, i32, i32
  }
  func.func @transform_1(%arg0: i32, %arg1: i32) -> (i32, i32, i32) {
    %c0_i32 = arith.constant 0 : i32
    %c0_i32_0 = arith.constant 0 : i32
    %c0_i32_1 = arith.constant 0 : i32
    return %arg0, %c0_i32, %c0_i32_0 : i32, i32, i32
  }
  func.func @transform_2(%arg0: i32, %arg1: i32) -> (i32, i32, i32) {
    %c0_i32 = arith.constant 0 : i32
    %c0_i32_0 = arith.constant 0 : i32
    return %arg0, %arg1, %c0_i32 : i32, i32, i32
  }
  func.func @transform_3(%arg0: i32, %arg1: i32) -> (i32, i32) {
    %c0_i32 = arith.constant 0 : i32
    %c0_i32_0 = arith.constant 0 : i32
    %c0_i32_1 = arith.constant 0 : i32
    return %c0_i32, %c0_i32_0 : i32, i32
  }
  func.func @transform_4(%arg0: i32, %arg1: i32) -> (i32, i32) {
    %c0_i32 = arith.constant 0 : i32
    %c0_i32_0 = arith.constant 0 : i32
    %c0_i32_1 = arith.constant 0 : i32
    return %c0_i32, %c0_i32_0 : i32, i32
  }
  func.func @transform_5(%arg0: i32, %arg1: i32) -> (i32, i32) {
    %c0_i32 = arith.constant 0 : i32
    %c0_i32_0 = arith.constant 0 : i32
    %c0_i32_1 = arith.constant 0 : i32
    return %c0_i32, %c0_i32_0 : i32, i32
  }
  func.func @transform_6(%arg0: i32, %arg1: i32) -> (i32, i32) {
    %c0_i32 = arith.constant 0 : i32
    %c0_i32_0 = arith.constant 0 : i32
    %c0_i32_1 = arith.constant 0 : i32
    return %c0_i32, %c0_i32_0 : i32, i32
  }
  func.func @transform_7(%arg0: i32, %arg1: i32) -> (i32, i32) {
    %c0_i32 = arith.constant 0 : i32
    %c0_i32_0 = arith.constant 0 : i32
    %c0_i32_1 = arith.constant 0 : i32
    return %c0_i32, %c0_i32_0 : i32, i32
  }
  func.func @transform_8(%arg0: i32, %arg1: i32) -> (i32, i32) {
    %c0_i32 = arith.constant 0 : i32
    %c0_i32_0 = arith.constant 0 : i32
    %c0_i32_1 = arith.constant 0 : i32
    return %c0_i32, %c0_i32_0 : i32, i32
  }
  func.func @transform_9(%arg0: i32, %arg1: i32) -> (i32, i32) {
    %c0_i32 = arith.constant 0 : i32
    %c0_i32_0 = arith.constant 0 : i32
    %c0_i32_1 = arith.constant 0 : i32
    return %c0_i32, %c0_i32_0 : i32, i32
  }
  func.func @transform_10(%arg0: i32, %arg1: i32) -> (i32, i32) {
    %c0_i32 = arith.constant 0 : i32
    %c0_i32_0 = arith.constant 0 : i32
    %c0_i32_1 = arith.constant 0 : i32
    return %c0_i32, %c0_i32_0 : i32, i32
  }
  func.func @transform_11(%arg0: i32, %arg1: i32) -> (i32, i32) {
    %c0_i32 = arith.constant 0 : i32
    %c0_i32_0 = arith.constant 0 : i32
    %c0_i32_1 = arith.constant 0 : i32
    return %c0_i32, %c0_i32_0 : i32, i32
  }
  func.func @transform_12(%arg0: i32, %arg1: i32) -> (i32, i32) {
    %c0_i32 = arith.constant 0 : i32
    %c0_i32_0 = arith.constant 0 : i32
    %c0_i32_1 = arith.constant 0 : i32
    return %c0_i32, %c0_i32_0 : i32, i32
  }
  func.func @transform_13(%arg0: i32, %arg1: i32) -> (i32, i32) {
    %c0_i32 = arith.constant 0 : i32
    %c0_i32_0 = arith.constant 0 : i32
    %c0_i32_1 = arith.constant 0 : i32
    return %c0_i32, %c0_i32_0 : i32, i32
  }
  func.func @transform_14(%arg0: i32, %arg1: i32) -> (i32, i32) {
    %c0_i32 = arith.constant 0 : i32
    %c0_i32_0 = arith.constant 0 : i32
    %c0_i32_1 = arith.constant 0 : i32
    return %c0_i32, %c0_i32_0 : i32, i32
  }
  func.func @transform_15(%arg0: i32, %arg1: i32) -> (i32, i32) {
    %c0_i32 = arith.constant 0 : i32
    %c0_i32_0 = arith.constant 0 : i32
    %c0_i32_1 = arith.constant 0 : i32
    return %c0_i32, %c0_i32_0 : i32, i32
  }
  func.func @transform_16(%arg0: i32, %arg1: i32) -> (i32, i32) {
    %c0_i32 = arith.constant 0 : i32
    %c0_i32_0 = arith.constant 0 : i32
    %c0_i32_1 = arith.constant 0 : i32
    return %c0_i32, %c0_i32_0 : i32, i32
  }
  func.func @transform_17(%arg0: i32, %arg1: i32) -> (i32, i32) {
    %c0_i32 = arith.constant 0 : i32
    %c0_i32_0 = arith.constant 0 : i32
    %c0_i32_1 = arith.constant 0 : i32
    return %c0_i32, %c0_i32_0 : i32, i32
  }
  func.func @transform_18(%arg0: i32, %arg1: i32) -> (i32, i32) {
    %c0_i32 = arith.constant 0 : i32
    %c0_i32_0 = arith.constant 0 : i32
    %c0_i32_1 = arith.constant 0 : i32
    return %c0_i32, %c0_i32_0 : i32, i32
  }
  func.func @transform_19(%arg0: i32, %arg1: i32) -> (i32, i32) {
    %c0_i32 = arith.constant 0 : i32
    %c0_i32_0 = arith.constant 0 : i32
    %c0_i32_1 = arith.constant 0 : i32
    return %c0_i32, %c0_i32_0 : i32, i32
  }
  func.func @transform_20(%arg0: i32, %arg1: i32) -> (i32, i32) {
    %c0_i32 = arith.constant 0 : i32
    %c0_i32_0 = arith.constant 0 : i32
    %c0_i32_1 = arith.constant 0 : i32
    return %c0_i32, %c0_i32_0 : i32, i32
  }
  func.func @transform_21(%arg0: i32, %arg1: i32) -> (i32, i32, i32) {
    %c0_i32 = arith.constant 0 : i32
    %c0_i32_0 = arith.constant 0 : i32
    return %arg0, %arg1, %c0_i32 : i32, i32, i32
  }
}

</mosaic_0001>

<llo_original>
// kernel: tpu_custom_call.1
$region0: #{tpu_custom_call.1}
  #allocation0 [shape = 'u32[]', space=smem, size = 0x4, offset = 0x4, fixed_abs, tag = 'smem constant byte address 0x4 - core index']
  #allocation1 [shape = 'u32[72,128]{1,0:T(1,128)}', space=vmem, size = 0x9000, scoped, tag = 'internal scratch']
  %s0 = inlined_call_operand.vmem [shape: f32[2,8,32], index: 0, kind: input, shape index: {}]
  %s1 = inlined_call_operand.vmem [shape: f32[2,16,32], index: 1, kind: input, shape index: {}]
  %s2 = inlined_call_operand.vmem [shape: f32[2,8,16], index: 2, kind: input, shape index: {}]
  %s3 = inlined_call_operand.vmem [shape: bf16[32,32], index: 3, kind: input, shape index: {}]
  %s4 = inlined_call_operand.hbm [shape: f32[1,32], index: 4, kind: input, shape index: {}]
  %s5 = inlined_call_operand.hbm [shape: bf16[32,64], index: 5, kind: input, shape index: {}]
  %s6 = inlined_call_operand.hbm [shape: f32[1,64], index: 6, kind: input, shape index: {}]
  %s7 = inlined_call_operand.hbm [shape: bf16[32,32], index: 7, kind: input, shape index: {}]
  %s8 = inlined_call_operand.hbm [shape: f32[1,32], index: 8, kind: input, shape index: {}]
  %s9 = inlined_call_operand.hbm [shape: bf16[32,32], index: 9, kind: input, shape index: {}]
  %s10 = inlined_call_operand.hbm [shape: f32[1,32], index: 10, kind: input, shape index: {}]
  %s11 = inlined_call_operand.hbm [shape: bf16[32,64], index: 11, kind: input, shape index: {}]
  %s12 = inlined_call_operand.hbm [shape: f32[1,64], index: 12, kind: input, shape index: {}]
  %s13 = inlined_call_operand.hbm [shape: bf16[32,32], index: 13, kind: input, shape index: {}]
  %s14 = inlined_call_operand.hbm [shape: f32[1,32], index: 14, kind: input, shape index: {}]
  %s15 = inlined_call_operand.hbm [shape: bf16[32,128], index: 15, kind: input, shape index: {}]
  %s16 = inlined_call_operand.hbm [shape: f32[1,128], index: 16, kind: input, shape index: {}]
  %s17 = inlined_call_operand.vmem [shape: bf16[128,32], index: 17, kind: input, shape index: {}]
  %s18 = inlined_call_operand.vmem [shape: f32[1,32], index: 18, kind: input, shape index: {}]
  %s19 = inlined_call_operand.hbm [shape: f32[3,32], index: 19, kind: input, shape index: {}]
  %s20 = inlined_call_operand.hbm [shape: f32[3,32], index: 20, kind: input, shape index: {}]
  %s21 = inlined_call_operand.hbm [shape: f32[2,8,32], index: 21, kind: output, shape index: {}]
  %s22 = sld [smem:[#allocation0]]
  $region177: #{tpu_custom_call.1} parent=0
    _
  %s24 = ssub.s32 1, %s22
  %s25 = scalar_select 0, %s24, %s22
  $region1: #{tpu_custom_call.1} parent=0
    #allocation2 [shape = 'u8[512]{0}', space=vmem, size = 0x400, scoped, tag = 'input window, operand 4, single buffered']
    #allocation3 [shape = 's32[2]{0}', space=sflag, size = 0x8, scoped, tag = 'scoped memory for tpu_custom_call.1']
    #allocation4 [shape = 's32[2]{0}', space=sflag, size = 0x8, scoped, tag = 'scoped memory for tpu_custom_call.1']
    #allocation5 [shape = 'u8[8192]{0}', space=vmem, size = 0x2000, scoped, tag = 'input window, operand 5, single buffered']
    #allocation6 [shape = 's32[1]{0}', space=sflag, size = 0x4, scoped, tag = 'scoped memory for tpu_custom_call.1']
    #allocation7 [shape = 'u8[512]{0}', space=vmem, size = 0x400, scoped, tag = 'input window, operand 6, single buffered']
    #allocation8 [shape = 'u8[8192]{0}', space=vmem, size = 0x2000, scoped, tag = 'input window, operand 7, single buffered']
    #allocation9 [shape = 's32[1]{0}', space=sflag, size = 0x4, scoped, tag = 'scoped memory for tpu_custom_call.1']
    #allocation10 [shape = 'u8[512]{0}', space=vmem, size = 0x400, scoped, tag = 'input window, operand 8, single buffered']
    #allocation11 [shape = 'u8[8192]{0}', space=vmem, size = 0x2000, scoped, tag = 'input window, operand 9, single buffered']
    #allocation12 [shape = 's32[1]{0}', space=sflag, size = 0x4, scoped, tag = 'scoped memory for tpu_custom_call.1']
    #allocation13 [shape = 'u8[512]{0}', space=vmem, size = 0x400, scoped, tag = 'input window, operand 10, single buffered']
    #allocation14 [shape = 'u8[8192]{0}', space=vmem, size = 0x2000, scoped, tag = 'input window, operand 11, single buffered']
    #allocation15 [shape = 's32[1]{0}', space=sflag, size = 0x4, scoped, tag = 'scoped memory for tpu_custom_call.1']
    #allocation16 [shape = 'u8[512]{0}', space=vmem, size = 0x400, scoped, tag = 'input window, operand 12, single buffered']
    #allocation17 [shape = 'u8[8192]{0}', space=vmem, size = 0x2000, scoped, tag = 'input window, operand 13, single buffered']
    #allocation18 [shape = 's32[1]{0}', space=sflag, size = 0x4, scoped, tag = 'scoped memory for tpu_custom_call.1']
    #allocation19 [shape = 'u8[512]{0}', space=vmem, size = 0x400, scoped, tag = 'input window, operand 14, single buffered']
    #allocation20 [shape = 'u8[8192]{0}', space=vmem, size = 0x2000, scoped, tag = 'input window, operand 15, single buffered']
    #allocation21 [shape = 's32[1]{0}', space=sflag, size = 0x4, scoped, tag = 'scoped memory for tpu_custom_call.1']
    #allocation22 [shape = 'u8[512]{0}', space=vmem, size = 0x400, scoped, tag = 'input window, operand 16, single buffered']
    #allocation23 [shape = 'u8[2048]{0}', space=vmem, size = 0x800, scoped, tag = 'input window, operand 19, single buffered']
    #allocation24 [shape = 's32[1]{0}', space=sflag, size = 0x4, scoped, tag = 'scoped memory for tpu_custom_call.1']
    #allocation25 [shape = 'u8[2048]{0}', space=vmem, size = 0x800, scoped, tag = 'input window, operand 20, single buffered']
    #allocation26 [shape = 'u8[8192]{0}', space=vmem, size = 0x2000, scoped, tag = 'output window, operand 0']
    %26 = vsyncpa [#allocation3], 0
    %27 = vsyncpa [#allocation6], 0
    %28 = vsyncpa [#allocation9], 0
    %29 = vsyncpa [#allocation12], 0
    %30 = vsyncpa [#allocation15], 0
    %31 = vsyncpa [#allocation18], 0
    %32 = vsyncpa [#allocation21], 0
    %33 = vsyncpa [#allocation24], 0
    %34 = vsyncpa [#allocation4], 0
    %s35 = scalar_lea.sflag [#allocation4], 1
    %36 = vsyncpa %s35, 0
    loop: start=0, step=1, limit=4
    $region2: #{tpu_custom_call.1} parent=1 // loop_pre_header
      _
    $region3: #{tpu_custom_call.1} parent=1 // loop_header
      %s38 = sphi 0, %s42
      %p39 = scmp.ge.s32.totalorder %s38, 4
      %s45 = sphi 0, %s57
      %s46 = sphi 0, %s53
      %s47 = sphi 0, %s45
      %s48 = sphi 0, %s46
      %s49 = sphi 0, %s47
      %s50 = sphi 0, %s48
      %s60 = sphi 0, %s62
      %s63 = sphi 0, %s60
      %s64 = sphi 0, %s63
      %s80 = sphi 0, %s64
      %s86 = sphi 0, %s88
      %s89 = sphi 0, %s86
      %s90 = sphi 0, %s89
      %s106 = sphi 0, %s90
      %s114 = sphi 0, %s116
      %s117 = sphi 0, %s114
      %s118 = sphi 0, %s117
      %s134 = sphi 0, %s118
      %s138 = sphi 0, %s138
      %s140 = sphi 0, %s138
      %s141 = sphi 0, %s140
      %s155 = sphi 0, %s141
      %s159 = sphi 0, %s159
      %s161 = sphi 0, %s159
      %s162 = sphi 0, %s161
      %s176 = sphi 0, %s162
      %s180 = sphi 0, %s180
      %s182 = sphi 0, %s180
      %s183 = sphi 0, %s182
      %s197 = sphi 0, %s183
      %s201 = sphi 0, %s201
      %s203 = sphi 0, %s201
      %s204 = sphi 0, %s203
      %s218 = sphi 0, %s204
      %s222 = sphi 0, %s222
      %s224 = sphi 0, %s222
      %s225 = sphi 0, %s224
      %s239 = sphi 0, %s225
      %s243 = sphi 0, %s243
      %s245 = sphi 0, %s243
      %s246 = sphi 0, %s245
      %s260 = sphi 0, %s246
      %s264 = sphi 0, %s264
      %s266 = sphi 0, %s264
      %s267 = sphi 0, %s266
      %s281 = sphi 0, %s267
      %s285 = sphi 0, %s285
      %s287 = sphi 0, %s285
      %s288 = sphi 0, %s287
      %s302 = sphi 0, %s288
      %s306 = sphi 0, %s306
      %s308 = sphi 0, %s306
      %s309 = sphi 0, %s308
      %s323 = sphi 0, %s309
      %s327 = sphi 0, %s327
      %s329 = sphi 0, %s327
      %s330 = sphi 0, %s329
      %s344 = sphi 0, %s330
      %s348 = sphi 0, %s348
      %s350 = sphi 0, %s348
      %s351 = sphi 0, %s350
      %s365 = sphi 0, %s351
      %s369 = sphi 0, %s369
      %s371 = sphi 0, %s369
      %s372 = sphi 0, %s371
      %s386 = sphi 0, %s372
      %s390 = sphi 0, %s390
      %s392 = sphi 0, %s390
      %s393 = sphi 0, %s392
      %s407 = sphi 0, %s393
      %s411 = sphi 0, %s411
      %s413 = sphi 0, %s411
      %s414 = sphi 0, %s413
      %s428 = sphi 0, %s414
      %s432 = sphi 0, %s432
      %s434 = sphi 0, %s432
      %s435 = sphi 0, %s434
      %s449 = sphi 0, %s435
      %s453 = sphi 0, %s453
      %s455 = sphi 0, %s453
      %s456 = sphi 0, %s455
      %s470 = sphi 0, %s456
      %s474 = sphi 0, %s474
      %s476 = sphi 0, %s474
      %s477 = sphi 0, %s476
      %s491 = sphi 0, %s477
      %s495 = sphi 0, %s495
      %s497 = sphi 0, %s495
      %s498 = sphi 0, %s497
      %s512 = sphi 0, %s498
      %s520 = sphi 0, %s522
      %s523 = sphi 0, %s520
      %s524 = sphi 0, %s523
      %s540 = sphi 0, %s524
    $region4: #{tpu_custom_call.1} parent=1 // loop_header_branch
      %41 = sbr.rel (%p39) target = $region8
    $region5: #{tpu_custom_call.1} parent=1 // loop_body
      %s43 = ssub.s32 %s38, 1
      %s44 = ssub.s32 %s38, 2
      %s51 = sadd.s32 1, %s46
      %p52 = scmp.ge.s32.totalorder %s51, 1
      %s53 = scalar_select %p52, 0, %s51
      %s54 = sadd.s32 1, %s45
      %s55 = scalar_select %p52, %s54, %s45
      %p56 = scmp.ge.s32.totalorder %s55, 2
      %s57 = scalar_select %p56, 0, %s55
      %s58 = ssub.s32 %s45, %s57
      %p59 = scmp.eq.s32.totalorder %s58, 0
      %s61 = sadd.s32 %s60, 1
      %s62 = scalar_select %p59, %s60, %s61
      %p65 = pneg %p59
      %p66 = scmp.eq.s32.totalorder %s38, 1
      %p67 = por %p65, %p66
      %p68 = scmp.ne.s32.totalorder %s60, %s63
      %p69 = scmp.eq.s32.totalorder %s38, 0
      %p70 = por %p68, %p69
      %p71 = scmp.ne.s32.totalorder %s60, %s63
      %p72 = scmp.eq.s32.totalorder %s43, 1
      %p73 = por %p71, %p72
      %p74 = scmp.ne.s32.totalorder %s63, %s64
      %p75 = scmp.eq.s32.totalorder %s43, 0
      %p76 = por %p74, %p75
      %p77 = scmp.ne.s32.totalorder %s63, %s64
      %p78 = scmp.eq.s32.totalorder %s44, 1
      %p79 = por %p77, %p78
      %p81 = scmp.ne.s32.totalorder %s64, %s80
      %p82 = scmp.eq.s32.totalorder %s44, 0
      %p83 = por %p81, %p82
      %s84 = ssub.s32 %s45, %s57
      %p85 = scmp.eq.s32.totalorder %s84, 0
      %s87 = sadd.s32 %s86, 1
      %s88 = scalar_select %p85, %s86, %s87
      %p91 = pneg %p85
      %p92 = scmp.eq.s32.totalorder %s38, 1
      %p93 = por %p91, %p92
      %p94 = scmp.ne.s32.totalorder %s86, %s89
      %p95 = scmp.eq.s32.totalorder %s38, 0
      %p96 = por %p94, %p95
      %p97 = scmp.ne.s32.totalorder %s86, %s89
      %p98 = scmp.eq.s32.totalorder %s43, 1
      %p99 = por %p97, %p98
      %p100 = scmp.ne.s32.totalorder %s89, %s90
      %p101 = scmp.eq.s32.totalorder %s43, 0
      %p102 = por %p100, %p101
      %p103 = scmp.ne.s32.totalorder %s89, %s90
      %p104 = scmp.eq.s32.totalorder %s44, 1
      %p105 = por %p103, %p104
      %p107 = scmp.ne.s32.totalorder %s90, %s106
      %p108 = scmp.eq.s32.totalorder %s44, 0
      %p109 = por %p107, %p108
      %s110 = ssub.s32 %s45, %s57
      %s111 = ssub.s32 %s46, %s53
      %s112 = sor.u32 %s110, %s111
      %p113 = scmp.eq.s32.totalorder %s112, 0
      %s115 = sadd.s32 %s114, 1
      %s116 = scalar_select %p113, %s114, %s115
      %p119 = pneg %p113
      %p120 = scmp.eq.s32.totalorder %s38, 1
      %p121 = por %p119, %p120
      %p122 = scmp.ne.s32.totalorder %s114, %s117
      %p123 = scmp.eq.s32.totalorder %s38, 0
      %p124 = por %p122, %p123
      %p125 = scmp.ne.s32.totalorder %s114, %s117
      %p126 = scmp.eq.s32.totalorder %s43, 1
      %p127 = por %p125, %p126
      %p128 = scmp.ne.s32.totalorder %s117, %s118
      %p129 = scmp.eq.s32.totalorder %s43, 0
      %p130 = por %p128, %p129
      %p131 = scmp.ne.s32.totalorder %s117, %s118
      %p132 = scmp.eq.s32.totalorder %s44, 1
      %p133 = por %p131, %p132
      %p135 = scmp.ne.s32.totalorder %s118, %s134
      %p136 = scmp.eq.s32.totalorder %s44, 0
      %p137 = por %p135, %p136
      %s139 = sadd.s32 %s138, 1
      %p142 = scmp.eq.s32.totalorder %s38, 1
      %p143 = scmp.ne.s32.totalorder %s138, %s140
      %p144 = scmp.eq.s32.totalorder %s38, 0
      %p145 = por %p143, %p144
      %p146 = scmp.ne.s32.totalorder %s138, %s140
      %p147 = scmp.eq.s32.totalorder %s43, 1
      %p148 = por %p146, %p147
      %p149 = scmp.ne.s32.totalorder %s140, %s141
      %p150 = scmp.eq.s32.totalorder %s43, 0
      %p151 = por %p149, %p150
      %p152 = scmp.ne.s32.totalorder %s140, %s141
      %p153 = scmp.eq.s32.totalorder %s44, 1
      %p154 = por %p152, %p153
      %p156 = scmp.ne.s32.totalorder %s141, %s155
      %p157 = scmp.eq.s32.totalorder %s44, 0
      %p158 = por %p156, %p157
      %s160 = sadd.s32 %s159, 1
      %p163 = scmp.eq.s32.totalorder %s38, 1
      %p164 = scmp.ne.s32.totalorder %s159, %s161
      %p165 = scmp.eq.s32.totalorder %s38, 0
      %p166 = por %p164, %p165
      %p167 = scmp.ne.s32.totalorder %s159, %s161
      %p168 = scmp.eq.s32.totalorder %s43, 1
      %p169 = por %p167, %p168
      %p170 = scmp.ne.s32.totalorder %s161, %s162
      %p171 = scmp.eq.s32.totalorder %s43, 0
      %p172 = por %p170, %p171
      %p173 = scmp.ne.s32.totalorder %s161, %s162
      %p174 = scmp.eq.s32.totalorder %s44, 1
      %p175 = por %p173, %p174
      %p177 = scmp.ne.s32.totalorder %s162, %s176
      %p178 = scmp.eq.s32.totalorder %s44, 0
      %p179 = por %p177, %p178
      %s181 = sadd.s32 %s180, 1
      %p184 = scmp.eq.s32.totalorder %s38, 1
      %p185 = scmp.ne.s32.totalorder %s180, %s182
      %p186 = scmp.eq.s32.totalorder %s38, 0
      %p187 = por %p185, %p186
      %p188 = scmp.ne.s32.totalorder %s180, %s182
      %p189 = scmp.eq.s32.totalorder %s43, 1
      %p190 = por %p188, %p189
      %p191 = scmp.ne.s32.totalorder %s182, %s183
      %p192 = scmp.eq.s32.totalorder %s43, 0
      %p193 = por %p191, %p192
      %p194 = scmp.ne.s32.totalorder %s182, %s183
      %p195 = scmp.eq.s32.totalorder %s44, 1
      %p196 = por %p194, %p195
      %p198 = scmp.ne.s32.totalorder %s183, %s197
      %p199 = scmp.eq.s32.totalorder %s44, 0
      %p200 = por %p198, %p199
      %s202 = sadd.s32 %s201, 1
      %p205 = scmp.eq.s32.totalorder %s38, 1
      %p206 = scmp.ne.s32.totalorder %s201, %s203
      %p207 = scmp.eq.s32.totalorder %s38, 0
      %p208 = por %p206, %p207
      %p209 = scmp.ne.s32.totalorder %s201, %s203
      %p210 = scmp.eq.s32.totalorder %s43, 1
      %p211 = por %p209, %p210
      %p212 = scmp.ne.s32.totalorder %s203, %s204
      %p213 = scmp.eq.s32.totalorder %s43, 0
      %p214 = por %p212, %p213
      %p215 = scmp.ne.s32.totalorder %s203, %s204
      %p216 = scmp.eq.s32.totalorder %s44, 1
      %p217 = por %p215, %p216
      %p219 = scmp.ne.s32.totalorder %s204, %s218
      %p220 = scmp.eq.s32.totalorder %s44, 0
      %p221 = por %p219, %p220
      %s223 = sadd.s32 %s222, 1
      %p226 = scmp.eq.s32.totalorder %s38, 1
      %p227 = scmp.ne.s32.totalorder %s222, %s224
      %p228 = scmp.eq.s32.totalorder %s38, 0
      %p229 = por %p227, %p228
      %p230 = scmp.ne.s32.totalorder %s222, %s224
      %p231 = scmp.eq.s32.totalorder %s43, 1
      %p232 = por %p230, %p231
      %p233 = scmp.ne.s32.totalorder %s224, %s225
      %p234 = scmp.eq.s32.totalorder %s43, 0
      %p235 = por %p233, %p234
      %p236 = scmp.ne.s32.totalorder %s224, %s225
      %p237 = scmp.eq.s32.totalorder %s44, 1
      %p238 = por %p236, %p237
      %p240 = scmp.ne.s32.totalorder %s225, %s239
      %p241 = scmp.eq.s32.totalorder %s44, 0
      %p242 = por %p240, %p241
      %s244 = sadd.s32 %s243, 1
      %p247 = scmp.eq.s32.totalorder %s38, 1
      %p248 = scmp.ne.s32.totalorder %s243, %s245
      %p249 = scmp.eq.s32.totalorder %s38, 0
      %p250 = por %p248, %p249
      %p251 = scmp.ne.s32.totalorder %s243, %s245
      %p252 = scmp.eq.s32.totalorder %s43, 1
      %p253 = por %p251, %p252
      %p254 = scmp.ne.s32.totalorder %s245, %s246
      %p255 = scmp.eq.s32.totalorder %s43, 0
      %p256 = por %p254, %p255
      %p257 = scmp.ne.s32.totalorder %s245, %s246
      %p258 = scmp.eq.s32.totalorder %s44, 1
      %p259 = por %p257, %p258
      %p261 = scmp.ne.s32.totalorder %s246, %s260
      %p262 = scmp.eq.s32.totalorder %s44, 0
      %p263 = por %p261, %p262
      %s265 = sadd.s32 %s264, 1
      %p268 = scmp.eq.s32.totalorder %s38, 1
      %p269 = scmp.ne.s32.totalorder %s264, %s266
      %p270 = scmp.eq.s32.totalorder %s38, 0
      %p271 = por %p269, %p270
      %p272 = scmp.ne.s32.totalorder %s264, %s266
      %p273 = scmp.eq.s32.totalorder %s43, 1
      %p274 = por %p272, %p273
      %p275 = scmp.ne.s32.totalorder %s266, %s267
      %p276 = scmp.eq.s32.totalorder %s43, 0
      %p277 = por %p275, %p276
      %p278 = scmp.ne.s32.totalorder %s266, %s267
      %p279 = scmp.eq.s32.totalorder %s44, 1
      %p280 = por %p278, %p279
      %p282 = scmp.ne.s32.totalorder %s267, %s281
      %p283 = scmp.eq.s32.totalorder %s44, 0
      %p284 = por %p282, %p283
      %s286 = sadd.s32 %s285, 1
      %p289 = scmp.eq.s32.totalorder %s38, 1
      %p290 = scmp.ne.s32.totalorder %s285, %s287
      %p291 = scmp.eq.s32.totalorder %s38, 0
      %p292 = por %p290, %p291
      %p293 = scmp.ne.s32.totalorder %s285, %s287
      %p294 = scmp.eq.s32.totalorder %s43, 1
      %p295 = por %p293, %p294
      %p296 = scmp.ne.s32.totalorder %s287, %s288
      %p297 = scmp.eq.s32.totalorder %s43, 0
      %p298 = por %p296, %p297
      %p299 = scmp.ne.s32.totalorder %s287, %s288
      %p300 = scmp.eq.s32.totalorder %s44, 1
      %p301 = por %p299, %p300
      %p303 = scmp.ne.s32.totalorder %s288, %s302
      %p304 = scmp.eq.s32.totalorder %s44, 0
      %p305 = por %p303, %p304
      %s307 = sadd.s32 %s306, 1
      %p310 = scmp.eq.s32.totalorder %s38, 1
      %p311 = scmp.ne.s32.totalorder %s306, %s308
      %p312 = scmp.eq.s32.totalorder %s38, 0
      %p313 = por %p311, %p312
      %p314 = scmp.ne.s32.totalorder %s306, %s308
      %p315 = scmp.eq.s32.totalorder %s43, 1
      %p316 = por %p314, %p315
      %p317 = scmp.ne.s32.totalorder %s308, %s309
      %p318 = scmp.eq.s32.totalorder %s43, 0
      %p319 = por %p317, %p318
      %p320 = scmp.ne.s32.totalorder %s308, %s309
      %p321 = scmp.eq.s32.totalorder %s44, 1
      %p322 = por %p320, %p321
      %p324 = scmp.ne.s32.totalorder %s309, %s323
      %p325 = scmp.eq.s32.totalorder %s44, 0
      %p326 = por %p324, %p325
      %s328 = sadd.s32 %s327, 1
      %p331 = scmp.eq.s32.totalorder %s38, 1
      %p332 = scmp.ne.s32.totalorder %s327, %s329
      %p333 = scmp.eq.s32.totalorder %s38, 0
      %p334 = por %p332, %p333
      %p335 = scmp.ne.s32.totalorder %s327, %s329
      %p336 = scmp.eq.s32.totalorder %s43, 1
      %p337 = por %p335, %p336
      %p338 = scmp.ne.s32.totalorder %s329, %s330
      %p339 = scmp.eq.s32.totalorder %s43, 0
      %p340 = por %p338, %p339
      %p341 = scmp.ne.s32.totalorder %s329, %s330
      %p342 = scmp.eq.s32.totalorder %s44, 1
      %p343 = por %p341, %p342
      %p345 = scmp.ne.s32.totalorder %s330, %s344
      %p346 = scmp.eq.s32.totalorder %s44, 0
      %p347 = por %p345, %p346
      %s349 = sadd.s32 %s348, 1
      %p352 = scmp.eq.s32.totalorder %s38, 1
      %p353 = scmp.ne.s32.totalorder %s348, %s350
      %p354 = scmp.eq.s32.totalorder %s38, 0
      %p355 = por %p353, %p354
      %p356 = scmp.ne.s32.totalorder %s348, %s350
      %p357 = scmp.eq.s32.totalorder %s43, 1
      %p358 = por %p356, %p357
      %p359 = scmp.ne.s32.totalorder %s350, %s351
      %p360 = scmp.eq.s32.totalorder %s43, 0
      %p361 = por %p359, %p360
      %p362 = scmp.ne.s32.totalorder %s350, %s351
      %p363 = scmp.eq.s32.totalorder %s44, 1
      %p364 = por %p362, %p363
      %p366 = scmp.ne.s32.totalorder %s351, %s365
      %p367 = scmp.eq.s32.totalorder %s44, 0
      %p368 = por %p366, %p367
      %s370 = sadd.s32 %s369, 1
      %p373 = scmp.eq.s32.totalorder %s38, 1
      %p374 = scmp.ne.s32.totalorder %s369, %s371
      %p375 = scmp.eq.s32.totalorder %s38, 0
      %p376 = por %p374, %p375
      %p377 = scmp.ne.s32.totalorder %s369, %s371
      %p378 = scmp.eq.s32.totalorder %s43, 1
      %p379 = por %p377, %p378
      %p380 = scmp.ne.s32.totalorder %s371, %s372
      %p381 = scmp.eq.s32.totalorder %s43, 0
      %p382 = por %p380, %p381
      %p383 = scmp.ne.s32.totalorder %s371, %s372
      %p384 = scmp.eq.s32.totalorder %s44, 1
      %p385 = por %p383, %p384
      %p387 = scmp.ne.s32.totalorder %s372, %s386
      %p388 = scmp.eq.s32.totalorder %s44, 0
      %p389 = por %p387, %p388
      %s391 = sadd.s32 %s390, 1
      %p394 = scmp.eq.s32.totalorder %s38, 1
      %p395 = scmp.ne.s32.totalorder %s390, %s392
      %p396 = scmp.eq.s32.totalorder %s38, 0
      %p397 = por %p395, %p396
      %p398 = scmp.ne.s32.totalorder %s390, %s392
      %p399 = scmp.eq.s32.totalorder %s43, 1
      %p400 = por %p398, %p399
      %p401 = scmp.ne.s32.totalorder %s392, %s393
      %p402 = scmp.eq.s32.totalorder %s43, 0
      %p403 = por %p401, %p402
      %p404 = scmp.ne.s32.totalorder %s392, %s393
      %p405 = scmp.eq.s32.totalorder %s44, 1
      %p406 = por %p404, %p405
      %p408 = scmp.ne.s32.totalorder %s393, %s407
      %p409 = scmp.eq.s32.totalorder %s44, 0
      %p410 = por %p408, %p409
      %s412 = sadd.s32 %s411, 1
      %p415 = scmp.eq.s32.totalorder %s38, 1
      %p416 = scmp.ne.s32.totalorder %s411, %s413
      %p417 = scmp.eq.s32.totalorder %s38, 0
      %p418 = por %p416, %p417
      %p419 = scmp.ne.s32.totalorder %s411, %s413
      %p420 = scmp.eq.s32.totalorder %s43, 1
      %p421 = por %p419, %p420
      %p422 = scmp.ne.s32.totalorder %s413, %s414
      %p423 = scmp.eq.s32.totalorder %s43, 0
      %p424 = por %p422, %p423
      %p425 = scmp.ne.s32.totalorder %s413, %s414
      %p426 = scmp.eq.s32.totalorder %s44, 1
      %p427 = por %p425, %p426
      %p429 = scmp.ne.s32.totalorder %s414, %s428
      %p430 = scmp.eq.s32.totalorder %s44, 0
      %p431 = por %p429, %p430
      %s433 = sadd.s32 %s432, 1
      %p436 = scmp.eq.s32.totalorder %s38, 1
      %p437 = scmp.ne.s32.totalorder %s432, %s434
      %p438 = scmp.eq.s32.totalorder %s38, 0
      %p439 = por %p437, %p438
      %p440 = scmp.ne.s32.totalorder %s432, %s434
      %p441 = scmp.eq.s32.totalorder %s43, 1
      %p442 = por %p440, %p441
      %p443 = scmp.ne.s32.totalorder %s434, %s435
      %p444 = scmp.eq.s32.totalorder %s43, 0
      %p445 = por %p443, %p444
      %p446 = scmp.ne.s32.totalorder %s434, %s435
      %p447 = scmp.eq.s32.totalorder %s44, 1
      %p448 = por %p446, %p447
      %p450 = scmp.ne.s32.totalorder %s435, %s449
      %p451 = scmp.eq.s32.totalorder %s44, 0
      %p452 = por %p450, %p451
      %s454 = sadd.s32 %s453, 1
      %p457 = scmp.eq.s32.totalorder %s38, 1
      %p458 = scmp.ne.s32.totalorder %s453, %s455
      %p459 = scmp.eq.s32.totalorder %s38, 0
      %p460 = por %p458, %p459
      %p461 = scmp.ne.s32.totalorder %s453, %s455
      %p462 = scmp.eq.s32.totalorder %s43, 1
      %p463 = por %p461, %p462
      %p464 = scmp.ne.s32.totalorder %s455, %s456
      %p465 = scmp.eq.s32.totalorder %s43, 0
      %p466 = por %p464, %p465
      %p467 = scmp.ne.s32.totalorder %s455, %s456
      %p468 = scmp.eq.s32.totalorder %s44, 1
      %p469 = por %p467, %p468
      %p471 = scmp.ne.s32.totalorder %s456, %s470
      %p472 = scmp.eq.s32.totalorder %s44, 0
      %p473 = por %p471, %p472
      %s475 = sadd.s32 %s474, 1
      %p478 = scmp.eq.s32.totalorder %s38, 1
      %p479 = scmp.ne.s32.totalorder %s474, %s476
      %p480 = scmp.eq.s32.totalorder %s38, 0
      %p481 = por %p479, %p480
      %p482 = scmp.ne.s32.totalorder %s474, %s476
      %p483 = scmp.eq.s32.totalorder %s43, 1
      %p484 = por %p482, %p483
      %p485 = scmp.ne.s32.totalorder %s476, %s477
      %p486 = scmp.eq.s32.totalorder %s43, 0
      %p487 = por %p485, %p486
      %p488 = scmp.ne.s32.totalorder %s476, %s477
      %p489 = scmp.eq.s32.totalorder %s44, 1
      %p490 = por %p488, %p489
      %p492 = scmp.ne.s32.totalorder %s477, %s491
      %p493 = scmp.eq.s32.totalorder %s44, 0
      %p494 = por %p492, %p493
      %s496 = sadd.s32 %s495, 1
      %p499 = scmp.eq.s32.totalorder %s38, 1
      %p500 = scmp.ne.s32.totalorder %s495, %s497
      %p501 = scmp.eq.s32.totalorder %s38, 0
      %p502 = por %p500, %p501
      %p503 = scmp.ne.s32.totalorder %s495, %s497
      %p504 = scmp.eq.s32.totalorder %s43, 1
      %p505 = por %p503, %p504
      %p506 = scmp.ne.s32.totalorder %s497, %s498
      %p507 = scmp.eq.s32.totalorder %s43, 0
      %p508 = por %p506, %p507
      %p509 = scmp.ne.s32.totalorder %s497, %s498
      %p510 = scmp.eq.s32.totalorder %s44, 1
      %p511 = por %p509, %p510
      %p513 = scmp.ne.s32.totalorder %s498, %s512
      %p514 = scmp.eq.s32.totalorder %s44, 0
      %p515 = por %p513, %p514
      %s516 = ssub.s32 %s45, %s57
      %s517 = ssub.s32 %s46, %s53
      %s518 = sor.u32 %s516, %s517
      %p519 = scmp.eq.s32.totalorder %s518, 0
      %s521 = sadd.s32 %s520, 1
      %s522 = scalar_select %p519, %s520, %s521
      %p525 = pneg %p519
      %p526 = scmp.eq.s32.totalorder %s38, 1
      %p527 = por %p525, %p526
      %p528 = scmp.ne.s32.totalorder %s520, %s523
      %p529 = scmp.eq.s32.totalorder %s38, 0
      %p530 = por %p528, %p529
      %p531 = scmp.ne.s32.totalorder %s520, %s523
      %p532 = scmp.eq.s32.totalorder %s43, 1
      %p533 = por %p531, %p532
      %p534 = scmp.ne.s32.totalorder %s523, %s524
      %p535 = scmp.eq.s32.totalorder %s43, 0
      %p536 = por %p534, %p535
      %p537 = scmp.ne.s32.totalorder %s523, %s524
      %p538 = scmp.eq.s32.totalorder %s44, 1
      %p539 = por %p537, %p538
      %p541 = scmp.ne.s32.totalorder %s524, %s540
      %p542 = scmp.eq.s32.totalorder %s44, 0
      %p543 = por %p541, %p542
      %p544 = scmp.le.s32.totalorder 1, %s38
      %p545 = scmp.lt.s32.totalorder %s38, 3
      %p546 = pnand %p544, %p545
      %p547 = pneg %p546
      // Predicated region
      $region9: #{tpu_custom_call.1} parent=5 // pred_check
        _
      $region10: #{tpu_custom_call.1} parent=5 // pred_check_branch
        %549 = sbr.rel (%p546) target = $region12
      $region11: #{tpu_custom_call.1} parent=5 // pred_region
        %s550 = ssub.s32 %s38, 1
        // Predicated region
        $region13: #{tpu_custom_call.1} parent=11 // pred_check
          %p551 = pneg %p151
        $region14: #{tpu_custom_call.1} parent=11 // pred_check_branch
          %553 = sbr.rel (%p551) target = $region16
        $region15: #{tpu_custom_call.1} parent=11 // pred_region
          _
        $region16: #{tpu_custom_call.1} parent=11 // pred_fallthru
          _
        // Predicated region
        $region17: #{tpu_custom_call.1} parent=11 // pred_check
          %p554 = pneg %p172
        $region18: #{tpu_custom_call.1} parent=11 // pred_check_branch
          %556 = sbr.rel (%p554) target = $region20
        $region19: #{tpu_custom_call.1} parent=11 // pred_region
          %558 = vsyncadd [#allocation3], 0
          %s560 = sshll.u32 %s4, 4
          %s561 = int_to_ptr.hbm [resolvable:$true] %s560
          %s562 = sshll.u32 [#allocation2], 4
          %s563 = int_to_ptr.vmem [resolvable:$true] %s562
          %565 = dma.hbm_to_vmem [thread:$0]  %s561, 16, %s563, [#allocation3]
        $region20: #{tpu_custom_call.1} parent=11 // pred_fallthru
          _
        // Predicated region
        $region21: #{tpu_custom_call.1} parent=11 // pred_check
          %p566 = pneg %p193
        $region22: #{tpu_custom_call.1} parent=11 // pred_check_branch
          %568 = sbr.rel (%p566) target = $region24
        $region23: #{tpu_custom_call.1} parent=11 // pred_region
          %570 = vsyncadd [#allocation6], 0
          %s571 = sshll.u32 %s5, 4
          %s572 = int_to_ptr.hbm [resolvable:$true] %s571
          %s573 = sshll.u32 [#allocation5], 4
          %s574 = int_to_ptr.vmem [resolvable:$true] %s573
          %579 = dma.hbm_to_vmem [thread:$0]  %s572, 256, %s574, [#allocation6], 64, 64, 4
        $region24: #{tpu_custom_call.1} parent=11 // pred_fallthru
          _
        // Predicated region
        $region25: #{tpu_custom_call.1} parent=11 // pred_check
          %p580 = pneg %p214
        $region26: #{tpu_custom_call.1} parent=11 // pred_check_branch
          %582 = sbr.rel (%p580) target = $region28
        $region27: #{tpu_custom_call.1} parent=11 // pred_region
          %584 = vsyncadd [#allocation6], 0
          %s586 = sshll.u32 %s6, 4
          %s587 = int_to_ptr.hbm [resolvable:$true] %s586
          %s588 = sshll.u32 [#allocation7], 4
          %s589 = int_to_ptr.vmem [resolvable:$true] %s588
          %591 = dma.hbm_to_vmem [thread:$0]  %s587, 16, %s589, [#allocation6]
        $region28: #{tpu_custom_call.1} parent=11 // pred_fallthru
          _
        // Predicated region
        $region29: #{tpu_custom_call.1} parent=11 // pred_check
          %p592 = pneg %p235
        $region30: #{tpu_custom_call.1} parent=11 // pred_check_branch
          %594 = sbr.rel (%p592) target = $region32
        $region31: #{tpu_custom_call.1} parent=11 // pred_region
          %596 = vsyncadd [#allocation9], 0
          %s597 = sshll.u32 %s7, 4
          %s598 = int_to_ptr.hbm [resolvable:$true] %s597
          %s599 = sshll.u32 [#allocation8], 4
          %s600 = int_to_ptr.vmem [resolvable:$true] %s599
          %605 = dma.hbm_to_vmem [thread:$0]  %s598, 256, %s600, [#allocation9], 64, 64, 4
        $region32: #{tpu_custom_call.1} parent=11 // pred_fallthru
          _
        // Predicated region
        $region33: #{tpu_custom_call.1} parent=11 // pred_check
          %p606 = pneg %p256
        $region34: #{tpu_custom_call.1} parent=11 // pred_check_branch
          %608 = sbr.rel (%p606) target = $region36
        $region35: #{tpu_custom_call.1} parent=11 // pred_region
          %610 = vsyncadd [#allocation9], 0
          %s612 = sshll.u32 %s8, 4
          %s613 = int_to_ptr.hbm [resolvable:$true] %s612
          %s614 = sshll.u32 [#allocation10], 4
          %s615 = int_to_ptr.vmem [resolvable:$true] %s614
          %617 = dma.hbm_to_vmem [thread:$0]  %s613, 16, %s615, [#allocation9]
        $region36: #{tpu_custom_call.1} parent=11 // pred_fallthru
          _
        // Predicated region
        $region37: #{tpu_custom_call.1} parent=11 // pred_check
          %p618 = pneg %p277
        $region38: #{tpu_custom_call.1} parent=11 // pred_check_branch
          %620 = sbr.rel (%p618) target = $region40
        $region39: #{tpu_custom_call.1} parent=11 // pred_region
          %622 = vsyncadd [#allocation12], 0
          %s623 = sshll.u32 %s9, 4
          %s624 = int_to_ptr.hbm [resolvable:$true] %s623
          %s625 = sshll.u32 [#allocation11], 4
          %s626 = int_to_ptr.vmem [resolvable:$true] %s625
          %631 = dma.hbm_to_vmem [thread:$0]  %s624, 256, %s626, [#allocation12], 64, 64, 4
        $region40: #{tpu_custom_call.1} parent=11 // pred_fallthru
          _
        // Predicated region
        $region41: #{tpu_custom_call.1} parent=11 // pred_check
          %p632 = pneg %p298
        $region42: #{tpu_custom_call.1} parent=11 // pred_check_branch
          %634 = sbr.rel (%p632) target = $region44
        $region43: #{tpu_custom_call.1} parent=11 // pred_region
          %636 = vsyncadd [#allocation12], 0
          %s638 = sshll.u32 %s10, 4
          %s639 = int_to_ptr.hbm [resolvable:$true] %s638
          %s640 = sshll.u32 [#allocation13], 4
          %s641 = int_to_ptr.vmem [resolvable:$true] %s640
          %643 = dma.hbm_to_vmem [thread:$0]  %s639, 16, %s641, [#allocation12]
        $region44: #{tpu_custom_call.1} parent=11 // pred_fallthru
          _
        // Predicated region
        $region45: #{tpu_custom_call.1} parent=11 // pred_check
          %p644 = pneg %p319
        $region46: #{tpu_custom_call.1} parent=11 // pred_check_branch
          %646 = sbr.rel (%p644) target = $region48
        $region47: #{tpu_custom_call.1} parent=11 // pred_region
          %648 = vsyncadd [#allocation15], 0
          %s649 = sshll.u32 %s11, 4
          %s650 = int_to_ptr.hbm [resolvable:$true] %s649
          %s651 = sshll.u32 [#allocation14], 4
          %s652 = int_to_ptr.vmem [resolvable:$true] %s651
          %657 = dma.hbm_to_vmem [thread:$0]  %s650, 256, %s652, [#allocation15], 64, 64, 4
        $region48: #{tpu_custom_call.1} parent=11 // pred_fallthru
          _
        // Predicated region
        $region49: #{tpu_custom_call.1} parent=11 // pred_check
          %p658 = pneg %p340
        $region50: #{tpu_custom_call.1} parent=11 // pred_check_branch
          %660 = sbr.rel (%p658) target = $region52
        $region51: #{tpu_custom_call.1} parent=11 // pred_region
          %662 = vsyncadd [#allocation15], 0
          %s664 = sshll.u32 %s12, 4
          %s665 = int_to_ptr.hbm [resolvable:$true] %s664
          %s666 = sshll.u32 [#allocation16], 4
          %s667 = int_to_ptr.vmem [resolvable:$true] %s666
          %669 = dma.hbm_to_vmem [thread:$0]  %s665, 16, %s667, [#allocation15]
        $region52: #{tpu_custom_call.1} parent=11 // pred_fallthru
          _
        // Predicated region
        $region53: #{tpu_custom_call.1} parent=11 // pred_check
          %p670 = pneg %p361
        $region54: #{tpu_custom_call.1} parent=11 // pred_check_branch
          %672 = sbr.rel (%p670) target = $region56
        $region55: #{tpu_custom_call.1} parent=11 // pred_region
          %674 = vsyncadd [#allocation18], 0
          %s675 = sshll.u32 %s13, 4
          %s676 = int_to_ptr.hbm [resolvable:$true] %s675
          %s677 = sshll.u32 [#allocation17], 4
          %s678 = int_to_ptr.vmem [resolvable:$true] %s677
          %683 = dma.hbm_to_vmem [thread:$0]  %s676, 256, %s678, [#allocation18], 64, 64, 4
        $region56: #{tpu_custom_call.1} parent=11 // pred_fallthru
          _
        // Predicated region
        $region57: #{tpu_custom_call.1} parent=11 // pred_check
          %p684 = pneg %p382
        $region58: #{tpu_custom_call.1} parent=11 // pred_check_branch
          %686 = sbr.rel (%p684) target = $region60
        $region59: #{tpu_custom_call.1} parent=11 // pred_region
          %688 = vsyncadd [#allocation18], 0
          %s690 = sshll.u32 %s14, 4
          %s691 = int_to_ptr.hbm [resolvable:$true] %s690
          %s692 = sshll.u32 [#allocation19], 4
          %s693 = int_to_ptr.vmem [resolvable:$true] %s692
          %695 = dma.hbm_to_vmem [thread:$0]  %s691, 16, %s693, [#allocation18]
        $region60: #{tpu_custom_call.1} parent=11 // pred_fallthru
          _
        // Predicated region
        $region61: #{tpu_custom_call.1} parent=11 // pred_check
          %p696 = pneg %p403
        $region62: #{tpu_custom_call.1} parent=11 // pred_check_branch
          %698 = sbr.rel (%p696) target = $region64
        $region63: #{tpu_custom_call.1} parent=11 // pred_region
          %700 = vsyncadd [#allocation21], 0
          %s701 = sshll.u32 %s15, 4
          %s702 = int_to_ptr.hbm [resolvable:$true] %s701
          %s703 = sshll.u32 [#allocation20], 4
          %s704 = int_to_ptr.vmem [resolvable:$true] %s703
          %709 = dma.hbm_to_vmem [thread:$0]  %s702, 256, %s704, [#allocation21], 64, 64, 4
        $region64: #{tpu_custom_call.1} parent=11 // pred_fallthru
          _
        // Predicated region
        $region65: #{tpu_custom_call.1} parent=11 // pred_check
          %p710 = pneg %p424
        $region66: #{tpu_custom_call.1} parent=11 // pred_check_branch
          %712 = sbr.rel (%p710) target = $region68
        $region67: #{tpu_custom_call.1} parent=11 // pred_region
          %714 = vsyncadd [#allocation21], 0
          %s716 = sshll.u32 %s16, 4
          %s717 = int_to_ptr.hbm [resolvable:$true] %s716
          %s718 = sshll.u32 [#allocation22], 4
          %s719 = int_to_ptr.vmem [resolvable:$true] %s718
          %721 = dma.hbm_to_vmem [thread:$0]  %s717, 16, %s719, [#allocation21]
        $region68: #{tpu_custom_call.1} parent=11 // pred_fallthru
          _
        // Predicated region
        $region69: #{tpu_custom_call.1} parent=11 // pred_check
          %p722 = pneg %p445
        $region70: #{tpu_custom_call.1} parent=11 // pred_check_branch
          %724 = sbr.rel (%p722) target = $region72
        $region71: #{tpu_custom_call.1} parent=11 // pred_region
          _
        $region72: #{tpu_custom_call.1} parent=11 // pred_fallthru
          _
        // Predicated region
        $region73: #{tpu_custom_call.1} parent=11 // pred_check
          %p725 = pneg %p466
        $region74: #{tpu_custom_call.1} parent=11 // pred_check_branch
          %727 = sbr.rel (%p725) target = $region76
        $region75: #{tpu_custom_call.1} parent=11 // pred_region
          _
        $region76: #{tpu_custom_call.1} parent=11 // pred_fallthru
          _
        // Predicated region
        $region77: #{tpu_custom_call.1} parent=11 // pred_check
          %p728 = pneg %p487
        $region78: #{tpu_custom_call.1} parent=11 // pred_check_branch
          %730 = sbr.rel (%p728) target = $region80
        $region79: #{tpu_custom_call.1} parent=11 // pred_region
          %732 = vsyncadd [#allocation24], 0
          %s734 = sshll.u32 %s19, 4
          %s735 = int_to_ptr.hbm [resolvable:$true] %s734
          %s736 = sshll.u32 [#allocation23], 4
          %s737 = int_to_ptr.vmem [resolvable:$true] %s736
          %739 = dma.hbm_to_vmem [thread:$0]  %s735, 64, %s737, [#allocation24]
        $region80: #{tpu_custom_call.1} parent=11 // pred_fallthru
          _
        // Predicated region
        $region81: #{tpu_custom_call.1} parent=11 // pred_check
          %p740 = pneg %p508
        $region82: #{tpu_custom_call.1} parent=11 // pred_check_branch
          %742 = sbr.rel (%p740) target = $region84
        $region83: #{tpu_custom_call.1} parent=11 // pred_region
          %744 = vsyncadd [#allocation24], 0
          %s746 = sshll.u32 %s20, 4
          %s747 = int_to_ptr.hbm [resolvable:$true] %s746
          %s748 = sshll.u32 [#allocation25], 4
          %s749 = int_to_ptr.vmem [resolvable:$true] %s748
          %751 = dma.hbm_to_vmem [thread:$0]  %s747, 64, %s749, [#allocation24]
        $region84: #{tpu_custom_call.1} parent=11 // pred_fallthru
          _
      $region12: #{tpu_custom_call.1} parent=5 // pred_fallthru
        _
      %p752 = scmp.lt.s32.totalorder %s38, 2
      // Predicated region
      $region85: #{tpu_custom_call.1} parent=5 // pred_check
        %p753 = pneg %p752
      $region86: #{tpu_custom_call.1} parent=5 // pred_check_branch
        %755 = sbr.rel (%p753) target = $region88
      $region87: #{tpu_custom_call.1} parent=5 // pred_region
        // Predicated region
        $region89: #{tpu_custom_call.1} parent=87 // pred_check
          %p756 = pneg %p70
        $region90: #{tpu_custom_call.1} parent=87 // pred_check_branch
          %758 = sbr.rel (%p756) target = $region92
        $region91: #{tpu_custom_call.1} parent=87 // pred_region
          %p759 = scmp.lt.s32.totalorder %s45, 1
          %s760 = scalar_select %p759, %s45, 1
          %s761 = smul.addr %s760, 8
          %s762 = scalar_lea.vmem %s0, %s761
        $region92: #{tpu_custom_call.1} parent=87 // pred_fallthru
          _
        // Predicated region
        $region93: #{tpu_custom_call.1} parent=87 // pred_check
          %p763 = pneg %p96
        $region94: #{tpu_custom_call.1} parent=87 // pred_check_branch
          %765 = sbr.rel (%p763) target = $region96
        $region95: #{tpu_custom_call.1} parent=87 // pred_region
          %p766 = scmp.lt.s32.totalorder %s45, 1
          %s767 = scalar_select %p766, %s45, 1
          %s768 = smul.addr %s767, 2
          %s769 = smul.addr %s768, 8
          %s770 = scalar_lea.vmem %s1, %s769
        $region96: #{tpu_custom_call.1} parent=87 // pred_fallthru
          _
        // Predicated region
        $region97: #{tpu_custom_call.1} parent=87 // pred_check
          %p771 = pneg %p124
        $region98: #{tpu_custom_call.1} parent=87 // pred_check_branch
          %773 = sbr.rel (%p771) target = $region100
        $region99: #{tpu_custom_call.1} parent=87 // pred_region
          %p774 = scmp.lt.s32.totalorder %s45, 1
          %s775 = scalar_select %p774, %s45, 1
          %p776 = scmp.lt.s32.totalorder %s46, 0
          %s777 = scalar_select %p776, %s46, 0
          %s778 = sadd.s32 %s777, %s775
          %s779 = smul.addr %s778, 8
          %s780 = scalar_lea.vmem %s2, %s779
        $region100: #{tpu_custom_call.1} parent=87 // pred_fallthru
          _
      $region88: #{tpu_custom_call.1} parent=5 // pred_fallthru
        _
      %p781 = scmp.le.s32.totalorder 1, %s38
      %p782 = scmp.lt.s32.totalorder %s38, 3
      %p783 = pnand %p781, %p782
      %p784 = pneg %p783
      // Predicated region
      $region101: #{tpu_custom_call.1} parent=5 // pred_check
        _
      $region102: #{tpu_custom_call.1} parent=5 // pred_check_branch
        %786 = sbr.rel (%p783) target = $region104
      $region103: #{tpu_custom_call.1} parent=5 // pred_region
        %s787 = ssub.s32 %s38, 1
        // Predicated region
        $region105: #{tpu_custom_call.1} parent=103 // pred_check
          %p788 = pneg %p172
        $region106: #{tpu_custom_call.1} parent=103 // pred_check_branch
          %790 = sbr.rel (%p788) target = $region108
        $region107: #{tpu_custom_call.1} parent=103 // pred_region
          %792 = dma.done [#allocation3], 16
        $region108: #{tpu_custom_call.1} parent=103 // pred_fallthru
          _
        // Predicated region
        $region109: #{tpu_custom_call.1} parent=103 // pred_check
          %p793 = pneg %p193
        $region110: #{tpu_custom_call.1} parent=103 // pred_check_branch
          %795 = sbr.rel (%p793) target = $region112
        $region111: #{tpu_custom_call.1} parent=103 // pred_region
          %797 = dma.done [#allocation6], 256
        $region112: #{tpu_custom_call.1} parent=103 // pred_fallthru
          _
        // Predicated region
        $region113: #{tpu_custom_call.1} parent=103 // pred_check
          %p798 = pneg %p214
        $region114: #{tpu_custom_call.1} parent=103 // pred_check_branch
          %800 = sbr.rel (%p798) target = $region116
        $region115: #{tpu_custom_call.1} parent=103 // pred_region
          %802 = dma.done [#allocation6], 16
        $region116: #{tpu_custom_call.1} parent=103 // pred_fallthru
          _
        // Predicated region
        $region117: #{tpu_custom_call.1} parent=103 // pred_check
          %p803 = pneg %p235
        $region118: #{tpu_custom_call.1} parent=103 // pred_check_branch
          %805 = sbr.rel (%p803) target = $region120
        $region119: #{tpu_custom_call.1} parent=103 // pred_region
          %807 = dma.done [#allocation9], 256
        $region120: #{tpu_custom_call.1} parent=103 // pred_fallthru
          _
        // Predicated region
        $region121: #{tpu_custom_call.1} parent=103 // pred_check
          %p808 = pneg %p256
        $region122: #{tpu_custom_call.1} parent=103 // pred_check_branch
          %810 = sbr.rel (%p808) target = $region124
        $region123: #{tpu_custom_call.1} parent=103 // pred_region
          %812 = dma.done [#allocation9], 16
        $region124: #{tpu_custom_call.1} parent=103 // pred_fallthru
          _
        // Predicated region
        $region125: #{tpu_custom_call.1} parent=103 // pred_check
          %p813 = pneg %p277
        $region126: #{tpu_custom_call.1} parent=103 // pred_check_branch
          %815 = sbr.rel (%p813) target = $region128
        $region127: #{tpu_custom_call.1} parent=103 // pred_region
          %817 = dma.done [#allocation12], 256
        $region128: #{tpu_custom_call.1} parent=103 // pred_fallthru
          _
        // Predicated region
        $region129: #{tpu_custom_call.1} parent=103 // pred_check
          %p818 = pneg %p298
        $region130: #{tpu_custom_call.1} parent=103 // pred_check_branch
          %820 = sbr.rel (%p818) target = $region132
        $region131: #{tpu_custom_call.1} parent=103 // pred_region
          %822 = dma.done [#allocation12], 16
        $region132: #{tpu_custom_call.1} parent=103 // pred_fallthru
          _
        // Predicated region
        $region133: #{tpu_custom_call.1} parent=103 // pred_check
          %p823 = pneg %p319
        $region134: #{tpu_custom_call.1} parent=103 // pred_check_branch
          %825 = sbr.rel (%p823) target = $region136
        $region135: #{tpu_custom_call.1} parent=103 // pred_region
          %827 = dma.done [#allocation15], 256
        $region136: #{tpu_custom_call.1} parent=103 // pred_fallthru
          _
        // Predicated region
        $region137: #{tpu_custom_call.1} parent=103 // pred_check
          %p828 = pneg %p340
        $region138: #{tpu_custom_call.1} parent=103 // pred_check_branch
          %830 = sbr.rel (%p828) target = $region140
        $region139: #{tpu_custom_call.1} parent=103 // pred_region
          %832 = dma.done [#allocation15], 16
        $region140: #{tpu_custom_call.1} parent=103 // pred_fallthru
          _
        // Predicated region
        $region141: #{tpu_custom_call.1} parent=103 // pred_check
          %p833 = pneg %p361
        $region142: #{tpu_custom_call.1} parent=103 // pred_check_branch
          %835 = sbr.rel (%p833) target = $region144
        $region143: #{tpu_custom_call.1} parent=103 // pred_region
          %837 = dma.done [#allocation18], 256
        $region144: #{tpu_custom_call.1} parent=103 // pred_fallthru
          _
        // Predicated region
        $region145: #{tpu_custom_call.1} parent=103 // pred_check
          %p838 = pneg %p382
        $region146: #{tpu_custom_call.1} parent=103 // pred_check_branch
          %840 = sbr.rel (%p838) target = $region148
        $region147: #{tpu_custom_call.1} parent=103 // pred_region
          %842 = dma.done [#allocation18], 16
        $region148: #{tpu_custom_call.1} parent=103 // pred_fallthru
          _
        // Predicated region
        $region149: #{tpu_custom_call.1} parent=103 // pred_check
          %p843 = pneg %p403
        $region150: #{tpu_custom_call.1} parent=103 // pred_check_branch
          %845 = sbr.rel (%p843) target = $region152
        $region151: #{tpu_custom_call.1} parent=103 // pred_region
          %847 = dma.done [#allocation21], 256
        $region152: #{tpu_custom_call.1} parent=103 // pred_fallthru
          _
        // Predicated region
        $region153: #{tpu_custom_call.1} parent=103 // pred_check
          %p848 = pneg %p424
        $region154: #{tpu_custom_call.1} parent=103 // pred_check_branch
          %850 = sbr.rel (%p848) target = $region156
        $region155: #{tpu_custom_call.1} parent=103 // pred_region
          %852 = dma.done [#allocation21], 16
        $region156: #{tpu_custom_call.1} parent=103 // pred_fallthru
          _
        // Predicated region
        $region157: #{tpu_custom_call.1} parent=103 // pred_check
          %p853 = pneg %p487
        $region158: #{tpu_custom_call.1} parent=103 // pred_check_branch
          %855 = sbr.rel (%p853) target = $region160
        $region159: #{tpu_custom_call.1} parent=103 // pred_region
          %857 = dma.done [#allocation24], 64
        $region160: #{tpu_custom_call.1} parent=103 // pred_fallthru
          _
        // Predicated region
        $region161: #{tpu_custom_call.1} parent=103 // pred_check
          %p858 = pneg %p508
        $region162: #{tpu_custom_call.1} parent=103 // pred_check_branch
          %860 = sbr.rel (%p858) target = $region164
        $region163: #{tpu_custom_call.1} parent=103 // pred_region
          %862 = dma.done [#allocation24], 64
        $region164: #{tpu_custom_call.1} parent=103 // pred_fallthru
          _
        %p863 = scmp.lt.s32.totalorder %s47, 1
        %s864 = scalar_select %p863, %s47, 1
        %s865 = smul.addr %s864, 8
        %s866 = scalar_lea.vmem %s0, %s865
        %p867 = pneg %p76
        %p868 = pneg %p73
        %p869 = scmp.lt.s32.totalorder %s47, 1
        %s870 = scalar_select %p869, %s47, 1
        %s871 = smul.addr %s870, 2
        %s872 = smul.addr %s871, 8
        %s873 = scalar_lea.vmem %s1, %s872
        %p874 = pneg %p102
        %p875 = pneg %p99
        %p876 = scmp.lt.s32.totalorder %s47, 1
        %s877 = scalar_select %p876, %s47, 1
        %p878 = scmp.lt.s32.totalorder %s48, 0
        %s879 = scalar_select %p878, %s48, 0
        %s880 = sadd.s32 %s879, %s877
        %s881 = smul.addr %s880, 8
        %s882 = scalar_lea.vmem %s2, %s881
        %p883 = pneg %p130
        %p884 = pneg %p127
        %p885 = pneg %p151
        %p886 = pneg %p148
        %p887 = pneg %p172
        %p888 = pneg %p169
        %p889 = pneg %p193
        %p890 = pneg %p190
        %p891 = pneg %p214
        %p892 = pneg %p211
        %p893 = pneg %p235
        %p894 = pneg %p232
        %p895 = pneg %p256
        %p896 = pneg %p253
        %p897 = pneg %p277
        %p898 = pneg %p274
        %p899 = pneg %p298
        %p900 = pneg %p295
        %p901 = pneg %p319
        %p902 = pneg %p316
        %p903 = pneg %p340
        %p904 = pneg %p337
        %p905 = pneg %p361
        %p906 = pneg %p358
        %p907 = pneg %p382
        %p908 = pneg %p379
        %p909 = pneg %p403
        %p910 = pneg %p400
        %p911 = pneg %p424
        %p912 = pneg %p421
        %p913 = pneg %p445
        %p914 = pneg %p442
        %p915 = pneg %p466
        %p916 = pneg %p463
        %p917 = pneg %p487
        %p918 = pneg %p484
        %p919 = pneg %p508
        %p920 = pneg %p505
        %p921 = pneg %p536
        %p922 = pneg %p533
        %s923 = sand.u32 %s523, 1
        %s924 = scalar_lea.sflag [#allocation4], %s923
        %s925 = sand.u32 %s523, 1
        %s926 = smul.addr %s925, 8
        %s927 = scalar_lea.vmem [#allocation26], %s926
        %p928 = scmp.lt.s32.totalorder %s47, 1
        %s929 = scalar_select %p928, %s47, 1
        %s930 = smul.addr %s929, 8
        %s931 = scalar_lea.vmem %s0, %s930
        %p932 = scmp.lt.s32.totalorder %s47, 1
        %s933 = scalar_select %p932, %s47, 1
        %s934 = smul.addr %s933, 2
        %s935 = smul.addr %s934, 8
        %s936 = scalar_lea.vmem %s1, %s935
        %p937 = scmp.lt.s32.totalorder %s47, 1
        %s938 = scalar_select %p937, %s47, 1
        %p939 = scmp.lt.s32.totalorder %s48, 0
        %s940 = scalar_select %p939, %s48, 0
        %s941 = sadd.s32 %s940, %s938
        %s942 = smul.addr %s941, 8
        %s943 = scalar_lea.vmem %s2, %s942
        %s945 = smul.u32 %s48, 8
        %v946 = vld [vmem:[#allocation23] sm:$0x7]
        %v947 = vld [vmem:[#allocation25] sm:$0x7]
        %v948 = vld [vmem:[%s931] sm:$0xff]
        %v949 = vlaneseq
        %v950 = vshrl.u32 %v949, 7
        %v951 = vstv %s945
        %v952 = vadd.s32 %v950, %v951
        %v953 = vlaneseq
        %v954 = vand.u32 %v953, 127
        %vm955 = vcmp.le.s32.totalorder %v954, %v952
        %v956 = vsel %vm955, 0.0, -1e+30
        %vm957 = vcmask 261120
        %v958 = vsel %vm957, %v948, 0.0
        %959 = vadd.xlane.f32.xlu0 %v958
        %v960 = vpop.xlane.xlu0 %959
        %v961 = vrcp.pop 32.0
        %v962 = vmul.f32 32.0, %v961
        %v963 = vsub.f32 1.0, %v962
        %v964 = vmul.f32 %v961, %v963
        %v965 = vadd.f32 %v961, %v964
        %vm966 = vweird.f32 %v961
        %v967 = vsel %vm966, %v961, %v965
        %v968 = vmul.f32 %v960, %v967
        %v969 = vsub.f32 %v948, %v968
        %v970 = vmul.f32 %v969, %v969
        %v971 = vsel %vm957, %v970, 0.0
        %972 = vadd.xlane.f32.xlu0 %v971
        %v973 = vpop.xlane.xlu0 %972
        %v974 = vmul.f32 %v973, 0.032258064
        %v975 = vrsqrt.pop %v974
        %v976 = vmul.f32 %v975, %v974
        %v977 = vmul.f32 %v976, %v975
        %v978 = vmul.f32 0.5, %v977
        %v979 = vsub.f32 1.5, %v978
        %v980 = vmul.f32 %v975, %v979
        %v981 = vmul.f32 %v974, %v980
        %vm982 = vcmp.eq.f32.partialorder %v974, inf
        %v983 = vsel %vm982, %v974, %v981
        %vm984 = vcmp.eq.f32.partialorder %v974, 0.0
        %v985 = vand.u32 %v974, 2147483648
        %v986 = vsel %vm984, %v985, %v983
        %v987 = vadd.f32 %v986, 1e-06
        %v988 = vrcp.pop %v987
        %v989 = vperm.slane %v946, 0
        %v990 = vmul.f32 %v989, %v969
        %v991 = vmul.f32 %v990, %v988
        %v992 = vperm.slane %v947, 0
        %v993 = vadd.f32 %v991, %v992
        %v994 = vpack.c.bf16 %v993, %v993
        %v995 = vld [vmem:[%s3] sm:$0xf]
        %v996 = vld [vmem:[%s3 + $0x4] sm:$0xf]
        %v997 = vld [vmem:[%s3 + $0x8] sm:$0xf]
        %v998 = vld [vmem:[%s3 + $0xc] sm:$0xf]
        %v999 = vld [vmem:[#allocation2] sm:$0x1]
        %v1001 = vperm.slane %v999, 0
        %v1007 = vunpack.c.l.b16 %v995
        %v1008 = vunpack.c.l.b16 %v996
        %v1009 = vunpack.c.l.b16 %v997
        %v1010 = vunpack.c.l.b16 %v998
        %v1011 = vpack.c.b16 %v1008, %v1007
        %v1012 = vpack.c.b16 %v1010, %v1009
        %v1016 = vsel %vm957, %v994, 0
        %1018 = vmatpush.bf16.msra.mxu0 0
        %1019 = vmatpush.bf16.msra.mxu0 0
        %1020 = vmatpush.bf16.msra.mxu0 0
        %1021 = vmatpush.bf16.msra.mxu0 0
        %1022 = vmatpush.bf16.msra.mxu0 0
        %1023 = vmatpush.bf16.msra.mxu0 0
        %1024 = vmatpush.bf16.msra.mxu0 %v1012
        %1025 = vmatpush.bf16.msra.mxu0 %v1011
        %1026 = vmatmul.bf16.gmra.mxu0 %v1016
        %v1027 = vpop.f32.mrf.mxu0
        %v1028 = vadd.f32 %v1001, %v1027
        %v1029 = vpop.f32.mrf.mxu0
        %1030 = vdwg.mxu0
        %v1031 = vld [vmem:[#allocation5] sm:$0xf]
        %v1032 = vld [vmem:[#allocation5 + $0x4] sm:$0xf]
        %v1033 = vld [vmem:[#allocation5 + $0x8] sm:$0xf]
        %v1034 = vld [vmem:[#allocation5 + $0xc] sm:$0xf]
        %v1035 = vld [vmem:[#allocation7] sm:$0x1]
        %v1037 = vperm.slane %v1035, 0
        %v1043 = vunpack.c.l.b16 %v1031
        %v1044 = vunpack.c.l.b16 %v1032
        %v1045 = vunpack.c.l.b16 %v1033
        %v1046 = vunpack.c.l.b16 %v1034
        %v1047 = vpack.c.b16 %v1044, %v1043
        %v1048 = vpack.c.b16 %v1046, %v1045
        %1051 = vmatpush.bf16.msra.mxu0 0
        %1052 = vmatpush.bf16.msra.mxu0 0
        %1053 = vmatpush.bf16.msra.mxu0 0
        %1054 = vmatpush.bf16.msra.mxu0 0
        %1055 = vmatpush.bf16.msra.mxu0 0
        %1056 = vmatpush.bf16.msra.mxu0 0
        %1057 = vmatpush.bf16.msra.mxu0 %v1048
        %1058 = vmatpush.bf16.msra.mxu0 %v1047
        %1059 = vmatmul.bf16.gmra.mxu0 %v1016
        %v1060 = vpop.f32.mrf.mxu0
        %v1061 = vadd.f32 %v1037, %v1060
        %v1062 = vpop.f32.mrf.mxu0
        %1063 = vdwg.mxu0
        %v1064 = vpack.c.bf16 %v1028, %v1028
        %v1065 = vpack.c.bf16 %v1061, %v1061
        %vm1066 = vcmask 64512
        %v1068 = vsel %vm1066, %v1064, 0
        %v1071 = vsel %vm1066, %v1065, 0
        %1073 = vmatpush.bf16.xpose.msra.mxu0 0
        %1074 = vmatpush.bf16.xpose.msra.mxu0 0
        %1075 = vmatpush.bf16.xpose.msra.mxu0 0
        %1076 = vmatpush.bf16.xpose.msra.mxu0 0
        %1077 = vmatpush.bf16.xpose.msra.mxu0 0
        %1078 = vmatpush.bf16.xpose.msra.mxu0 0
        %1079 = vmatpush.bf16.xpose.msra.mxu0 0
        %1080 = vmatpush.bf16.xpose.msra.mxu0 %v1071
        %1081 = vmatmul.bf16.gmra.mxu0 %v1068
        %v1082 = vpop.f32.mrf.mxu0
        %v1083 = vadd.f32 %v956, %v1082
        %v1084 = vpop.f32.mrf.mxu0
        %1085 = vdwg.mxu0
        %v1086 = vsel %vm1066, %v1083, -inf
        %1087 = vmax.xlane.f32.xlu0 %v1086
        %v1088 = vpop.xlane.xlu0 %1087
        %v1089 = vsub.f32 %v1083, %v1088
        %v1090 = vmul.f32 %v1089, 1.442695
        %v1091 = vpow.pop %v1090
        %v1092 = vsel %vm1066, %v1091, 0.0
        %1093 = vadd.xlane.f32.xlu0 %v1092
        %v1094 = vpop.xlane.xlu0 %1093
        %v1095 = vrcp.pop %v1094
        %v1096 = vmul.f32 %v1091, %v1095
        %v1097 = vpack.c.bf16 %v1096, %v1096
        %1099 = vrot.lane.b32.xlu0 %v1065, 96
        %v1100 = vpop.permute.xlu0 %1099
        %v1102 = vsel %vm1066, %v1097, 0
        %vm1104 = vcmask 1043456
        %v1106 = vsel %vm1104, %v1100, 0
        %1108 = vmatpush.bf16.msra.mxu0 0
        %1109 = vmatpush.bf16.msra.mxu0 0
        %1110 = vmatpush.bf16.msra.mxu0 0
        %1111 = vmatpush.bf16.msra.mxu0 0
        %1112 = vmatpush.bf16.msra.mxu0 0
        %1113 = vmatpush.bf16.msra.mxu0 0
        %1114 = vmatpush.bf16.msra.mxu0 0
        %1115 = vmatpush.bf16.msra.mxu0 %v1106
        %1116 = vmatmul.bf16.gmra.mxu0 %v1102
        %v1117 = vpop.f32.mrf.mxu0
        %v1118 = vadd.f32 0.0, %v1117
        %v1119 = vpop.f32.mrf.mxu0
        %1120 = vdwg.mxu0
        %v1121 = vpack.c.bf16 %v1118, %v1118
        %v1122 = vld [vmem:[#allocation8] sm:$0xf]
        %1124 = vrot.lane.b32.xlu0 %v1064, 120
        %v1125 = vpop.permute.xlu0 %1124
        %1126 = vrot.lane.b32.xlu0 %v1065, 120
        %v1127 = vpop.permute.xlu0 %1126
        %v1129 = vsel %vm1066, %v1125, 0
        %v1132 = vsel %vm1066, %v1127, 0
        %1134 = vmatpush.bf16.xpose.msra.mxu0 0
        %1135 = vmatpush.bf16.xpose.msra.mxu0 0
        %1136 = vmatpush.bf16.xpose.msra.mxu0 0
        %1137 = vmatpush.bf16.xpose.msra.mxu0 0
        %1138 = vmatpush.bf16.xpose.msra.mxu0 0
        %1139 = vmatpush.bf16.xpose.msra.mxu0 0
        %1140 = vmatpush.bf16.xpose.msra.mxu0 0
        %1141 = vmatpush.bf16.xpose.msra.mxu0 %v1132
        %1142 = vmatmul.bf16.gmra.mxu0 %v1129
        %v1143 = vpop.f32.mrf.mxu0
        %v1144 = vadd.f32 %v956, %v1143
        %v1145 = vpop.f32.mrf.mxu0
        %1146 = vdwg.mxu0
        %v1147 = vsel %vm1066, %v1144, -inf
        %1148 = vmax.xlane.f32.xlu0 %v1147
        %v1149 = vpop.xlane.xlu0 %1148
        %v1150 = vsub.f32 %v1144, %v1149
        %v1151 = vmul.f32 %v1150, 1.442695
        %v1152 = vpow.pop %v1151
        %v1153 = vsel %vm1066, %v1152, 0.0
        %1154 = vadd.xlane.f32.xlu0 %v1153
        %v1155 = vpop.xlane.xlu0 %1154
        %v1156 = vrcp.pop %v1155
        %v1157 = vmul.f32 %v1152, %v1156
        %v1158 = vpack.c.bf16 %v1157, %v1157
        %1159 = vrot.lane.b32.xlu0 %v1065, 88
        %v1160 = vpop.permute.xlu0 %1159
        %v1162 = vsel %vm1066, %v1158, 0
        %v1165 = vsel %vm1104, %v1160, 0
        %1167 = vmatpush.bf16.msra.mxu0 0
        %1168 = vmatpush.bf16.msra.mxu0 0
        %1169 = vmatpush.bf16.msra.mxu0 0
        %1170 = vmatpush.bf16.msra.mxu0 0
        %1171 = vmatpush.bf16.msra.mxu0 0
        %1172 = vmatpush.bf16.msra.mxu0 0
        %1173 = vmatpush.bf16.msra.mxu0 0
        %1174 = vmatpush.bf16.msra.mxu0 %v1165
        %1175 = vmatmul.bf16.gmra.mxu0 %v1162
        %v1176 = vpop.f32.mrf.mxu0
        %v1177 = vadd.f32 0.0, %v1176
        %v1178 = vpop.f32.mrf.mxu0
        %1179 = vdwg.mxu0
        %v1180 = vpack.c.bf16 %v1177, %v1177
        %v1181 = vld [vmem:[#allocation8 + $0x4] sm:$0xf]
        %v1183 = vsel %vm1066, %v1180, 0
        %v1186 = vsel %vm1104, %v1181, 0
        %1188 = vmatpush.bf16.msra.mxu0 0
        %1189 = vmatpush.bf16.msra.mxu0 0
        %1190 = vmatpush.bf16.msra.mxu0 0
        %1191 = vmatpush.bf16.msra.mxu0 0
        %1192 = vmatpush.bf16.msra.mxu0 0
        %1193 = vmatpush.bf16.msra.mxu0 0
        %1194 = vmatpush.bf16.msra.mxu0 0
        %1195 = vmatpush.bf16.msra.mxu0 %v1186
        %1196 = vmatmul.bf16.gmra.mxu0 %v1183
        %v1197 = vpop.f32.mrf.mxu0
        %v1198 = vadd.f32 0.0, %v1197
        %v1199 = vpop.f32.mrf.mxu0
        %1200 = vdwg.mxu0
        %v1202 = vsel %vm1066, %v1121, 0
        %v1205 = vsel %vm1104, %v1122, 0
        %1207 = vmatpush.bf16.msra.mxu0 0
        %1208 = vmatpush.bf16.msra.mxu0 0
        %1209 = vmatpush.bf16.msra.mxu0 0
        %1210 = vmatpush.bf16.msra.mxu0 0
        %1211 = vmatpush.bf16.msra.mxu0 0
        %1212 = vmatpush.bf16.msra.mxu0 0
        %1213 = vmatpush.bf16.msra.mxu0 0
        %1214 = vmatpush.bf16.msra.mxu0 %v1205
        %1215 = vmatmul.bf16.gmra.mxu0 %v1202
        %v1216 = vpop.f32.mrf.mxu0
        %v1217 = vadd.f32 %v1198, %v1216
        %v1218 = vpop.f32.mrf.mxu0
        %1219 = vdwg.mxu0
        %1220 = vrot.lane.b32.xlu0 %v1064, 112
        %v1221 = vpop.permute.xlu0 %1220
        %1222 = vrot.lane.b32.xlu0 %v1065, 112
        %v1223 = vpop.permute.xlu0 %1222
        %v1225 = vsel %vm1066, %v1221, 0
        %v1228 = vsel %vm1066, %v1223, 0
        %1230 = vmatpush.bf16.xpose.msra.mxu0 0
        %1231 = vmatpush.bf16.xpose.msra.mxu0 0
        %1232 = vmatpush.bf16.xpose.msra.mxu0 0
        %1233 = vmatpush.bf16.xpose.msra.mxu0 0
        %1234 = vmatpush.bf16.xpose.msra.mxu0 0
        %1235 = vmatpush.bf16.xpose.msra.mxu0 0
        %1236 = vmatpush.bf16.xpose.msra.mxu0 0
        %1237 = vmatpush.bf16.xpose.msra.mxu0 %v1228
        %1238 = vmatmul.bf16.gmra.mxu0 %v1225
        %v1239 = vpop.f32.mrf.mxu0
        %v1240 = vadd.f32 %v956, %v1239
        %v1241 = vpop.f32.mrf.mxu0
        %1242 = vdwg.mxu0
        %v1243 = vsel %vm1066, %v1240, -inf
        %1244 = vmax.xlane.f32.xlu0 %v1243
        %v1245 = vpop.xlane.xlu0 %1244
        %v1246 = vsub.f32 %v1240, %v1245
        %v1247 = vmul.f32 %v1246, 1.442695
        %v1248 = vpow.pop %v1247
        %v1249 = vsel %vm1066, %v1248, 0.0
        %1250 = vadd.xlane.f32.xlu0 %v1249
        %v1251 = vpop.xlane.xlu0 %1250
        %v1252 = vrcp.pop %v1251
        %v1253 = vmul.f32 %v1248, %v1252
        %v1254 = vpack.c.bf16 %v1253, %v1253
        %1255 = vrot.lane.b32.xlu0 %v1065, 80
        %v1256 = vpop.permute.xlu0 %1255
        %v1258 = vsel %vm1066, %v1254, 0
        %v1261 = vsel %vm1104, %v1256, 0
        %1263 = vmatpush.bf16.msra.mxu0 0
        %1264 = vmatpush.bf16.msra.mxu0 0
        %1265 = vmatpush.bf16.msra.mxu0 0
        %1266 = vmatpush.bf16.msra.mxu0 0
        %1267 = vmatpush.bf16.msra.mxu0 0
        %1268 = vmatpush.bf16.msra.mxu0 0
        %1269 = vmatpush.bf16.msra.mxu0 0
        %1270 = vmatpush.bf16.msra.mxu0 %v1261
        %1271 = vmatmul.bf16.gmra.mxu0 %v1258
        %v1272 = vpop.f32.mrf.mxu0
        %v1273 = vadd.f32 0.0, %v1272
        %v1274 = vpop.f32.mrf.mxu0
        %1275 = vdwg.mxu0
        %v1276 = vpack.c.bf16 %v1273, %v1273
        %v1277 = vld [vmem:[#allocation8 + $0x8] sm:$0xf]
        %v1279 = vsel %vm1066, %v1276, 0
        %v1282 = vsel %vm1104, %v1277, 0
        %1284 = vmatpush.bf16.msra.mxu0 0
        %1285 = vmatpush.bf16.msra.mxu0 0
        %1286 = vmatpush.bf16.msra.mxu0 0
        %1287 = vmatpush.bf16.msra.mxu0 0
        %1288 = vmatpush.bf16.msra.mxu0 0
        %1289 = vmatpush.bf16.msra.mxu0 0
        %1290 = vmatpush.bf16.msra.mxu0 0
        %1291 = vmatpush.bf16.msra.mxu0 %v1282
        %1292 = vmatmul.bf16.gmra.mxu0 %v1279
        %v1293 = vpop.f32.mrf.mxu0
        %v1294 = vadd.f32 0.0, %v1293
        %v1295 = vpop.f32.mrf.mxu0
        %1296 = vdwg.mxu0
        %v1297 = vadd.f32 %v1217, %v1294
        %1298 = vrot.lane.b32.xlu0 %v1064, 104
        %v1299 = vpop.permute.xlu0 %1298
        %1300 = vrot.lane.b32.xlu0 %v1065, 104
        %v1301 = vpop.permute.xlu0 %1300
        %v1303 = vsel %vm1066, %v1299, 0
        %v1306 = vsel %vm1066, %v1301, 0
        %1308 = vmatpush.bf16.xpose.msra.mxu0 0
        %1309 = vmatpush.bf16.xpose.msra.mxu0 0
        %1310 = vmatpush.bf16.xpose.msra.mxu0 0
        %1311 = vmatpush.bf16.xpose.msra.mxu0 0
        %1312 = vmatpush.bf16.xpose.msra.mxu0 0
        %1313 = vmatpush.bf16.xpose.msra.mxu0 0
        %1314 = vmatpush.bf16.xpose.msra.mxu0 0
        %1315 = vmatpush.bf16.xpose.msra.mxu0 %v1306
        %1316 = vmatmul.bf16.gmra.mxu0 %v1303
        %v1317 = vpop.f32.mrf.mxu0
        %v1318 = vadd.f32 %v956, %v1317
        %v1319 = vpop.f32.mrf.mxu0
        %1320 = vdwg.mxu0
        %v1321 = vsel %vm1066, %v1318, -inf
        %1322 = vmax.xlane.f32.xlu0 %v1321
        %v1323 = vpop.xlane.xlu0 %1322
        %v1324 = vsub.f32 %v1318, %v1323
        %v1325 = vmul.f32 %v1324, 1.442695
        %v1326 = vpow.pop %v1325
        %v1327 = vsel %vm1066, %v1326, 0.0
        %1328 = vadd.xlane.f32.xlu0 %v1327
        %v1329 = vpop.xlane.xlu0 %1328
        %v1330 = vrcp.pop %v1329
        %v1331 = vmul.f32 %v1326, %v1330
        %v1332 = vpack.c.bf16 %v1331, %v1331
        %1333 = vrot.lane.b32.xlu0 %v1065, 72
        %v1334 = vpop.permute.xlu0 %1333
        %v1336 = vsel %vm1066, %v1332, 0
        %v1339 = vsel %vm1104, %v1334, 0
        %1341 = vmatpush.bf16.msra.mxu0 0
        %1342 = vmatpush.bf16.msra.mxu0 0
        %1343 = vmatpush.bf16.msra.mxu0 0
        %1344 = vmatpush.bf16.msra.mxu0 0
        %1345 = vmatpush.bf16.msra.mxu0 0
        %1346 = vmatpush.bf16.msra.mxu0 0
        %1347 = vmatpush.bf16.msra.mxu0 0
        %1348 = vmatpush.bf16.msra.mxu0 %v1339
        %1349 = vmatmul.bf16.gmra.mxu0 %v1336
        %v1350 = vpop.f32.mrf.mxu0
        %v1351 = vadd.f32 0.0, %v1350
        %v1352 = vpop.f32.mrf.mxu0
        %1353 = vdwg.mxu0
        %v1354 = vpack.c.bf16 %v1351, %v1351
        %v1355 = vld [vmem:[#allocation8 + $0xc] sm:$0xf]
        %v1357 = vsel %vm1066, %v1354, 0
        %v1360 = vsel %vm1104, %v1355, 0
        %1362 = vmatpush.bf16.msra.mxu0 0
        %1363 = vmatpush.bf16.msra.mxu0 0
        %1364 = vmatpush.bf16.msra.mxu0 0
        %1365 = vmatpush.bf16.msra.mxu0 0
        %1366 = vmatpush.bf16.msra.mxu0 0
        %1367 = vmatpush.bf16.msra.mxu0 0
        %1368 = vmatpush.bf16.msra.mxu0 0
        %1369 = vmatpush.bf16.msra.mxu0 %v1360
        %1370 = vmatmul.bf16.gmra.mxu0 %v1357
        %v1371 = vpop.f32.mrf.mxu0
        %v1372 = vadd.f32 0.0, %v1371
        %v1373 = vpop.f32.mrf.mxu0
        %1374 = vdwg.mxu0
        %v1375 = vadd.f32 %v1297, %v1372
        %v1376 = vadd.f32 %v948, %v1375
        %v1377 = vld [vmem:[#allocation10] sm:$0x1]
        %v1379 = vperm.slane %v1377, 0
        %v1381 = vadd.f32 %v1376, %v1379
        %v1382 = vsel %vm957, %v1381, 0.0
        %1383 = vadd.xlane.f32.xlu0 %v1382
        %v1384 = vpop.xlane.xlu0 %1383
        %v1385 = vmul.f32 %v1384, %v967
        %v1386 = vsub.f32 %v1381, %v1385
        %v1387 = vmul.f32 %v1386, %v1386
        %v1388 = vsel %vm957, %v1387, 0.0
        %1389 = vadd.xlane.f32.xlu0 %v1388
        %v1390 = vpop.xlane.xlu0 %1389
        %v1391 = vmul.f32 %v1390, 0.032258064
        %v1392 = vrsqrt.pop %v1391
        %v1393 = vmul.f32 %v1392, %v1391
        %v1394 = vmul.f32 %v1393, %v1392
        %v1395 = vmul.f32 0.5, %v1394
        %v1396 = vsub.f32 1.5, %v1395
        %v1397 = vmul.f32 %v1392, %v1396
        %v1398 = vmul.f32 %v1391, %v1397
        %vm1399 = vcmp.eq.f32.partialorder %v1391, inf
        %v1400 = vsel %vm1399, %v1391, %v1398
        %vm1401 = vcmp.eq.f32.partialorder %v1391, 0.0
        %v1402 = vand.u32 %v1391, 2147483648
        %v1403 = vsel %vm1401, %v1402, %v1400
        %v1404 = vadd.f32 %v1403, 1e-06
        %v1405 = vrcp.pop %v1404
        %v1406 = vperm.slane %v946, 1
        %v1407 = vmul.f32 %v1406, %v1386
        %v1408 = vmul.f32 %v1407, %v1405
        %v1409 = vperm.slane %v947, 1
        %v1410 = vadd.f32 %v1408, %v1409
        %v1411 = vpack.c.bf16 %v1410, %v1410
        %v1412 = vld [vmem:[#allocation11] sm:$0xf]
        %v1413 = vld [vmem:[#allocation11 + $0x4] sm:$0xf]
        %v1414 = vld [vmem:[#allocation11 + $0x8] sm:$0xf]
        %v1415 = vld [vmem:[#allocation11 + $0xc] sm:$0xf]
        %v1416 = vld [vmem:[#allocation13] sm:$0x1]
        %v1418 = vperm.slane %v1416, 0
        %v1424 = vunpack.c.l.b16 %v1412
        %v1425 = vunpack.c.l.b16 %v1413
        %v1426 = vunpack.c.l.b16 %v1414
        %v1427 = vunpack.c.l.b16 %v1415
        %v1428 = vpack.c.b16 %v1425, %v1424
        %v1429 = vpack.c.b16 %v1427, %v1426
        %v1433 = vsel %vm957, %v1411, 0
        %1435 = vmatpush.bf16.msra.mxu0 0
        %1436 = vmatpush.bf16.msra.mxu0 0
        %1437 = vmatpush.bf16.msra.mxu0 0
        %1438 = vmatpush.bf16.msra.mxu0 0
        %1439 = vmatpush.bf16.msra.mxu0 0
        %1440 = vmatpush.bf16.msra.mxu0 0
        %1441 = vmatpush.bf16.msra.mxu0 %v1429
        %1442 = vmatpush.bf16.msra.mxu0 %v1428
        %1443 = vmatmul.bf16.gmra.mxu0 %v1433
        %v1444 = vpop.f32.mrf.mxu0
        %v1445 = vadd.f32 %v1418, %v1444
        %v1446 = vpop.f32.mrf.mxu0
        %1447 = vdwg.mxu0
        %v1448 = vld [vmem:[%s936] sm:$0xff]
        %v1449 = vld [vmem:[%s936 + $0x8] sm:$0xff]
        %v1450 = vpack.c.bf16 %v1449, %v1448
        %v1451 = vld [vmem:[#allocation14] sm:$0xf]
        %v1452 = vld [vmem:[#allocation14 + $0x4] sm:$0xf]
        %v1453 = vld [vmem:[#allocation14 + $0x8] sm:$0xf]
        %v1454 = vld [vmem:[#allocation14 + $0xc] sm:$0xf]
        %v1455 = vld [vmem:[#allocation16] sm:$0x1]
        %v1457 = vperm.slane %v1455, 0
        %v1463 = vunpack.c.l.b16 %v1451
        %v1464 = vunpack.c.l.b16 %v1452
        %v1465 = vunpack.c.l.b16 %v1453
        %v1466 = vunpack.c.l.b16 %v1454
        %v1467 = vpack.c.b16 %v1464, %v1463
        %v1468 = vpack.c.b16 %v1466, %v1465
        %v1472 = vsel %vm957, %v1450, 0
        %1474 = vmatpush.bf16.msra.mxu0 0
        %1475 = vmatpush.bf16.msra.mxu0 0
        %1476 = vmatpush.bf16.msra.mxu0 0
        %1477 = vmatpush.bf16.msra.mxu0 0
        %1478 = vmatpush.bf16.msra.mxu0 0
        %1479 = vmatpush.bf16.msra.mxu0 0
        %1480 = vmatpush.bf16.msra.mxu0 %v1468
        %1481 = vmatpush.bf16.msra.mxu0 %v1467
        %1482 = vmatmul.bf16.gmra.mxu0 %v1472
        %v1483 = vpop.f32.mrf.mxu0
        %v1484 = vadd.f32 %v1457, %v1483
        %v1485 = vpop.f32.mrf.mxu0
        %v1486 = vadd.f32 %v1457, %v1485
        %1487 = vdwg.mxu0
        %v1488 = vld [vmem:[%s943] sm:$0xff]
        %v1489 = vpack.c.bf16 %v1445, %v1445
        %v1490 = vpack.c.bf16 %v1486, %v1484
        %v1492 = vsel %vm1066, %v1489, 0
        %v1495 = vsel %vm1066, %v1490, 0
        %1497 = vmatpush.bf16.xpose.msra.mxu0 0
        %1498 = vmatpush.bf16.xpose.msra.mxu0 0
        %1499 = vmatpush.bf16.xpose.msra.mxu0 0
        %1500 = vmatpush.bf16.xpose.msra.mxu0 0
        %1501 = vmatpush.bf16.xpose.msra.mxu0 0
        %1502 = vmatpush.bf16.xpose.msra.mxu0 0
        %1503 = vmatpush.bf16.xpose.msra.mxu0 0
        %1504 = vmatpush.bf16.xpose.msra.mxu0 %v1495
        %1505 = vmatmul.bf16.gmra.mxu0 %v1492
        %v1506 = vpop.f32.mrf.mxu0
        %v1507 = vadd.f32 %v1488, %v1506
        %v1508 = vpop.f32.mrf.mxu0
        %1509 = vdwg.mxu0
        %vm1510 = vcmask 130048
        %v1511 = vsel %vm1510, %v1507, -inf
        %1512 = vmax.xlane.f32.xlu0 %v1511
        %v1513 = vpop.xlane.xlu0 %1512
        %v1514 = vsub.f32 %v1507, %v1513
        %v1515 = vmul.f32 %v1514, 1.442695
        %v1516 = vpow.pop %v1515
        %v1517 = vsel %vm1510, %v1516, 0.0
        %1518 = vadd.xlane.f32.xlu0 %v1517
        %v1519 = vpop.xlane.xlu0 %1518
        %v1520 = vrcp.pop %v1519
        %v1521 = vmul.f32 %v1516, %v1520
        %v1522 = vpack.c.bf16 %v1521, %v1521
        %1524 = vrot.lane.b32.xlu0 %v1490, 96
        %v1525 = vpop.permute.xlu0 %1524
        %v1528 = vsel %vm1510, %v1522, 0
        %1530 = vmatpush.bf16.msra.mxu0 0
        %1531 = vmatpush.bf16.msra.mxu0 0
        %1532 = vmatpush.bf16.msra.mxu0 0
        %1533 = vmatpush.bf16.msra.mxu0 0
        %1534 = vmatpush.bf16.msra.mxu0 0
        %1535 = vmatpush.bf16.msra.mxu0 0
        %1536 = vmatpush.bf16.msra.mxu0 0
        %1537 = vmatpush.bf16.msra.mxu0 %v1525
        %1538 = vmatmul.bf16.gmra.mxu0 %v1528
        %v1539 = vpop.f32.mrf.mxu0
        %v1540 = vadd.f32 0.0, %v1539
        %v1541 = vpop.f32.mrf.mxu0
        %1542 = vdwg.mxu0
        %v1543 = vpack.c.bf16 %v1540, %v1540
        %v1544 = vld [vmem:[#allocation17] sm:$0xf]
        %1546 = vrot.lane.b32.xlu0 %v1489, 120
        %v1547 = vpop.permute.xlu0 %1546
        %1548 = vrot.lane.b32.xlu0 %v1490, 120
        %v1549 = vpop.permute.xlu0 %1548
        %v1551 = vsel %vm1066, %v1547, 0
        %v1554 = vsel %vm1066, %v1549, 0
        %1556 = vmatpush.bf16.xpose.msra.mxu0 0
        %1557 = vmatpush.bf16.xpose.msra.mxu0 0
        %1558 = vmatpush.bf16.xpose.msra.mxu0 0
        %1559 = vmatpush.bf16.xpose.msra.mxu0 0
        %1560 = vmatpush.bf16.xpose.msra.mxu0 0
        %1561 = vmatpush.bf16.xpose.msra.mxu0 0
        %1562 = vmatpush.bf16.xpose.msra.mxu0 0
        %1563 = vmatpush.bf16.xpose.msra.mxu0 %v1554
        %1564 = vmatmul.bf16.gmra.mxu0 %v1551
        %v1565 = vpop.f32.mrf.mxu0
        %v1566 = vadd.f32 %v1488, %v1565
        %v1567 = vpop.f32.mrf.mxu0
        %1568 = vdwg.mxu0
        %v1569 = vsel %vm1510, %v1566, -inf
        %1570 = vmax.xlane.f32.xlu0 %v1569
        %v1571 = vpop.xlane.xlu0 %1570
        %v1572 = vsub.f32 %v1566, %v1571
        %v1573 = vmul.f32 %v1572, 1.442695
        %v1574 = vpow.pop %v1573
        %v1575 = vsel %vm1510, %v1574, 0.0
        %1576 = vadd.xlane.f32.xlu0 %v1575
        %v1577 = vpop.xlane.xlu0 %1576
        %v1578 = vrcp.pop %v1577
        %v1579 = vmul.f32 %v1574, %v1578
        %v1580 = vpack.c.bf16 %v1579, %v1579
        %1581 = vrot.lane.b32.xlu0 %v1490, 88
        %v1582 = vpop.permute.xlu0 %1581
        %v1585 = vsel %vm1510, %v1580, 0
        %1587 = vmatpush.bf16.msra.mxu0 0
        %1588 = vmatpush.bf16.msra.mxu0 0
        %1589 = vmatpush.bf16.msra.mxu0 0
        %1590 = vmatpush.bf16.msra.mxu0 0
        %1591 = vmatpush.bf16.msra.mxu0 0
        %1592 = vmatpush.bf16.msra.mxu0 0
        %1593 = vmatpush.bf16.msra.mxu0 0
        %1594 = vmatpush.bf16.msra.mxu0 %v1582
        %1595 = vmatmul.bf16.gmra.mxu0 %v1585
        %v1596 = vpop.f32.mrf.mxu0
        %v1597 = vadd.f32 0.0, %v1596
        %v1598 = vpop.f32.mrf.mxu0
        %1599 = vdwg.mxu0
        %v1600 = vpack.c.bf16 %v1597, %v1597
        %v1601 = vld [vmem:[#allocation17 + $0x4] sm:$0xf]
        %v1603 = vsel %vm1066, %v1600, 0
        %v1606 = vsel %vm1104, %v1601, 0
        %1608 = vmatpush.bf16.msra.mxu0 0
        %1609 = vmatpush.bf16.msra.mxu0 0
        %1610 = vmatpush.bf16.msra.mxu0 0
        %1611 = vmatpush.bf16.msra.mxu0 0
        %1612 = vmatpush.bf16.msra.mxu0 0
        %1613 = vmatpush.bf16.msra.mxu0 0
        %1614 = vmatpush.bf16.msra.mxu0 0
        %1615 = vmatpush.bf16.msra.mxu0 %v1606
        %1616 = vmatmul.bf16.gmra.mxu0 %v1603
        %v1617 = vpop.f32.mrf.mxu0
        %v1618 = vadd.f32 0.0, %v1617
        %v1619 = vpop.f32.mrf.mxu0
        %1620 = vdwg.mxu0
        %v1622 = vsel %vm1066, %v1543, 0
        %v1625 = vsel %vm1104, %v1544, 0
        %1627 = vmatpush.bf16.msra.mxu0 0
        %1628 = vmatpush.bf16.msra.mxu0 0
        %1629 = vmatpush.bf16.msra.mxu0 0
        %1630 = vmatpush.bf16.msra.mxu0 0
        %1631 = vmatpush.bf16.msra.mxu0 0
        %1632 = vmatpush.bf16.msra.mxu0 0
        %1633 = vmatpush.bf16.msra.mxu0 0
        %1634 = vmatpush.bf16.msra.mxu0 %v1625
        %1635 = vmatmul.bf16.gmra.mxu0 %v1622
        %v1636 = vpop.f32.mrf.mxu0
        %v1637 = vadd.f32 %v1618, %v1636
        %v1638 = vpop.f32.mrf.mxu0
        %1639 = vdwg.mxu0
        %1640 = vrot.lane.b32.xlu0 %v1489, 112
        %v1641 = vpop.permute.xlu0 %1640
        %1642 = vrot.lane.b32.xlu0 %v1490, 112
        %v1643 = vpop.permute.xlu0 %1642
        %v1645 = vsel %vm1066, %v1641, 0
        %v1648 = vsel %vm1066, %v1643, 0
        %1650 = vmatpush.bf16.xpose.msra.mxu0 0
        %1651 = vmatpush.bf16.xpose.msra.mxu0 0
        %1652 = vmatpush.bf16.xpose.msra.mxu0 0
        %1653 = vmatpush.bf16.xpose.msra.mxu0 0
        %1654 = vmatpush.bf16.xpose.msra.mxu0 0
        %1655 = vmatpush.bf16.xpose.msra.mxu0 0
        %1656 = vmatpush.bf16.xpose.msra.mxu0 0
        %1657 = vmatpush.bf16.xpose.msra.mxu0 %v1648
        %1658 = vmatmul.bf16.gmra.mxu0 %v1645
        %v1659 = vpop.f32.mrf.mxu0
        %v1660 = vadd.f32 %v1488, %v1659
        %v1661 = vpop.f32.mrf.mxu0
        %1662 = vdwg.mxu0
        %v1663 = vsel %vm1510, %v1660, -inf
        %1664 = vmax.xlane.f32.xlu0 %v1663
        %v1665 = vpop.xlane.xlu0 %1664
        %v1666 = vsub.f32 %v1660, %v1665
        %v1667 = vmul.f32 %v1666, 1.442695
        %v1668 = vpow.pop %v1667
        %v1669 = vsel %vm1510, %v1668, 0.0
        %1670 = vadd.xlane.f32.xlu0 %v1669
        %v1671 = vpop.xlane.xlu0 %1670
        %v1672 = vrcp.pop %v1671
        %v1673 = vmul.f32 %v1668, %v1672
        %v1674 = vpack.c.bf16 %v1673, %v1673
        %1675 = vrot.lane.b32.xlu0 %v1490, 80
        %v1676 = vpop.permute.xlu0 %1675
        %v1679 = vsel %vm1510, %v1674, 0
        %1681 = vmatpush.bf16.msra.mxu0 0
        %1682 = vmatpush.bf16.msra.mxu0 0
        %1683 = vmatpush.bf16.msra.mxu0 0
        %1684 = vmatpush.bf16.msra.mxu0 0
        %1685 = vmatpush.bf16.msra.mxu0 0
        %1686 = vmatpush.bf16.msra.mxu0 0
        %1687 = vmatpush.bf16.msra.mxu0 0
        %1688 = vmatpush.bf16.msra.mxu0 %v1676
        %1689 = vmatmul.bf16.gmra.mxu0 %v1679
        %v1690 = vpop.f32.mrf.mxu0
        %v1691 = vadd.f32 0.0, %v1690
        %v1692 = vpop.f32.mrf.mxu0
        %1693 = vdwg.mxu0
        %v1694 = vpack.c.bf16 %v1691, %v1691
        %v1695 = vld [vmem:[#allocation17 + $0x8] sm:$0xf]
        %v1697 = vsel %vm1066, %v1694, 0
        %v1700 = vsel %vm1104, %v1695, 0
        %1702 = vmatpush.bf16.msra.mxu0 0
        %1703 = vmatpush.bf16.msra.mxu0 0
        %1704 = vmatpush.bf16.msra.mxu0 0
        %1705 = vmatpush.bf16.msra.mxu0 0
        %1706 = vmatpush.bf16.msra.mxu0 0
        %1707 = vmatpush.bf16.msra.mxu0 0
        %1708 = vmatpush.bf16.msra.mxu0 0
        %1709 = vmatpush.bf16.msra.mxu0 %v1700
        %1710 = vmatmul.bf16.gmra.mxu0 %v1697
        %v1711 = vpop.f32.mrf.mxu0
        %v1712 = vadd.f32 0.0, %v1711
        %v1713 = vpop.f32.mrf.mxu0
        %1714 = vdwg.mxu0
        %v1715 = vadd.f32 %v1637, %v1712
        %1716 = vrot.lane.b32.xlu0 %v1489, 104
        %v1717 = vpop.permute.xlu0 %1716
        %1718 = vrot.lane.b32.xlu0 %v1490, 104
        %v1719 = vpop.permute.xlu0 %1718
        %v1721 = vsel %vm1066, %v1717, 0
        %v1724 = vsel %vm1066, %v1719, 0
        %1726 = vmatpush.bf16.xpose.msra.mxu0 0
        %1727 = vmatpush.bf16.xpose.msra.mxu0 0
        %1728 = vmatpush.bf16.xpose.msra.mxu0 0
        %1729 = vmatpush.bf16.xpose.msra.mxu0 0
        %1730 = vmatpush.bf16.xpose.msra.mxu0 0
        %1731 = vmatpush.bf16.xpose.msra.mxu0 0
        %1732 = vmatpush.bf16.xpose.msra.mxu0 0
        %1733 = vmatpush.bf16.xpose.msra.mxu0 %v1724
        %1734 = vmatmul.bf16.gmra.mxu0 %v1721
        %v1735 = vpop.f32.mrf.mxu0
        %v1736 = vadd.f32 %v1488, %v1735
        %v1737 = vpop.f32.mrf.mxu0
        %1738 = vdwg.mxu0
        %v1739 = vsel %vm1510, %v1736, -inf
        %1740 = vmax.xlane.f32.xlu0 %v1739
        %v1741 = vpop.xlane.xlu0 %1740
        %v1742 = vsub.f32 %v1736, %v1741
        %v1743 = vmul.f32 %v1742, 1.442695
        %v1744 = vpow.pop %v1743
        %v1745 = vsel %vm1510, %v1744, 0.0
        %1746 = vadd.xlane.f32.xlu0 %v1745
        %v1747 = vpop.xlane.xlu0 %1746
        %v1748 = vrcp.pop %v1747
        %v1749 = vmul.f32 %v1744, %v1748
        %v1750 = vpack.c.bf16 %v1749, %v1749
        %1751 = vrot.lane.b32.xlu0 %v1490, 72
        %v1752 = vpop.permute.xlu0 %1751
        %v1755 = vsel %vm1510, %v1750, 0
        %1757 = vmatpush.bf16.msra.mxu0 0
        %1758 = vmatpush.bf16.msra.mxu0 0
        %1759 = vmatpush.bf16.msra.mxu0 0
        %1760 = vmatpush.bf16.msra.mxu0 0
        %1761 = vmatpush.bf16.msra.mxu0 0
        %1762 = vmatpush.bf16.msra.mxu0 0
        %1763 = vmatpush.bf16.msra.mxu0 0
        %1764 = vmatpush.bf16.msra.mxu0 %v1752
        %1765 = vmatmul.bf16.gmra.mxu0 %v1755
        %v1766 = vpop.f32.mrf.mxu0
        %v1767 = vadd.f32 0.0, %v1766
        %v1768 = vpop.f32.mrf.mxu0
        %1769 = vdwg.mxu0
        %v1770 = vpack.c.bf16 %v1767, %v1767
        %v1771 = vld [vmem:[#allocation17 + $0xc] sm:$0xf]
        %v1773 = vsel %vm1066, %v1770, 0
        %v1776 = vsel %vm1104, %v1771, 0
        %1778 = vmatpush.bf16.msra.mxu0 0
        %1779 = vmatpush.bf16.msra.mxu0 0
        %1780 = vmatpush.bf16.msra.mxu0 0
        %1781 = vmatpush.bf16.msra.mxu0 0
        %1782 = vmatpush.bf16.msra.mxu0 0
        %1783 = vmatpush.bf16.msra.mxu0 0
        %1784 = vmatpush.bf16.msra.mxu0 0
        %1785 = vmatpush.bf16.msra.mxu0 %v1776
        %1786 = vmatmul.bf16.gmra.mxu0 %v1773
        %v1787 = vpop.f32.mrf.mxu0
        %v1788 = vadd.f32 0.0, %v1787
        %v1789 = vpop.f32.mrf.mxu0
        %1790 = vdwg.mxu0
        %v1791 = vadd.f32 %v1715, %v1788
        %v1792 = vadd.f32 %v1381, %v1791
        %v1793 = vld [vmem:[#allocation19] sm:$0x1]
        %v1795 = vperm.slane %v1793, 0
        %v1797 = vadd.f32 %v1792, %v1795
        %v1798 = vsel %vm957, %v1797, 0.0
        %1799 = vadd.xlane.f32.xlu0 %v1798
        %v1800 = vpop.xlane.xlu0 %1799
        %v1801 = vmul.f32 %v1800, %v967
        %v1802 = vsub.f32 %v1797, %v1801
        %v1803 = vmul.f32 %v1802, %v1802
        %v1804 = vsel %vm957, %v1803, 0.0
        %1805 = vadd.xlane.f32.xlu0 %v1804
        %v1806 = vpop.xlane.xlu0 %1805
        %v1807 = vmul.f32 %v1806, 0.032258064
        %v1808 = vrsqrt.pop %v1807
        %v1809 = vmul.f32 %v1808, %v1807
        %v1810 = vmul.f32 %v1809, %v1808
        %v1811 = vmul.f32 0.5, %v1810
        %v1812 = vsub.f32 1.5, %v1811
        %v1813 = vmul.f32 %v1808, %v1812
        %v1814 = vmul.f32 %v1807, %v1813
        %vm1815 = vcmp.eq.f32.partialorder %v1807, inf
        %v1816 = vsel %vm1815, %v1807, %v1814
        %vm1817 = vcmp.eq.f32.partialorder %v1807, 0.0
        %v1818 = vand.u32 %v1807, 2147483648
        %v1819 = vsel %vm1817, %v1818, %v1816
        %v1820 = vadd.f32 %v1819, 1e-06
        %v1821 = vrcp.pop %v1820
        %v1822 = vperm.slane %v946, 2
        %v1823 = vmul.f32 %v1822, %v1802
        %v1824 = vmul.f32 %v1823, %v1821
        %v1825 = vperm.slane %v947, 2
        %v1826 = vadd.f32 %v1824, %v1825
        %v1827 = vpack.c.bf16 %v1826, %v1826
        %v1828 = vld [vmem:[#allocation20] sm:$0xf]
        %v1829 = vld [vmem:[#allocation20 + $0x4] sm:$0xf]
        %v1830 = vld [vmem:[#allocation20 + $0x8] sm:$0xf]
        %v1831 = vld [vmem:[#allocation20 + $0xc] sm:$0xf]
        %v1832 = vld [vmem:[#allocation22] sm:$0x1]
        %v1834 = vperm.slane %v1832, 0
        %v1840 = vunpack.c.l.b16 %v1828
        %v1841 = vunpack.c.l.b16 %v1829
        %v1842 = vunpack.c.l.b16 %v1830
        %v1843 = vunpack.c.l.b16 %v1831
        %v1844 = vpack.c.b16 %v1841, %v1840
        %v1845 = vpack.c.b16 %v1843, %v1842
        %v1849 = vsel %vm957, %v1827, 0
        %1851 = vmatpush.bf16.msra.mxu0 0
        %1852 = vmatpush.bf16.msra.mxu0 0
        %1853 = vmatpush.bf16.msra.mxu0 0
        %1854 = vmatpush.bf16.msra.mxu0 0
        %1855 = vmatpush.bf16.msra.mxu0 0
        %1856 = vmatpush.bf16.msra.mxu0 0
        %1857 = vmatpush.bf16.msra.mxu0 %v1845
        %1858 = vmatpush.bf16.msra.mxu0 %v1844
        %1859 = vmatmul.bf16.gmra.mxu0 %v1849
        %v1860 = vpop.f32.mrf.mxu0
        %v1861 = vadd.f32 %v1834, %v1860
        %v1862 = vpop.f32.mrf.mxu0
        %1863 = vdwg.mxu0
        %v1864 = vmax.f32 %v1861, 0.0
        %v1865 = vpack.c.bf16 %v1864, %v1864
        %v1866 = vld [vmem:[%s17] sm:$0xf]
        %v1867 = vld [vmem:[%s17 + $0x4] sm:$0xf]
        %v1868 = vld [vmem:[%s17 + $0x8] sm:$0xf]
        %v1869 = vld [vmem:[%s17 + $0xc] sm:$0xf]
        %v1870 = vld [vmem:[%s17 + $0x10] sm:$0xf]
        %v1871 = vld [vmem:[%s17 + $0x14] sm:$0xf]
        %v1872 = vld [vmem:[%s17 + $0x18] sm:$0xf]
        %v1873 = vld [vmem:[%s17 + $0x1c] sm:$0xf]
        %v1874 = vld [vmem:[%s17 + $0x20] sm:$0xf]
        %v1875 = vld [vmem:[%s17 + $0x24] sm:$0xf]
        %v1876 = vld [vmem:[%s17 + $0x28] sm:$0xf]
        %v1877 = vld [vmem:[%s17 + $0x2c] sm:$0xf]
        %v1878 = vld [vmem:[%s17 + $0x30] sm:$0xf]
        %v1879 = vld [vmem:[%s17 + $0x34] sm:$0xf]
        %v1880 = vld [vmem:[%s17 + $0x38] sm:$0xf]
        %v1881 = vld [vmem:[%s17 + $0x3c] sm:$0xf]
        %v1882 = vld [vmem:[%s18] sm:$0x1]
        %v1884 = vperm.slane %v1882, 0
        %v1902 = vunpack.c.l.b16 %v1866
        %v1903 = vunpack.c.l.b16 %v1867
        %v1904 = vunpack.c.l.b16 %v1868
        %v1905 = vunpack.c.l.b16 %v1869
        %v1906 = vunpack.c.l.b16 %v1870
        %v1907 = vunpack.c.l.b16 %v1871
        %v1908 = vunpack.c.l.b16 %v1872
        %v1909 = vunpack.c.l.b16 %v1873
        %v1910 = vunpack.c.l.b16 %v1874
        %v1911 = vunpack.c.l.b16 %v1875
        %v1912 = vunpack.c.l.b16 %v1876
        %v1913 = vunpack.c.l.b16 %v1877
        %v1914 = vunpack.c.l.b16 %v1878
        %v1915 = vunpack.c.l.b16 %v1879
        %v1916 = vunpack.c.l.b16 %v1880
        %v1917 = vunpack.c.l.b16 %v1881
        %v1918 = vpack.c.b16 %v1903, %v1902
        %v1919 = vpack.c.b16 %v1905, %v1904
        %v1920 = vpack.c.b16 %v1907, %v1906
        %v1921 = vpack.c.b16 %v1909, %v1908
        %v1922 = vpack.c.b16 %v1911, %v1910
        %v1923 = vpack.c.b16 %v1913, %v1912
        %v1924 = vpack.c.b16 %v1915, %v1914
        %v1925 = vpack.c.b16 %v1917, %v1916
        %1934 = vmatpush.bf16.msra.mxu0 %v1925
        %1935 = vmatpush.bf16.msra.mxu0 %v1924
        %1936 = vmatpush.bf16.msra.mxu0 %v1923
        %1937 = vmatpush.bf16.msra.mxu0 %v1922
        %1938 = vmatpush.bf16.msra.mxu0 %v1921
        %1939 = vmatpush.bf16.msra.mxu0 %v1920
        %1940 = vmatpush.bf16.msra.mxu0 %v1919
        %1941 = vmatpush.bf16.msra.mxu0 %v1918
        %1942 = vmatmul.bf16.gmra.mxu0 %v1865
        %v1943 = vpop.f32.mrf.mxu0
        %v1944 = vadd.f32 %v1884, %v1943
        %v1945 = vpop.f32.mrf.mxu0
        %1946 = vdwg.mxu0
        %v1947 = vadd.f32 %v1797, %v1944
        %1948 = vst.msk [vmem:[%s927] sm:$0xff] %vm957, %v1947
        %s1949 = sand.u32 %s523, 1
        %s1950 = scalar_lea.sflag [#allocation4], %s1949
        %s1951 = sand.u32 %s523, 1
        %s1952 = smul.addr %s1951, 8
        %s1953 = scalar_lea.vmem [#allocation26], %s1952
        // Predicated region
        $region165: #{tpu_custom_call.1} parent=103 // pred_check
          %p1954 = pneg %p533
        $region166: #{tpu_custom_call.1} parent=103 // pred_check_branch
          %1956 = sbr.rel (%p1954) target = $region168
        $region167: #{tpu_custom_call.1} parent=103 // pred_region
          %1958 = vsyncadd %s1950, 0
          %s1959 = sadd.s32 %s48, %s47
          %s1960 = smul.addr %s1959, 8
          %s1961 = scalar_lea.hbm %s21, %s1960
          %s1963 = sshll.u32 %s1953, 4
          %s1964 = int_to_ptr.vmem [resolvable:$true] %s1963
          %s1965 = sshll.u32 %s1961, 4
          %s1966 = int_to_ptr.hbm [resolvable:$true] %s1965
          %1968 = dma.vmem_to_hbm [thread:$0]  %s1964, 128, %s1966, %s1950
        $region168: #{tpu_custom_call.1} parent=103 // pred_fallthru
          _
      $region104: #{tpu_custom_call.1} parent=5 // pred_fallthru
        _
      %p1969 = scmp.le.s32.totalorder 2, %s38
      // Predicated region
      $region169: #{tpu_custom_call.1} parent=5 // pred_check
        %p1970 = pneg %p1969
      $region170: #{tpu_custom_call.1} parent=5 // pred_check_branch
        %1972 = sbr.rel (%p1970) target = $region172
      $region171: #{tpu_custom_call.1} parent=5 // pred_region
        %s1973 = ssub.s32 %s38, 2
        // Predicated region
        $region173: #{tpu_custom_call.1} parent=171 // pred_check
          %p1974 = pneg %p539
        $region174: #{tpu_custom_call.1} parent=171 // pred_check_branch
          %1976 = sbr.rel (%p1974) target = $region176
        $region175: #{tpu_custom_call.1} parent=171 // pred_region
          %s1977 = sand.u32 %s524, 1
          %s1978 = scalar_lea.sflag [#allocation4], %s1977
          %s1979 = sand.u32 %s524, 1
          %s1980 = smul.addr %s1979, 8
          %s1981 = scalar_lea.vmem [#allocation26], %s1980
          %1983 = dma.done %s1978, 128
        $region176: #{tpu_custom_call.1} parent=171 // pred_fallthru
          _
      $region172: #{tpu_custom_call.1} parent=5 // pred_fallthru
        _
    $region6: #{tpu_custom_call.1} parent=1 // loop_footer
      %s42 = sadd.s32 1, %s38
    $region7: #{tpu_custom_call.1} parent=1 // loop_footer_branch
      %37 = sbr.rel target = $region3
    $region8: #{tpu_custom_call.1} parent=1 // loop_exit
      _
    %1984 = vsyncpa [#allocation3], 1
    %s1985 = scalar_lea.sflag [#allocation3], 1
    %1986 = vsyncpa %s1985, 1
    %1987 = vsyncpa [#allocation6], 1
    %1988 = vsyncpa [#allocation9], 1
    %1989 = vsyncpa [#allocation12], 1
    %1990 = vsyncpa [#allocation15], 1
    %1991 = vsyncpa [#allocation18], 1
    %1992 = vsyncpa [#allocation21], 1
    %1993 = vsyncpa [#allocation24], 1
    %1994 = vsyncpa [#allocation4], 1
    %s1995 = scalar_lea.sflag [#allocation4], 1
    %1996 = vsyncpa %s1995, 1

// kernel: tpu_custom_call.1
$region0: #{tpu_custom_call.1}
  #allocation0 [shape = 'u32[]', space=smem, size = 0x4, offset = 0x4, fixed_abs, tag = 'smem constant byte address 0x4 - core index']
  #allocation1 [shape = 'u32[72,128]{1,0:T(1,128)}', space=vmem, size = 0x9000, scoped, tag = 'internal scratch']
  %s0 = inlined_call_operand.vmem [shape: f32[2,8,32], index: 0, kind: input, shape index: {}]
  %s1 = inlined_call_operand.vmem [shape: f32[2,16,32], index: 1, kind: input, shape index: {}]
  %s2 = inlined_call_operand.vmem [shape: f32[2,8,16], index: 2, kind: input, shape index: {}]
  %s3 = inlined_call_operand.vmem [shape: bf16[32,32], index: 3, kind: input, shape index: {}]
  %s4 = inlined_call_operand.hbm [shape: f32[1,32], index: 4, kind: input, shape index: {}]
  %s5 = inlined_call_operand.hbm [shape: bf16[32,64], index: 5, kind: input, shape index: {}]
  %s6 = inlined_call_operand.hbm [shape: f32[1,64], index: 6, kind: input, shape index: {}]
  %s7 = inlined_call_operand.hbm [shape: bf16[32,32], index: 7, kind: input, shape index: {}]
  %s8 = inlined_call_operand.hbm [shape: f32[1,32], index: 8, kind: input, shape index: {}]
  %s9 = inlined_call_operand.hbm [shape: bf16[32,32], index: 9, kind: input, shape index: {}]
  %s10 = inlined_call_operand.hbm [shape: f32[1,32], index: 10, kind: input, shape index: {}]
  %s11 = inlined_call_operand.hbm [shape: bf16[32,64], index: 11, kind: input, shape index: {}]
  %s12 = inlined_call_operand.hbm [shape: f32[1,64], index: 12, kind: input, shape index: {}]
  %s13 = inlined_call_operand.hbm [shape: bf16[32,32], index: 13, kind: input, shape index: {}]
  %s14 = inlined_call_operand.hbm [shape: f32[1,32], index: 14, kind: input, shape index: {}]
  %s15 = inlined_call_operand.hbm [shape: bf16[32,128], index: 15, kind: input, shape index: {}]
  %s16 = inlined_call_operand.hbm [shape: f32[1,128], index: 16, kind: input, shape index: {}]
  %s17 = inlined_call_operand.vmem [shape: bf16[128,32], index: 17, kind: input, shape index: {}]
  %s18 = inlined_call_operand.vmem [shape: f32[1,32], index: 18, kind: input, shape index: {}]
  %s19 = inlined_call_operand.hbm [shape: f32[3,32], index: 19, kind: input, shape index: {}]
  %s20 = inlined_call_operand.hbm [shape: f32[3,32], index: 20, kind: input, shape index: {}]
  %s21 = inlined_call_operand.hbm [shape: f32[2,8,32], index: 21, kind: output, shape index: {}]
  %s22 = sld [smem:[#allocation0]]
  $region177: #{tpu_custom_call.1} parent=0
    _
  %s24 = ssub.s32 1, %s22
  %s25 = scalar_select 0, %s24, %s22
  $region1: #{tpu_custom_call.1} parent=0
    #allocation2 [shape = 'u8[512]{0}', space=vmem, size = 0x400, scoped, tag = 'input window, operand 4, single buffered']
    #allocation3 [shape = 's32[2]{0}', space=sflag, size = 0x8, scoped, tag = 'scoped memory for tpu_custom_call.1']
    #allocation4 [shape = 's32[2]{0}', space=sflag, size = 0x8, scoped, tag = 'scoped memory for tpu_custom_call.1']
    #allocation5 [shape = 'u8[8192]{0}', space=vmem, size = 0x2000, scoped, tag = 'input window, operand 5, single buffered']
    #allocation6 [shape = 's32[1]{0}', space=sflag, size = 0x4, scoped, tag = 'scoped memory for tpu_custom_call.1']
    #allocation7 [shape = 'u8[512]{0}', space=vmem, size = 0x400, scoped, tag = 'input window, operand 6, single buffered']
    #allocation8 [shape = 'u8[8192]{0}', space=vmem, size = 0x2000, scoped, tag = 'input window, operand 7, single buffered']
    #allocation9 [shape = 's32[1]{0}', space=sflag, size = 0x4, scoped, tag = 'scoped memory for tpu_custom_call.1']
    #allocation10 [shape = 'u8[512]{0}', space=vmem, size = 0x400, scoped, tag = 'input window, operand 8, single buffered']
    #allocation11 [shape = 'u8[8192]{0}', space=vmem, size = 0x2000, scoped, tag = 'input window, operand 9, single buffered']
    #allocation12 [shape = 's32[1]{0}', space=sflag, size = 0x4, scoped, tag = 'scoped memory for tpu_custom_call.1']
    #allocation13 [shape = 'u8[512]{0}', space=vmem, size = 0x400, scoped, tag = 'input window, operand 10, single buffered']
    #allocation14 [shape = 'u8[8192]{0}', space=vmem, size = 0x2000, scoped, tag = 'input window, operand 11, single buffered']
    #allocation15 [shape = 's32[1]{0}', space=sflag, size = 0x4, scoped, tag = 'scoped memory for tpu_custom_call.1']
    #allocation16 [shape = 'u8[512]{0}', space=vmem, size = 0x400, scoped, tag = 'input window, operand 12, single buffered']
    #allocation17 [shape = 'u8[8192]{0}', space=vmem, size = 0x2000, scoped, tag = 'input window, operand 13, single buffered']
    #allocation18 [shape = 's32[1]{0}', space=sflag, size = 0x4, scoped, tag = 'scoped memory for tpu_custom_call.1']
    #allocation19 [shape = 'u8[512]{0}', space=vmem, size = 0x400, scoped, tag = 'input window, operand 14, single buffered']
    #allocation20 [shape = 'u8[8192]{0}', space=vmem, size = 0x2000, scoped, tag = 'input window, operand 15, single buffered']
    #allocation21 [shape = 's32[1]{0}', space=sflag, size = 0x4, scoped, tag = 'scoped memory for tpu_custom_call.1']
    #allocation22 [shape = 'u8[512]{0}', space=vmem, size = 0x400, scoped, tag = 'input window, operand 16, single buffered']
    #allocation23 [shape = 'u8[2048]{0}', space=vmem, size = 0x800, scoped, tag = 'input window, operand 19, single buffered']
    #allocation24 [shape = 's32[1]{0}', space=sflag, size = 0x4, scoped, tag = 'scoped memory for tpu_custom_call.1']
    #allocation25 [shape = 'u8[2048]{0}', space=vmem, size = 0x800, scoped, tag = 'input window, operand 20, single buffered']
    #allocation26 [shape = 'u8[8192]{0}', space=vmem, size = 0x2000, scoped, tag = 'output window, operand 0']
    %26 = vsyncpa [#allocation3], 0
    %27 = vsyncpa [#allocation6], 0
    %28 = vsyncpa [#allocation9], 0
    %29 = vsyncpa [#allocation12], 0
    %30 = vsyncpa [#allocation15], 0
    %31 = vsyncpa [#allocation18], 0
    %32 = vsyncpa [#allocation21], 0
    %33 = vsyncpa [#allocation24], 0
    %34 = vsyncpa [#allocation4], 0
    %s35 = scalar_lea.sflag [#allocation4], 1
    %36 = vsyncpa %s35, 0
    loop: start=0, step=1, limit=4
    $region2: #{tpu_custom_call.1} parent=1 // loop_pre_header
      _
    $region3: #{tpu_custom_call.1} parent=1 // loop_header
      %s38 = sphi 0, %s42
      %p39 = scmp.ge.s32.totalorder %s38, 4
      %s45 = sphi 0, %s57
      %s46 = sphi 0, %s53
      %s47 = sphi 0, %s45
      %s48 = sphi 0, %s46
      %s49 = sphi 0, %s47
      %s50 = sphi 0, %s48
      %s60 = sphi 0, %s62
      %s63 = sphi 0, %s60
      %s64 = sphi 0, %s63
      %s80 = sphi 0, %s64
      %s86 = sphi 0, %s88
      %s89 = sphi 0, %s86
      %s90 = sphi 0, %s89
      %s106 = sphi 0, %s90
      %s114 = sphi 0, %s116
      %s117 = sphi 0, %s114
      %s118 = sphi 0, %s117
      %s134 = sphi 0, %s118
      %s138 = sphi 0, %s138
      %s140 = sphi 0, %s138
      %s141 = sphi 0, %s140
      %s155 = sphi 0, %s141
      %s159 = sphi 0, %s159
      %s161 = sphi 0, %s159
      %s162 = sphi 0, %s161
      %s176 = sphi 0, %s162
      %s180 = sphi 0, %s180
      %s182 = sphi 0, %s180
      %s183 = sphi 0, %s182
      %s197 = sphi 0, %s183
      %s201 = sphi 0, %s201
      %s203 = sphi 0, %s201
      %s204 = sphi 0, %s203
      %s218 = sphi 0, %s204
      %s222 = sphi 0, %s222
      %s224 = sphi 0, %s222
      %s225 = sphi 0, %s224
      %s239 = sphi 0, %s225
      %s243 = sphi 0, %s243
      %s245 = sphi 0, %s243
      %s246 = sphi 0, %s245
      %s260 = sphi 0, %s246
      %s264 = sphi 0, %s264
      %s266 = sphi 0, %s264
      %s267 = sphi 0, %s266
      %s281 = sphi 0, %s267
      %s285 = sphi 0, %s285
      %s287 = sphi 0, %s285
      %s288 = sphi 0, %s287
      %s302 = sphi 0, %s288
      %s306 = sphi 0, %s306
      %s308 = sphi 0, %s306
      %s309 = sphi 0, %s308
      %s323 = sphi 0, %s309
      %s327 = sphi 0, %s327
      %s329 = sphi 0, %s327
      %s330 = sphi 0, %s329
      %s344 = sphi 0, %s330
      %s348 = sphi 0, %s348
      %s350 = sphi 0, %s348
      %s351 = sphi 0, %s350
      %s365 = sphi 0, %s351
      %s369 = sphi 0, %s369
      %s371 = sphi 0, %s369
      %s372 = sphi 0, %s371
      %s386 = sphi 0, %s372
      %s390 = sphi 0, %s390
      %s392 = sphi 0, %s390
      %s393 = sphi 0, %s392
      %s407 = sphi 0, %s393
      %s411 = sphi 0, %s411
      %s413 = sphi 0, %s411
      %s414 = sphi 0, %s413
      %s428 = sphi 0, %s414
      %s432 = sphi 0, %s432
      %s434 = sphi 0, %s432
      %s435 = sphi 0, %s434
      %s449 = sphi 0, %s435
      %s453 = sphi 0, %s453
      %s455 = sphi 0, %s453
      %s456 = sphi 0, %s455
      %s470 = sphi 0, %s456
      %s474 = sphi 0, %s474
      %s476 = sphi 0, %s474
      %s477 = sphi 0, %s476
      %s491 = sphi 0, %s477
      %s495 = sphi 0, %s495
      %s497 = sphi 0, %s495
      %s498 = sphi 0, %s497
      %s512 = sphi 0, %s498
      %s520 = sphi 0, %s522
      %s523 = sphi 0, %s520
      %s524 = sphi 0, %s523
      %s540 = sphi 0, %s524
    $region4: #{tpu_custom_call.1} parent=1 // loop_header_branch
      %41 = sbr.rel (%p39) target = $region8
    $region5: #{tpu_custom_call.1} parent=1 // loop_body
      %s43 = ssub.s32 %s38, 1
      %s44 = ssub.s32 %s38, 2
      %s51 = sadd.s32 1, %s46
      %p52 = scmp.ge.s32.totalorder %s51, 1
      %s53 = scalar_select %p52, 0, %s51
      %s54 = sadd.s32 1, %s45
      %s55 = scalar_select %p52, %s54, %s45
      %p56 = scmp.ge.s32.totalorder %s55, 2
      %s57 = scalar_select %p56, 0, %s55
      %s58 = ssub.s32 %s45, %s57
      %p59 = scmp.eq.s32.totalorder %s58, 0
      %s61 = sadd.s32 %s60, 1
      %s62 = scalar_select %p59, %s60, %s61
      %p65 = pneg %p59
      %p66 = scmp.eq.s32.totalorder %s38, 1
      %p67 = por %p65, %p66
      %p68 = scmp.ne.s32.totalorder %s60, %s63
      %p69 = scmp.eq.s32.totalorder %s38, 0
      %p70 = por %p68, %p69
      %p71 = scmp.ne.s32.totalorder %s60, %s63
      %p72 = scmp.eq.s32.totalorder %s43, 1
      %p73 = por %p71, %p72
      %p74 = scmp.ne.s32.totalorder %s63, %s64
      %p75 = scmp.eq.s32.totalorder %s43, 0
      %p76 = por %p74, %p75
      %p77 = scmp.ne.s32.totalorder %s63, %s64
      %p78 = scmp.eq.s32.totalorder %s44, 1
      %p79 = por %p77, %p78
      %p81 = scmp.ne.s32.totalorder %s64, %s80
      %p82 = scmp.eq.s32.totalorder %s44, 0
      %p83 = por %p81, %p82
      %s84 = ssub.s32 %s45, %s57
      %p85 = scmp.eq.s32.totalorder %s84, 0
      %s87 = sadd.s32 %s86, 1
      %s88 = scalar_select %p85, %s86, %s87
      %p91 = pneg %p85
      %p92 = scmp.eq.s32.totalorder %s38, 1
      %p93 = por %p91, %p92
      %p94 = scmp.ne.s32.totalorder %s86, %s89
      %p95 = scmp.eq.s32.totalorder %s38, 0
      %p96 = por %p94, %p95
      %p97 = scmp.ne.s32.totalorder %s86, %s89
      %p98 = scmp.eq.s32.totalorder %s43, 1
      %p99 = por %p97, %p98
      %p100 = scmp.ne.s32.totalorder %s89, %s90
      %p101 = scmp.eq.s32.totalorder %s43, 0
      %p102 = por %p100, %p101
      %p103 = scmp.ne.s32.totalorder %s89, %s90
      %p104 = scmp.eq.s32.totalorder %s44, 1
      %p105 = por %p103, %p104
      %p107 = scmp.ne.s32.totalorder %s90, %s106
      %p108 = scmp.eq.s32.totalorder %s44, 0
      %p109 = por %p107, %p108
      %s110 = ssub.s32 %s45, %s57
      %s111 = ssub.s32 %s46, %s53
      %s112 = sor.u32 %s110, %s111
      %p113 = scmp.eq.s32.totalorder %s112, 0
      %s115 = sadd.s32 %s114, 1
      %s116 = scalar_select %p113, %s114, %s115
      %p119 = pneg %p113
      %p120 = scmp.eq.s32.totalorder %s38, 1
      %p121 = por %p119, %p120
      %p122 = scmp.ne.s32.totalorder %s114, %s117
      %p123 = scmp.eq.s32.totalorder %s38, 0
      %p124 = por %p122, %p123
      %p125 = scmp.ne.s32.totalorder %s114, %s117
      %p126 = scmp.eq.s32.totalorder %s43, 1
      %p127 = por %p125, %p126
      %p128 = scmp.ne.s32.totalorder %s117, %s118
      %p129 = scmp.eq.s32.totalorder %s43, 0
      %p130 = por %p128, %p129
      %p131 = scmp.ne.s32.totalorder %s117, %s118
      %p132 = scmp.eq.s32.totalorder %s44, 1
      %p133 = por %p131, %p132
      %p135 = scmp.ne.s32.totalorder %s118, %s134
      %p136 = scmp.eq.s32.totalorder %s44, 0
      %p137 = por %p135, %p136
      %s139 = sadd.s32 %s138, 1
      %p142 = scmp.eq.s32.totalorder %s38, 1
      %p143 = scmp.ne.s32.totalorder %s138, %s140
      %p144 = scmp.eq.s32.totalorder %s38, 0
      %p145 = por %p143, %p144
      %p146 = scmp.ne.s32.totalorder %s138, %s140
      %p147 = scmp.eq.s32.totalorder %s43, 1
      %p148 = por %p146, %p147
      %p149 = scmp.ne.s32.totalorder %s140, %s141
      %p150 = scmp.eq.s32.totalorder %s43, 0
      %p151 = por %p149, %p150
      %p152 = scmp.ne.s32.totalorder %s140, %s141
      %p153 = scmp.eq.s32.totalorder %s44, 1
      %p154 = por %p152, %p153
      %p156 = scmp.ne.s32.totalorder %s141, %s155
      %p157 = scmp.eq.s32.totalorder %s44, 0
      %p158 = por %p156, %p157
      %s160 = sadd.s32 %s159, 1
      %p163 = scmp.eq.s32.totalorder %s38, 1
      %p164 = scmp.ne.s32.totalorder %s159, %s161
      %p165 = scmp.eq.s32.totalorder %s38, 0
      %p166 = por %p164, %p165
      %p167 = scmp.ne.s32.totalorder %s159, %s161
      %p168 = scmp.eq.s32.totalorder %s43, 1
      %p169 = por %p167, %p168
      %p170 = scmp.ne.s32.totalorder %s161, %s162
      %p171 = scmp.eq.s32.totalorder %s43, 0
      %p172 = por %p170, %p171
      %p173 = scmp.ne.s32.totalorder %s161, %s162
      %p174 = scmp.eq.s32.totalorder %s44, 1
      %p175 = por %p173, %p174
      %p177 = scmp.ne.s32.totalorder %s162, %s176
      %p178 = scmp.eq.s32.totalorder %s44, 0
      %p179 = por %p177, %p178
      %s181 = sadd.s32 %s180, 1
      %p184 = scmp.eq.s32.totalorder %s38, 1
      %p185 = scmp.ne.s32.totalorder %s180, %s182
      %p186 = scmp.eq.s32.totalorder %s38, 0
      %p187 = por %p185, %p186
      %p188 = scmp.ne.s32.totalorder %s180, %s182
      %p189 = scmp.eq.s32.totalorder %s43, 1
      %p190 = por %p188, %p189
      %p191 = scmp.ne.s32.totalorder %s182, %s183
      %p192 = scmp.eq.s32.totalorder %s43, 0
      %p193 = por %p191, %p192
      %p194 = scmp.ne.s32.totalorder %s182, %s183
      %p195 = scmp.eq.s32.totalorder %s44, 1
      %p196 = por %p194, %p195
      %p198 = scmp.ne.s32.totalorder %s183, %s197
      %p199 = scmp.eq.s32.totalorder %s44, 0
      %p200 = por %p198, %p199
      %s202 = sadd.s32 %s201, 1
      %p205 = scmp.eq.s32.totalorder %s38, 1
      %p206 = scmp.ne.s32.totalorder %s201, %s203
      %p207 = scmp.eq.s32.totalorder %s38, 0
      %p208 = por %p206, %p207
      %p209 = scmp.ne.s32.totalorder %s201, %s203
      %p210 = scmp.eq.s32.totalorder %s43, 1
      %p211 = por %p209, %p210
      %p212 = scmp.ne.s32.totalorder %s203, %s204
      %p213 = scmp.eq.s32.totalorder %s43, 0
      %p214 = por %p212, %p213
      %p215 = scmp.ne.s32.totalorder %s203, %s204
      %p216 = scmp.eq.s32.totalorder %s44, 1
      %p217 = por %p215, %p216
      %p219 = scmp.ne.s32.totalorder %s204, %s218
      %p220 = scmp.eq.s32.totalorder %s44, 0
      %p221 = por %p219, %p220
      %s223 = sadd.s32 %s222, 1
      %p226 = scmp.eq.s32.totalorder %s38, 1
      %p227 = scmp.ne.s32.totalorder %s222, %s224
      %p228 = scmp.eq.s32.totalorder %s38, 0
      %p229 = por %p227, %p228
      %p230 = scmp.ne.s32.totalorder %s222, %s224
      %p231 = scmp.eq.s32.totalorder %s43, 1
      %p232 = por %p230, %p231
      %p233 = scmp.ne.s32.totalorder %s224, %s225
      %p234 = scmp.eq.s32.totalorder %s43, 0
      %p235 = por %p233, %p234
      %p236 = scmp.ne.s32.totalorder %s224, %s225
      %p237 = scmp.eq.s32.totalorder %s44, 1
      %p238 = por %p236, %p237
      %p240 = scmp.ne.s32.totalorder %s225, %s239
      %p241 = scmp.eq.s32.totalorder %s44, 0
      %p242 = por %p240, %p241
      %s244 = sadd.s32 %s243, 1
      %p247 = scmp.eq.s32.totalorder %s38, 1
      %p248 = scmp.ne.s32.totalorder %s243, %s245
      %p249 = scmp.eq.s32.totalorder %s38, 0
      %p250 = por %p248, %p249
      %p251 = scmp.ne.s32.totalorder %s243, %s245
      %p252 = scmp.eq.s32.totalorder %s43, 1
      %p253 = por %p251, %p252
      %p254 = scmp.ne.s32.totalorder %s245, %s246
      %p255 = scmp.eq.s32.totalorder %s43, 0
      %p256 = por %p254, %p255
      %p257 = scmp.ne.s32.totalorder %s245, %s246
      %p258 = scmp.eq.s32.totalorder %s44, 1
      %p259 = por %p257, %p258
      %p261 = scmp.ne.s32.totalorder %s246, %s260
      %p262 = scmp.eq.s32.totalorder %s44, 0
      %p263 = por %p261, %p262
      %s265 = sadd.s32 %s264, 1
      %p268 = scmp.eq.s32.totalorder %s38, 1
      %p269 = scmp.ne.s32.totalorder %s264, %s266
      %p270 = scmp.eq.s32.totalorder %s38, 0
      %p271 = por %p269, %p270
      %p272 = scmp.ne.s32.totalorder %s264, %s266
      %p273 = scmp.eq.s32.totalorder %s43, 1
      %p274 = por %p272, %p273
      %p275 = scmp.ne.s32.totalorder %s266, %s267
      %p276 = scmp.eq.s32.totalorder %s43, 0
      %p277 = por %p275, %p276
      %p278 = scmp.ne.s32.totalorder %s266, %s267
      %p279 = scmp.eq.s32.totalorder %s44, 1
      %p280 = por %p278, %p279
      %p282 = scmp.ne.s32.totalorder %s267, %s281
      %p283 = scmp.eq.s32.totalorder %s44, 0
      %p284 = por %p282, %p283
      %s286 = sadd.s32 %s285, 1
      %p289 = scmp.eq.s32.totalorder %s38, 1
      %p290 = scmp.ne.s32.totalorder %s285, %s287
      %p291 = scmp.eq.s32.totalorder %s38, 0
      %p292 = por %p290, %p291
      %p293 = scmp.ne.s32.totalorder %s285, %s287
      %p294 = scmp.eq.s32.totalorder %s43, 1
      %p295 = por %p293, %p294
      %p296 = scmp.ne.s32.totalorder %s287, %s288
      %p297 = scmp.eq.s32.totalorder %s43, 0
      %p298 = por %p296, %p297
      %p299 = scmp.ne.s32.totalorder %s287, %s288
      %p300 = scmp.eq.s32.totalorder %s44, 1
      %p301 = por %p299, %p300
      %p303 = scmp.ne.s32.totalorder %s288, %s302
      %p304 = scmp.eq.s32.totalorder %s44, 0
      %p305 = por %p303, %p304
      %s307 = sadd.s32 %s306, 1
      %p310 = scmp.eq.s32.totalorder %s38, 1
      %p311 = scmp.ne.s32.totalorder %s306, %s308
      %p312 = scmp.eq.s32.totalorder %s38, 0
      %p313 = por %p311, %p312
      %p314 = scmp.ne.s32.totalorder %s306, %s308
      %p315 = scmp.eq.s32.totalorder %s43, 1
      %p316 = por %p314, %p315
      %p317 = scmp.ne.s32.totalorder %s308, %s309
      %p318 = scmp.eq.s32.totalorder %s43, 0
      %p319 = por %p317, %p318
      %p320 = scmp.ne.s32.totalorder %s308, %s309
      %p321 = scmp.eq.s32.totalorder %s44, 1
      %p322 = por %p320, %p321
      %p324 = scmp.ne.s32.totalorder %s309, %s323
      %p325 = scmp.eq.s32.totalorder %s44, 0
      %p326 = por %p324, %p325
      %s328 = sadd.s32 %s327, 1
      %p331 = scmp.eq.s32.totalorder %s38, 1
      %p332 = scmp.ne.s32.totalorder %s327, %s329
      %p333 = scmp.eq.s32.totalorder %s38, 0
      %p334 = por %p332, %p333
      %p335 = scmp.ne.s32.totalorder %s327, %s329
      %p336 = scmp.eq.s32.totalorder %s43, 1
      %p337 = por %p335, %p336
      %p338 = scmp.ne.s32.totalorder %s329, %s330
      %p339 = scmp.eq.s32.totalorder %s43, 0
      %p340 = por %p338, %p339
      %p341 = scmp.ne.s32.totalorder %s329, %s330
      %p342 = scmp.eq.s32.totalorder %s44, 1
      %p343 = por %p341, %p342
      %p345 = scmp.ne.s32.totalorder %s330, %s344
      %p346 = scmp.eq.s32.totalorder %s44, 0
      %p347 = por %p345, %p346
      %s349 = sadd.s32 %s348, 1
      %p352 = scmp.eq.s32.totalorder %s38, 1
      %p353 = scmp.ne.s32.totalorder %s348, %s350
      %p354 = scmp.eq.s32.totalorder %s38, 0
      %p355 = por %p353, %p354
      %p356 = scmp.ne.s32.totalorder %s348, %s350
      %p357 = scmp.eq.s32.totalorder %s43, 1
      %p358 = por %p356, %p357
      %p359 = scmp.ne.s32.totalorder %s350, %s351
      %p360 = scmp.eq.s32.totalorder %s43, 0
      %p361 = por %p359, %p360
      %p362 = scmp.ne.s32.totalorder %s350, %s351
      %p363 = scmp.eq.s32.totalorder %s44, 1
      %p364 = por %p362, %p363
      %p366 = scmp.ne.s32.totalorder %s351, %s365
      %p367 = scmp.eq.s32.totalorder %s44, 0
      %p368 = por %p366, %p367
      %s370 = sadd.s32 %s369, 1
      %p373 = scmp.eq.s32.totalorder %s38, 1
      %p374 = scmp.ne.s32.totalorder %s369, %s371
      %p375 = scmp.eq.s32.totalorder %s38, 0
      %p376 = por %p374, %p375
      %p377 = scmp.ne.s32.totalorder %s369, %s371
      %p378 = scmp.eq.s32.totalorder %s43, 1
      %p379 = por %p377, %p378
      %p380 = scmp.ne.s32.totalorder %s371, %s372
      %p381 = scmp.eq.s32.totalorder %s43, 0
      %p382 = por %p380, %p381
      %p383 = scmp.ne.s32.totalorder %s371, %s372
      %p384 = scmp.eq.s32.totalorder %s44, 1
      %p385 = por %p383, %p384
      %p387 = scmp.ne.s32.totalorder %s372, %s386
      %p388 = scmp.eq.s32.totalorder %s44, 0
      %p389 = por %p387, %p388
      %s391 = sadd.s32 %s390, 1
      %p394 = scmp.eq.s32.totalorder %s38, 1
      %p395 = scmp.ne.s32.totalorder %s390, %s392
      %p396 = scmp.eq.s32.totalorder %s38, 0
      %p397 = por %p395, %p396
      %p398 = scmp.ne.s32.totalorder %s390, %s392
      %p399 = scmp.eq.s32.totalorder %s43, 1
      %p400 = por %p398, %p399
      %p401 = scmp.ne.s32.totalorder %s392, %s393
      %p402 = scmp.eq.s32.totalorder %s43, 0
      %p403 = por %p401, %p402
      %p404 = scmp.ne.s32.totalorder %s392, %s393
      %p405 = scmp.eq.s32.totalorder %s44, 1
      %p406 = por %p404, %p405
      %p408 = scmp.ne.s32.totalorder %s393, %s407
      %p409 = scmp.eq.s32.totalorder %s44, 0
      %p410 = por %p408, %p409
      %s412 = sadd.s32 %s411, 1
      %p415 = scmp.eq.s32.totalorder %s38, 1
      %p416 = scmp.ne.s32.totalorder %s411, %s413
      %p417 = scmp.eq.s32.totalorder %s38, 0
      %p418 = por %p416, %p417
      %p419 = scmp.ne.s32.totalorder %s411, %s413
      %p420 = scmp.eq.s32.totalorder %s43, 1
      %p421 = por %p419, %p420
      %p422 = scmp.ne.s32.totalorder %s413, %s414
      %p423 = scmp.eq.s32.totalorder %s43, 0
      %p424 = por %p422, %p423
      %p425 = scmp.ne.s32.totalorder %s413, %s414
      %p426 = scmp.eq.s32.totalorder %s44, 1
      %p427 = por %p425, %p426
      %p429 = scmp.ne.s32.totalorder %s414, %s428
      %p430 = scmp.eq.s32.totalorder %s44, 0
      %p431 = por %p429, %p430
      %s433 = sadd.s32 %s432, 1
      %p436 = scmp.eq.s32.totalorder %s38, 1
      %p437 = scmp.ne.s32.totalorder %s432, %s434
      %p438 = scmp.eq.s32.totalorder %s38, 0
      %p439 = por %p437, %p438
      %p440 = scmp.ne.s32.totalorder %s432, %s434
      %p441 = scmp.eq.s32.totalorder %s43, 1
      %p442 = por %p440, %p441
      %p443 = scmp.ne.s32.totalorder %s434, %s435
      %p444 = scmp.eq.s32.totalorder %s43, 0
      %p445 = por %p443, %p444
      %p446 = scmp.ne.s32.totalorder %s434, %s435
      %p447 = scmp.eq.s32.totalorder %s44, 1
      %p448 = por %p446, %p447
      %p450 = scmp.ne.s32.totalorder %s435, %s449
      %p451 = scmp.eq.s32.totalorder %s44, 0
      %p452 = por %p450, %p451
      %s454 = sadd.s32 %s453, 1
      %p457 = scmp.eq.s32.totalorder %s38, 1
      %p458 = scmp.ne.s32.totalorder %s453, %s455
      %p459 = scmp.eq.s32.totalorder %s38, 0
      %p460 = por %p458, %p459
      %p461 = scmp.ne.s32.totalorder %s453, %s455
      %p462 = scmp.eq.s32.totalorder %s43, 1
      %p463 = por %p461, %p462
      %p464 = scmp.ne.s32.totalorder %s455, %s456
      %p465 = scmp.eq.s32.totalorder %s43, 0
      %p466 = por %p464, %p465
      %p467 = scmp.ne.s32.totalorder %s455, %s456
      %p468 = scmp.eq.s32.totalorder %s44, 1
      %p469 = por %p467, %p468
      %p471 = scmp.ne.s32.totalorder %s456, %s470
      %p472 = scmp.eq.s32.totalorder %s44, 0
      %p473 = por %p471, %p472
      %s475 = sadd.s32 %s474, 1
      %p478 = scmp.eq.s32.totalorder %s38, 1
      %p479 = scmp.ne.s32.totalorder %s474, %s476
      %p480 = scmp.eq.s32.totalorder %s38, 0
      %p481 = por %p479, %p480
      %p482 = scmp.ne.s32.totalorder %s474, %s476
      %p483 = scmp.eq.s32.totalorder %s43, 1
      %p484 = por %p482, %p483
      %p485 = scmp.ne.s32.totalorder %s476, %s477
      %p486 = scmp.eq.s32.totalorder %s43, 0
      %p487 = por %p485, %p486
      %p488 = scmp.ne.s32.totalorder %s476, %s477
      %p489 = scmp.eq.s32.totalorder %s44, 1
      %p490 = por %p488, %p489
      %p492 = scmp.ne.s32.totalorder %s477, %s491
      %p493 = scmp.eq.s32.totalorder %s44, 0
      %p494 = por %p492, %p493
      %s496 = sadd.s32 %s495, 1
      %p499 = scmp.eq.s32.totalorder %s38, 1
      %p500 = scmp.ne.s32.totalorder %s495, %s497
      %p501 = scmp.eq.s32.totalorder %s38, 0
      %p502 = por %p500, %p501
      %p503 = scmp.ne.s32.totalorder %s495, %s497
      %p504 = scmp.eq.s32.totalorder %s43, 1
      %p505 = por %p503, %p504
      %p506 = scmp.ne.s32.totalorder %s497, %s498
      %p507 = scmp.eq.s32.totalorder %s43, 0
      %p508 = por %p506, %p507
      %p509 = scmp.ne.s32.totalorder %s497, %s498
      %p510 = scmp.eq.s32.totalorder %s44, 1
      %p511 = por %p509, %p510
      %p513 = scmp.ne.s32.totalorder %s498, %s512
      %p514 = scmp.eq.s32.totalorder %s44, 0
      %p515 = por %p513, %p514
      %s516 = ssub.s32 %s45, %s57
      %s517 = ssub.s32 %s46, %s53
      %s518 = sor.u32 %s516, %s517
      %p519 = scmp.eq.s32.totalorder %s518, 0
      %s521 = sadd.s32 %s520, 1
      %s522 = scalar_select %p519, %s520, %s521
      %p525 = pneg %p519
      %p526 = scmp.eq.s32.totalorder %s38, 1
      %p527 = por %p525, %p526
      %p528 = scmp.ne.s32.totalorder %s520, %s523
      %p529 = scmp.eq.s32.totalorder %s38, 0
      %p530 = por %p528, %p529
      %p531 = scmp.ne.s32.totalorder %s520, %s523
      %p532 = scmp.eq.s32.totalorder %s43, 1
      %p533 = por %p531, %p532
      %p534 = scmp.ne.s32.totalorder %s523, %s524
      %p535 = scmp.eq.s32.totalorder %s43, 0
      %p536 = por %p534, %p535
      %p537 = scmp.ne.s32.totalorder %s523, %s524
      %p538 = scmp.eq.s32.totalorder %s44, 1
      %p539 = por %p537, %p538
      %p541 = scmp.ne.s32.totalorder %s524, %s540
      %p542 = scmp.eq.s32.totalorder %s44, 0
      %p543 = por %p541, %p542
      %p544 = scmp.le.s32.totalorder 1, %s38
      %p545 = scmp.lt.s32.totalorder %s38, 3
      %p546 = pnand %p544, %p545
      %p547 = pneg %p546
      // Predicated region
      $region9: #{tpu_custom_call.1} parent=5 // pred_check
        _
      $region10: #{tpu_custom_call.1} parent=5 // pred_check_branch
        %549 = sbr.rel (%p546) target = $region12
      $region11: #{tpu_custom_call.1} parent=5 // pred_region
        %s550 = ssub.s32 %s38, 1
        // Predicated region
        $region13: #{tpu_custom_call.1} parent=11 // pred_check
          %p551 = pneg %p151
        $region14: #{tpu_custom_call.1} parent=11 // pred_check_branch
          %553 = sbr.rel (%p551) target = $region16
        $region15: #{tpu_custom_call.1} parent=11 // pred_region
          _
        $region16: #{tpu_custom_call.1} parent=11 // pred_fallthru
          _
        // Predicated region
        $region17: #{tpu_custom_call.1} parent=11 // pred_check
          %p554 = pneg %p172
        $region18: #{tpu_custom_call.1} parent=11 // pred_check_branch
          %556 = sbr.rel (%p554) target = $region20
        $region19: #{tpu_custom_call.1} parent=11 // pred_region
          %558 = vsyncadd [#allocation3], 0
          %s560 = sshll.u32 %s4, 4
          %s561 = int_to_ptr.hbm [resolvable:$true] %s560
          %s562 = sshll.u32 [#allocation2], 4
          %s563 = int_to_ptr.vmem [resolvable:$true] %s562
          %565 = dma.hbm_to_vmem [thread:$0]  %s561, 16, %s563, [#allocation3]
        $region20: #{tpu_custom_call.1} parent=11 // pred_fallthru
          _
        // Predicated region
        $region21: #{tpu_custom_call.1} parent=11 // pred_check
          %p566 = pneg %p193
        $region22: #{tpu_custom_call.1} parent=11 // pred_check_branch
          %568 = sbr.rel (%p566) target = $region24
        $region23: #{tpu_custom_call.1} parent=11 // pred_region
          %570 = vsyncadd [#allocation6], 0
          %s571 = sshll.u32 %s5, 4
          %s572 = int_to_ptr.hbm [resolvable:$true] %s571
          %s573 = sshll.u32 [#allocation5], 4
          %s574 = int_to_ptr.vmem [resolvable:$true] %s573
          %579 = dma.hbm_to_vmem [thread:$0]  %s572, 256, %s574, [#allocation6], 64, 64, 4
        $region24: #{tpu_custom_call.1} parent=11 // pred_fallthru
          _
        // Predicated region
        $region25: #{tpu_custom_call.1} parent=11 // pred_check
          %p580 = pneg %p214
        $region26: #{tpu_custom_call.1} parent=11 // pred_check_branch
          %582 = sbr.rel (%p580) target = $region28
        $region27: #{tpu_custom_call.1} parent=11 // pred_region
          %584 = vsyncadd [#allocation6], 0
          %s586 = sshll.u32 %s6, 4
          %s587 = int_to_ptr.hbm [resolvable:$true] %s586
          %s588 = sshll.u32 [#allocation7], 4
          %s589 = int_to_ptr.vmem [resolvable:$true] %s588
          %591 = dma.hbm_to_vmem [thread:$0]  %s587, 16, %s589, [#allocation6]
        $region28: #{tpu_custom_call.1} parent=11 // pred_fallthru
          _
        // Predicated region
        $region29: #{tpu_custom_call.1} parent=11 // pred_check
          %p592 = pneg %p235
        $region30: #{tpu_custom_call.1} parent=11 // pred_check_branch
          %594 = sbr.rel (%p592) target = $region32
        $region31: #{tpu_custom_call.1} parent=11 // pred_region
          %596 = vsyncadd [#allocation9], 0
          %s597 = sshll.u32 %s7, 4
          %s598 = int_to_ptr.hbm [resolvable:$true] %s597
          %s599 = sshll.u32 [#allocation8], 4
          %s600 = int_to_ptr.vmem [resolvable:$true] %s599
          %605 = dma.hbm_to_vmem [thread:$0]  %s598, 256, %s600, [#allocation9], 64, 64, 4
        $region32: #{tpu_custom_call.1} parent=11 // pred_fallthru
          _
        // Predicated region
        $region33: #{tpu_custom_call.1} parent=11 // pred_check
          %p606 = pneg %p256
        $region34: #{tpu_custom_call.1} parent=11 // pred_check_branch
          %608 = sbr.rel (%p606) target = $region36
        $region35: #{tpu_custom_call.1} parent=11 // pred_region
          %610 = vsyncadd [#allocation9], 0
          %s612 = sshll.u32 %s8, 4
          %s613 = int_to_ptr.hbm [resolvable:$true] %s612
          %s614 = sshll.u32 [#allocation10], 4
          %s615 = int_to_ptr.vmem [resolvable:$true] %s614
          %617 = dma.hbm_to_vmem [thread:$0]  %s613, 16, %s615, [#allocation9]
        $region36: #{tpu_custom_call.1} parent=11 // pred_fallthru
          _
        // Predicated region
        $region37: #{tpu_custom_call.1} parent=11 // pred_check
          %p618 = pneg %p277
        $region38: #{tpu_custom_call.1} parent=11 // pred_check_branch
          %620 = sbr.rel (%p618) target = $region40
        $region39: #{tpu_custom_call.1} parent=11 // pred_region
          %622 = vsyncadd [#allocation12], 0
          %s623 = sshll.u32 %s9, 4
          %s624 = int_to_ptr.hbm [resolvable:$true] %s623
          %s625 = sshll.u32 [#allocation11], 4
          %s626 = int_to_ptr.vmem [resolvable:$true] %s625
          %631 = dma.hbm_to_vmem [thread:$0]  %s624, 256, %s626, [#allocation12], 64, 64, 4
        $region40: #{tpu_custom_call.1} parent=11 // pred_fallthru
          _
        // Predicated region
        $region41: #{tpu_custom_call.1} parent=11 // pred_check
          %p632 = pneg %p298
        $region42: #{tpu_custom_call.1} parent=11 // pred_check_branch
          %634 = sbr.rel (%p632) target = $region44
        $region43: #{tpu_custom_call.1} parent=11 // pred_region
          %636 = vsyncadd [#allocation12], 0
          %s638 = sshll.u32 %s10, 4
          %s639 = int_to_ptr.hbm [resolvable:$true] %s638
          %s640 = sshll.u32 [#allocation13], 4
          %s641 = int_to_ptr.vmem [resolvable:$true] %s640
          %643 = dma.hbm_to_vmem [thread:$0]  %s639, 16, %s641, [#allocation12]
        $region44: #{tpu_custom_call.1} parent=11 // pred_fallthru
          _
        // Predicated region
        $region45: #{tpu_custom_call.1} parent=11 // pred_check
          %p644 = pneg %p319
        $region46: #{tpu_custom_call.1} parent=11 // pred_check_branch
          %646 = sbr.rel (%p644) target = $region48
        $region47: #{tpu_custom_call.1} parent=11 // pred_region
          %648 = vsyncadd [#allocation15], 0
          %s649 = sshll.u32 %s11, 4
          %s650 = int_to_ptr.hbm [resolvable:$true] %s649
          %s651 = sshll.u32 [#allocation14], 4
          %s652 = int_to_ptr.vmem [resolvable:$true] %s651
          %657 = dma.hbm_to_vmem [thread:$0]  %s650, 256, %s652, [#allocation15], 64, 64, 4
        $region48: #{tpu_custom_call.1} parent=11 // pred_fallthru
          _
        // Predicated region
        $region49: #{tpu_custom_call.1} parent=11 // pred_check
          %p658 = pneg %p340
        $region50: #{tpu_custom_call.1} parent=11 // pred_check_branch
          %660 = sbr.rel (%p658) target = $region52
        $region51: #{tpu_custom_call.1} parent=11 // pred_region
          %662 = vsyncadd [#allocation15], 0
          %s664 = sshll.u32 %s12, 4
          %s665 = int_to_ptr.hbm [resolvable:$true] %s664
          %s666 = sshll.u32 [#allocation16], 4
          %s667 = int_to_ptr.vmem [resolvable:$true] %s666
          %669 = dma.hbm_to_vmem [thread:$0]  %s665, 16, %s667, [#allocation15]
        $region52: #{tpu_custom_call.1} parent=11 // pred_fallthru
          _
        // Predicated region
        $region53: #{tpu_custom_call.1} parent=11 // pred_check
          %p670 = pneg %p361
        $region54: #{tpu_custom_call.1} parent=11 // pred_check_branch
          %672 = sbr.rel (%p670) target = $region56
        $region55: #{tpu_custom_call.1} parent=11 // pred_region
          %674 = vsyncadd [#allocation18], 0
          %s675 = sshll.u32 %s13, 4
          %s676 = int_to_ptr.hbm [resolvable:$true] %s675
          %s677 = sshll.u32 [#allocation17], 4
          %s678 = int_to_ptr.vmem [resolvable:$true] %s677
          %683 = dma.hbm_to_vmem [thread:$0]  %s676, 256, %s678, [#allocation18], 64, 64, 4
        $region56: #{tpu_custom_call.1} parent=11 // pred_fallthru
          _
        // Predicated region
        $region57: #{tpu_custom_call.1} parent=11 // pred_check
          %p684 = pneg %p382
        $region58: #{tpu_custom_call.1} parent=11 // pred_check_branch
          %686 = sbr.rel (%p684) target = $region60
        $region59: #{tpu_custom_call.1} parent=11 // pred_region
          %688 = vsyncadd [#allocation18], 0
          %s690 = sshll.u32 %s14, 4
          %s691 = int_to_ptr.hbm [resolvable:$true] %s690
          %s692 = sshll.u32 [#allocation19], 4
          %s693 = int_to_ptr.vmem [resolvable:$true] %s692
          %695 = dma.hbm_to_vmem [thread:$0]  %s691, 16, %s693, [#allocation18]
        $region60: #{tpu_custom_call.1} parent=11 // pred_fallthru
          _
        // Predicated region
        $region61: #{tpu_custom_call.1} parent=11 // pred_check
          %p696 = pneg %p403
        $region62: #{tpu_custom_call.1} parent=11 // pred_check_branch
          %698 = sbr.rel (%p696) target = $region64
        $region63: #{tpu_custom_call.1} parent=11 // pred_region
          %700 = vsyncadd [#allocation21], 0
          %s701 = sshll.u32 %s15, 4
          %s702 = int_to_ptr.hbm [resolvable:$true] %s701
          %s703 = sshll.u32 [#allocation20], 4
          %s704 = int_to_ptr.vmem [resolvable:$true] %s703
          %709 = dma.hbm_to_vmem [thread:$0]  %s702, 256, %s704, [#allocation21], 64, 64, 4
        $region64: #{tpu_custom_call.1} parent=11 // pred_fallthru
          _
        // Predicated region
        $region65: #{tpu_custom_call.1} parent=11 // pred_check
          %p710 = pneg %p424
        $region66: #{tpu_custom_call.1} parent=11 // pred_check_branch
          %712 = sbr.rel (%p710) target = $region68
        $region67: #{tpu_custom_call.1} parent=11 // pred_region
          %714 = vsyncadd [#allocation21], 0
          %s716 = sshll.u32 %s16, 4
          %s717 = int_to_ptr.hbm [resolvable:$true] %s716
          %s718 = sshll.u32 [#allocation22], 4
          %s719 = int_to_ptr.vmem [resolvable:$true] %s718
          %721 = dma.hbm_to_vmem [thread:$0]  %s717, 16, %s719, [#allocation21]
        $region68: #{tpu_custom_call.1} parent=11 // pred_fallthru
          _
        // Predicated region
        $region69: #{tpu_custom_call.1} parent=11 // pred_check
          %p722 = pneg %p445
        $region70: #{tpu_custom_call.1} parent=11 // pred_check_branch
          %724 = sbr.rel (%p722) target = $region72
        $region71: #{tpu_custom_call.1} parent=11 // pred_region
          _
        $region72: #{tpu_custom_call.1} parent=11 // pred_fallthru
          _
        // Predicated region
        $region73: #{tpu_custom_call.1} parent=11 // pred_check
          %p725 = pneg %p466
        $region74: #{tpu_custom_call.1} parent=11 // pred_check_branch
          %727 = sbr.rel (%p725) target = $region76
        $region75: #{tpu_custom_call.1} parent=11 // pred_region
          _
        $region76: #{tpu_custom_call.1} parent=11 // pred_fallthru
          _
        // Predicated region
        $region77: #{tpu_custom_call.1} parent=11 // pred_check
          %p728 = pneg %p487
        $region78: #{tpu_custom_call.1} parent=11 // pred_check_branch
          %730 = sbr.rel (%p728) target = $region80
        $region79: #{tpu_custom_call.1} parent=11 // pred_region
          %732 = vsyncadd [#allocation24], 0
          %s734 = sshll.u32 %s19, 4
          %s735 = int_to_ptr.hbm [resolvable:$true] %s734
          %s736 = sshll.u32 [#allocation23], 4
          %s737 = int_to_ptr.vmem [resolvable:$true] %s736
          %739 = dma.hbm_to_vmem [thread:$0]  %s735, 64, %s737, [#allocation24]
        $region80: #{tpu_custom_call.1} parent=11 // pred_fallthru
          _
        // Predicated region
        $region81: #{tpu_custom_call.1} parent=11 // pred_check
          %p740 = pneg %p508
        $region82: #{tpu_custom_call.1} parent=11 // pred_check_branch
          %742 = sbr.rel (%p740) target = $region84
        $region83: #{tpu_custom_call.1} parent=11 // pred_region
          %744 = vsyncadd [#allocation24], 0
          %s746 = sshll.u32 %s20, 4
          %s747 = int_to_ptr.hbm [resolvable:$true] %s746
          %s748 = sshll.u32 [#allocation25], 4
          %s749 = int_to_ptr.vmem [resolvable:$true] %s748
          %751 = dma.hbm_to_vmem [thread:$0]  %s747, 64, %s749, [#allocation24]
        $region84: #{tpu_custom_call.1} parent=11 // pred_fallthru
          _
      $region12: #{tpu_custom_call.1} parent=5 // pred_fallthru
        _
      %p752 = scmp.lt.s32.totalorder %s38, 2
      // Predicated region
      $region85: #{tpu_custom_call.1} parent=5 // pred_check
        %p753 = pneg %p752
      $region86: #{tpu_custom_call.1} parent=5 // pred_check_branch
        %755 = sbr.rel (%p753) target = $region88
      $region87: #{tpu_custom_call.1} parent=5 // pred_region
        // Predicated region
        $region89: #{tpu_custom_call.1} parent=87 // pred_check
          %p756 = pneg %p70
        $region90: #{tpu_custom_call.1} parent=87 // pred_check_branch
          %758 = sbr.rel (%p756) target = $region92
        $region91: #{tpu_custom_call.1} parent=87 // pred_region
          %p759 = scmp.lt.s32.totalorder %s45, 1
          %s760 = scalar_select %p759, %s45, 1
          %s761 = smul.addr %s760, 8
          %s762 = scalar_lea.vmem %s0, %s761
        $region92: #{tpu_custom_call.1} parent=87 // pred_fallthru
          _
        // Predicated region
        $region93: #{tpu_custom_call.1} parent=87 // pred_check
          %p763 = pneg %p96
        $region94: #{tpu_custom_call.1} parent=87 // pred_check_branch
          %765 = sbr.rel (%p763) target = $region96
        $region95: #{tpu_custom_call.1} parent=87 // pred_region
          %p766 = scmp.lt.s32.totalorder %s45, 1
          %s767 = scalar_select %p766, %s45, 1
          %s768 = smul.addr %s767, 2
          %s769 = smul.addr %s768, 8
          %s770 = scalar_lea.vmem %s1, %s769
        $region96: #{tpu_custom_call.1} parent=87 // pred_fallthru
          _
        // Predicated region
        $region97: #{tpu_custom_call.1} parent=87 // pred_check
          %p771 = pneg %p124
        $region98: #{tpu_custom_call.1} parent=87 // pred_check_branch
          %773 = sbr.rel (%p771) target = $region100
        $region99: #{tpu_custom_call.1} parent=87 // pred_region
          %p774 = scmp.lt.s32.totalorder %s45, 1
          %s775 = scalar_select %p774, %s45, 1
          %p776 = scmp.lt.s32.totalorder %s46, 0
          %s777 = scalar_select %p776, %s46, 0
          %s778 = sadd.s32 %s777, %s775
          %s779 = smul.addr %s778, 8
          %s780 = scalar_lea.vmem %s2, %s779
        $region100: #{tpu_custom_call.1} parent=87 // pred_fallthru
          _
      $region88: #{tpu_custom_call.1} parent=5 // pred_fallthru
        _
      %p781 = scmp.le.s32.totalorder 1, %s38
      %p782 = scmp.lt.s32.totalorder %s38, 3
      %p783 = pnand %p781, %p782
      %p784 = pneg %p783
      // Predicated region
      $region101: #{tpu_custom_call.1} parent=5 // pred_check
        _
      $region102: #{tpu_custom_call.1} parent=5 // pred_check_branch
        %786 = sbr.rel (%p783) target = $region104
      $region103: #{tpu_custom_call.1} parent=5 // pred_region
        %s787 = ssub.s32 %s38, 1
        // Predicated region
        $region105: #{tpu_custom_call.1} parent=103 // pred_check
          %p788 = pneg %p172
        $region106: #{tpu_custom_call.1} parent=103 // pred_check_branch
          %790 = sbr.rel (%p788) target = $region108
        $region107: #{tpu_custom_call.1} parent=103 // pred_region
          %792 = dma.done [#allocation3], 16
        $region108: #{tpu_custom_call.1} parent=103 // pred_fallthru
          _
        // Predicated region
        $region109: #{tpu_custom_call.1} parent=103 // pred_check
          %p793 = pneg %p193
        $region110: #{tpu_custom_call.1} parent=103 // pred_check_branch
          %795 = sbr.rel (%p793) target = $region112
        $region111: #{tpu_custom_call.1} parent=103 // pred_region
          %797 = dma.done [#allocation6], 256
        $region112: #{tpu_custom_call.1} parent=103 // pred_fallthru
          _
        // Predicated region
        $region113: #{tpu_custom_call.1} parent=103 // pred_check
          %p798 = pneg %p214
        $region114: #{tpu_custom_call.1} parent=103 // pred_check_branch
          %800 = sbr.rel (%p798) target = $region116
        $region115: #{tpu_custom_call.1} parent=103 // pred_region
          %802 = dma.done [#allocation6], 16
        $region116: #{tpu_custom_call.1} parent=103 // pred_fallthru
          _
        // Predicated region
        $region117: #{tpu_custom_call.1} parent=103 // pred_check
          %p803 = pneg %p235
        $region118: #{tpu_custom_call.1} parent=103 // pred_check_branch
          %805 = sbr.rel (%p803) target = $region120
        $region119: #{tpu_custom_call.1} parent=103 // pred_region
          %807 = dma.done [#allocation9], 256
        $region120: #{tpu_custom_call.1} parent=103 // pred_fallthru
          _
        // Predicated region
        $region121: #{tpu_custom_call.1} parent=103 // pred_check
          %p808 = pneg %p256
        $region122: #{tpu_custom_call.1} parent=103 // pred_check_branch
          %810 = sbr.rel (%p808) target = $region124
        $region123: #{tpu_custom_call.1} parent=103 // pred_region
          %812 = dma.done [#allocation9], 16
        $region124: #{tpu_custom_call.1} parent=103 // pred_fallthru
          _
        // Predicated region
        $region125: #{tpu_custom_call.1} parent=103 // pred_check
          %p813 = pneg %p277
        $region126: #{tpu_custom_call.1} parent=103 // pred_check_branch
          %815 = sbr.rel (%p813) target = $region128
        $region127: #{tpu_custom_call.1} parent=103 // pred_region
          %817 = dma.done [#allocation12], 256
        $region128: #{tpu_custom_call.1} parent=103 // pred_fallthru
          _
        // Predicated region
        $region129: #{tpu_custom_call.1} parent=103 // pred_check
          %p818 = pneg %p298
        $region130: #{tpu_custom_call.1} parent=103 // pred_check_branch
          %820 = sbr.rel (%p818) target = $region132
        $region131: #{tpu_custom_call.1} parent=103 // pred_region
          %822 = dma.done [#allocation12], 16
        $region132: #{tpu_custom_call.1} parent=103 // pred_fallthru
          _
        // Predicated region
        $region133: #{tpu_custom_call.1} parent=103 // pred_check
          %p823 = pneg %p319
        $region134: #{tpu_custom_call.1} parent=103 // pred_check_branch
          %825 = sbr.rel (%p823) target = $region136
        $region135: #{tpu_custom_call.1} parent=103 // pred_region
          %827 = dma.done [#allocation15], 256
        $region136: #{tpu_custom_call.1} parent=103 // pred_fallthru
          _
        // Predicated region
        $region137: #{tpu_custom_call.1} parent=103 // pred_check
          %p828 = pneg %p340
        $region138: #{tpu_custom_call.1} parent=103 // pred_check_branch
          %830 = sbr.rel (%p828) target = $region140
        $region139: #{tpu_custom_call.1} parent=103 // pred_region
          %832 = dma.done [#allocation15], 16
        $region140: #{tpu_custom_call.1} parent=103 // pred_fallthru
          _
        // Predicated region
        $region141: #{tpu_custom_call.1} parent=103 // pred_check
          %p833 = pneg %p361
        $region142: #{tpu_custom_call.1} parent=103 // pred_check_branch
          %835 = sbr.rel (%p833) target = $region144
        $region143: #{tpu_custom_call.1} parent=103 // pred_region
          %837 = dma.done [#allocation18], 256
        $region144: #{tpu_custom_call.1} parent=103 // pred_fallthru
          _
        // Predicated region
        $region145: #{tpu_custom_call.1} parent=103 // pred_check
          %p838 = pneg %p382
        $region146: #{tpu_custom_call.1} parent=103 // pred_check_branch
          %840 = sbr.rel (%p838) target = $region148
        $region147: #{tpu_custom_call.1} parent=103 // pred_region
          %842 = dma.done [#allocation18], 16
        $region148: #{tpu_custom_call.1} parent=103 // pred_fallthru
          _
        // Predicated region
        $region149: #{tpu_custom_call.1} parent=103 // pred_check
          %p843 = pneg %p403
        $region150: #{tpu_custom_call.1} parent=103 // pred_check_branch
          %845 = sbr.rel (%p843) target = $region152
        $region151: #{tpu_custom_call.1} parent=103 // pred_region
          %847 = dma.done [#allocation21], 256
        $region152: #{tpu_custom_call.1} parent=103 // pred_fallthru
          _
        // Predicated region
        $region153: #{tpu_custom_call.1} parent=103 // pred_check
          %p848 = pneg %p424
        $region154: #{tpu_custom_call.1} parent=103 // pred_check_branch
          %850 = sbr.rel (%p848) target = $region156
        $region155: #{tpu_custom_call.1} parent=103 // pred_region
          %852 = dma.done [#allocation21], 16
        $region156: #{tpu_custom_call.1} parent=103 // pred_fallthru
          _
        // Predicated region
        $region157: #{tpu_custom_call.1} parent=103 // pred_check
          %p853 = pneg %p487
        $region158: #{tpu_custom_call.1} parent=103 // pred_check_branch
          %855 = sbr.rel (%p853) target = $region160
        $region159: #{tpu_custom_call.1} parent=103 // pred_region
          %857 = dma.done [#allocation24], 64
        $region160: #{tpu_custom_call.1} parent=103 // pred_fallthru
          _
        // Predicated region
        $region161: #{tpu_custom_call.1} parent=103 // pred_check
          %p858 = pneg %p508
        $region162: #{tpu_custom_call.1} parent=103 // pred_check_branch
          %860 = sbr.rel (%p858) target = $region164
        $region163: #{tpu_custom_call.1} parent=103 // pred_region
          %862 = dma.done [#allocation24], 64
        $region164: #{tpu_custom_call.1} parent=103 // pred_fallthru
          _
        %p863 = scmp.lt.s32.totalorder %s47, 1
        %s864 = scalar_select %p863, %s47, 1
        %s865 = smul.addr %s864, 8
        %s866 = scalar_lea.vmem %s0, %s865
        %p867 = pneg %p76
        %p868 = pneg %p73
        %p869 = scmp.lt.s32.totalorder %s47, 1
        %s870 = scalar_select %p869, %s47, 1
        %s871 = smul.addr %s870, 2
        %s872 = smul.addr %s871, 8
        %s873 = scalar_lea.vmem %s1, %s872
        %p874 = pneg %p102
        %p875 = pneg %p99
        %p876 = scmp.lt.s32.totalorder %s47, 1
        %s877 = scalar_select %p876, %s47, 1
        %p878 = scmp.lt.s32.totalorder %s48, 0
        %s879 = scalar_select %p878, %s48, 0
        %s880 = sadd.s32 %s879, %s877
        %s881 = smul.addr %s880, 8
        %s882 = scalar_lea.vmem %s2, %s881
        %p883 = pneg %p130
        %p884 = pneg %p127
        %p885 = pneg %p151
        %p886 = pneg %p148
        %p887 = pneg %p172
        %p888 = pneg %p169
        %p889 = pneg %p193
        %p890 = pneg %p190
        %p891 = pneg %p214
        %p892 = pneg %p211
        %p893 = pneg %p235
        %p894 = pneg %p232
        %p895 = pneg %p256
        %p896 = pneg %p253
        %p897 = pneg %p277
        %p898 = pneg %p274
        %p899 = pneg %p298
        %p900 = pneg %p295
        %p901 = pneg %p319
        %p902 = pneg %p316
        %p903 = pneg %p340
        %p904 = pneg %p337
        %p905 = pneg %p361
        %p906 = pneg %p358
        %p907 = pneg %p382
        %p908 = pneg %p379
        %p909 = pneg %p403
        %p910 = pneg %p400
        %p911 = pneg %p424
        %p912 = pneg %p421
        %p913 = pneg %p445
        %p914 = pneg %p442
        %p915 = pneg %p466
        %p916 = pneg %p463
        %p917 = pneg %p487
        %p918 = pneg %p484
        %p919 = pneg %p508
        %p920 = pneg %p505
        %p921 = pneg %p536
        %p922 = pneg %p533
        %s923 = sand.u32 %s523, 1
        %s924 = scalar_lea.sflag [#allocation4], %s923
        %s925 = sand.u32 %s523, 1
        %s926 = smul.addr %s925, 8
        %s927 = scalar_lea.vmem [#allocation26], %s926
        %p928 = scmp.lt.s32.totalorder %s47, 1
        %s929 = scalar_select %p928, %s47, 1
        %s930 = smul.addr %s929, 8
        %s931 = scalar_lea.vmem %s0, %s930
        %p932 = scmp.lt.s32.totalorder %s47, 1
        %s933 = scalar_select %p932, %s47, 1
        %s934 = smul.addr %s933, 2
        %s935 = smul.addr %s934, 8
        %s936 = scalar_lea.vmem %s1, %s935
        %p937 = scmp.lt.s32.totalorder %s47, 1
        %s938 = scalar_select %p937, %s47, 1
        %p939 = scmp.lt.s32.totalorder %s48, 0
        %s940 = scalar_select %p939, %s48, 0
        %s941 = sadd.s32 %s940, %s938
        %s942 = smul.addr %s941, 8
        %s943 = scalar_lea.vmem %s2, %s942
        %s945 = smul.u32 %s48, 8
        %v946 = vld [vmem:[#allocation23] sm:$0x7]
        %v947 = vld [vmem:[#allocation25] sm:$0x7]
        %v948 = vld [vmem:[%s931] sm:$0xff]
        %v949 = vlaneseq
        %v950 = vshrl.u32 %v949, 7
        %v951 = vstv %s945
        %v952 = vadd.s32 %v950, %v951
        %v953 = vlaneseq
        %v954 = vand.u32 %v953, 127
        %vm955 = vcmp.le.s32.totalorder %v954, %v952
        %v956 = vsel %vm955, 0.0, -1e+30
        %vm957 = vcmask 261120
        %v958 = vsel %vm957, %v948, 0.0
        %959 = vadd.xlane.f32.xlu0 %v958
        %v960 = vpop.xlane.xlu0 %959
        %v961 = vrcp.pop 32.0
        %v962 = vmul.f32 32.0, %v961
        %v963 = vsub.f32 1.0, %v962
        %v964 = vmul.f32 %v961, %v963
        %v965 = vadd.f32 %v961, %v964
        %vm966 = vweird.f32 %v961
        %v967 = vsel %vm966, %v961, %v965
        %v968 = vmul.f32 %v960, %v967
        %v969 = vsub.f32 %v948, %v968
        %v970 = vmul.f32 %v969, %v969
        %v971 = vsel %vm957, %v970, 0.0
        %972 = vadd.xlane.f32.xlu0 %v971
        %v973 = vpop.xlane.xlu0 %972
        %v974 = vmul.f32 %v973, 0.032258064
        %v975 = vrsqrt.pop %v974
        %v976 = vmul.f32 %v975, %v974
        %v977 = vmul.f32 %v976, %v975
        %v978 = vmul.f32 0.5, %v977
        %v979 = vsub.f32 1.5, %v978
        %v980 = vmul.f32 %v975, %v979
        %v981 = vmul.f32 %v974, %v980
        %vm982 = vcmp.eq.f32.partialorder %v974, inf
        %v983 = vsel %vm982, %v974, %v981
        %vm984 = vcmp.eq.f32.partialorder %v974, 0.0
        %v985 = vand.u32 %v974, 2147483648
        %v986 = vsel %vm984, %v985, %v983
        %v987 = vadd.f32 %v986, 1e-06
        %v988 = vrcp.pop %v987
        %v989 = vperm.slane %v946, 0
        %v990 = vmul.f32 %v989, %v969
        %v991 = vmul.f32 %v990, %v988
        %v992 = vperm.slane %v947, 0
        %v993 = vadd.f32 %v991, %v992
        %v994 = vpack.c.bf16 %v993, %v993
        %v995 = vld [vmem:[%s3] sm:$0xf]
        %v996 = vld [vmem:[%s3 + $0x4] sm:$0xf]
        %v997 = vld [vmem:[%s3 + $0x8] sm:$0xf]
        %v998 = vld [vmem:[%s3 + $0xc] sm:$0xf]
        %v999 = vld [vmem:[#allocation2] sm:$0x1]
        %v1001 = vperm.slane %v999, 0
        %v1007 = vunpack.c.l.b16 %v995
        %v1008 = vunpack.c.l.b16 %v996
        %v1009 = vunpack.c.l.b16 %v997
        %v1010 = vunpack.c.l.b16 %v998
        %v1011 = vpack.c.b16 %v1008, %v1007
        %v1012 = vpack.c.b16 %v1010, %v1009
        %v1016 = vsel %vm957, %v994, 0
        %1018 = vmatpush.bf16.msra.mxu0 0
        %1019 = vmatpush.bf16.msra.mxu0 0
        %1020 = vmatpush.bf16.msra.mxu0 0
        %1021 = vmatpush.bf16.msra.mxu0 0
        %1022 = vmatpush.bf16.msra.mxu0 0
        %1023 = vmatpush.bf16.msra.mxu0 0
        %1024 = vmatpush.bf16.msra.mxu0 %v1012
        %1025 = vmatpush.bf16.msra.mxu0 %v1011
        %1026 = vmatmul.bf16.gmra.mxu0 %v1016
        %v1027 = vpop.f32.mrf.mxu0
        %v1028 = vadd.f32 %v1001, %v1027
        %v1029 = vpop.f32.mrf.mxu0
        %1030 = vdwg.mxu0
        %v1031 = vld [vmem:[#allocation5] sm:$0xf]
        %v1032 = vld [vmem:[#allocation5 + $0x4] sm:$0xf]
        %v1033 = vld [vmem:[#allocation5 + $0x8] sm:$0xf]
        %v1034 = vld [vmem:[#allocation5 + $0xc] sm:$0xf]
        %v1035 = vld [vmem:[#allocation7] sm:$0x1]
        %v1037 = vperm.slane %v1035, 0
        %v1043 = vunpack.c.l.b16 %v1031
        %v1044 = vunpack.c.l.b16 %v1032
        %v1045 = vunpack.c.l.b16 %v1033
        %v1046 = vunpack.c.l.b16 %v1034
        %v1047 = vpack.c.b16 %v1044, %v1043
        %v1048 = vpack.c.b16 %v1046, %v1045
        %1051 = vmatpush.bf16.msra.mxu0 0
        %1052 = vmatpush.bf16.msra.mxu0 0
        %1053 = vmatpush.bf16.msra.mxu0 0
        %1054 = vmatpush.bf16.msra.mxu0 0
        %1055 = vmatpush.bf16.msra.mxu0 0
        %1056 = vmatpush.bf16.msra.mxu0 0
        %1057 = vmatpush.bf16.msra.mxu0 %v1048
        %1058 = vmatpush.bf16.msra.mxu0 %v1047
        %1059 = vmatmul.bf16.gmra.mxu0 %v1016
        %v1060 = vpop.f32.mrf.mxu0
        %v1061 = vadd.f32 %v1037, %v1060
        %v1062 = vpop.f32.mrf.mxu0
        %1063 = vdwg.mxu0
        %v1064 = vpack.c.bf16 %v1028, %v1028
        %v1065 = vpack.c.bf16 %v1061, %v1061
        %vm1066 = vcmask 64512
        %v1068 = vsel %vm1066, %v1064, 0
        %v1071 = vsel %vm1066, %v1065, 0
        %1073 = vmatpush.bf16.xpose.msra.mxu0 0
        %1074 = vmatpush.bf16.xpose.msra.mxu0 0
        %1075 = vmatpush.bf16.xpose.msra.mxu0 0
        %1076 = vmatpush.bf16.xpose.msra.mxu0 0
        %1077 = vmatpush.bf16.xpose.msra.mxu0 0
        %1078 = vmatpush.bf16.xpose.msra.mxu0 0
        %1079 = vmatpush.bf16.xpose.msra.mxu0 0
        %1080 = vmatpush.bf16.xpose.msra.mxu0 %v1071
        %1081 = vmatmul.bf16.gmra.mxu0 %v1068
        %v1082 = vpop.f32.mrf.mxu0
        %v1083 = vadd.f32 %v956, %v1082
        %v1084 = vpop.f32.mrf.mxu0
        %1085 = vdwg.mxu0
        %v1086 = vsel %vm1066, %v1083, -inf
        %1087 = vmax.xlane.f32.xlu0 %v1086
        %v1088 = vpop.xlane.xlu0 %1087
        %v1089 = vsub.f32 %v1083, %v1088
        %v1090 = vmul.f32 %v1089, 1.442695
        %v1091 = vpow.pop %v1090
        %v1092 = vsel %vm1066, %v1091, 0.0
        %1093 = vadd.xlane.f32.xlu0 %v1092
        %v1094 = vpop.xlane.xlu0 %1093
        %v1095 = vrcp.pop %v1094
        %v1096 = vmul.f32 %v1091, %v1095
        %v1097 = vpack.c.bf16 %v1096, %v1096
        %1099 = vrot.lane.b32.xlu0 %v1065, 96
        %v1100 = vpop.permute.xlu0 %1099
        %v1102 = vsel %vm1066, %v1097, 0
        %vm1104 = vcmask 1043456
        %v1106 = vsel %vm1104, %v1100, 0
        %1108 = vmatpush.bf16.msra.mxu0 0
        %1109 = vmatpush.bf16.msra.mxu0 0
        %1110 = vmatpush.bf16.msra.mxu0 0
        %1111 = vmatpush.bf16.msra.mxu0 0
        %1112 = vmatpush.bf16.msra.mxu0 0
        %1113 = vmatpush.bf16.msra.mxu0 0
        %1114 = vmatpush.bf16.msra.mxu0 0
        %1115 = vmatpush.bf16.msra.mxu0 %v1106
        %1116 = vmatmul.bf16.gmra.mxu0 %v1102
        %v1117 = vpop.f32.mrf.mxu0
        %v1118 = vadd.f32 0.0, %v1117
        %v1119 = vpop.f32.mrf.mxu0
        %1120 = vdwg.mxu0
        %v1121 = vpack.c.bf16 %v1118, %v1118
        %v1122 = vld [vmem:[#allocation8] sm:$0xf]
        %1124 = vrot.lane.b32.xlu0 %v1064, 120
        %v1125 = vpop.permute.xlu0 %1124
        %1126 = vrot.lane.b32.xlu0 %v1065, 120
        %v1127 = vpop.permute.xlu0 %1126
        %v1129 = vsel %vm1066, %v1125, 0
        %v1132 = vsel %vm1066, %v1127, 0
        %1134 = vmatpush.bf16.xpose.msra.mxu0 0
        %1135 = vmatpush.bf16.xpose.msra.mxu0 0
        %1136 = vmatpush.bf16.xpose.msra.mxu0 0
        %1137 = vmatpush.bf16.xpose.msra.mxu0 0
        %1138 = vmatpush.bf16.xpose.msra.mxu0 0
        %1139 = vmatpush.bf16.xpose.msra.mxu0 0
        %1140 = vmatpush.bf16.xpose.msra.mxu0 0
        %1141 = vmatpush.bf16.xpose.msra.mxu0 %v1132
        %1142 = vmatmul.bf16.gmra.mxu0 %v1129
        %v1143 = vpop.f32.mrf.mxu0
        %v1144 = vadd.f32 %v956, %v1143
        %v1145 = vpop.f32.mrf.mxu0
        %1146 = vdwg.mxu0
        %v1147 = vsel %vm1066, %v1144, -inf
        %1148 = vmax.xlane.f32.xlu0 %v1147
        %v1149 = vpop.xlane.xlu0 %1148
        %v1150 = vsub.f32 %v1144, %v1149
        %v1151 = vmul.f32 %v1150, 1.442695
        %v1152 = vpow.pop %v1151
        %v1153 = vsel %vm1066, %v1152, 0.0
        %1154 = vadd.xlane.f32.xlu0 %v1153
        %v1155 = vpop.xlane.xlu0 %1154
        %v1156 = vrcp.pop %v1155
        %v1157 = vmul.f32 %v1152, %v1156
        %v1158 = vpack.c.bf16 %v1157, %v1157
        %1159 = vrot.lane.b32.xlu0 %v1065, 88
        %v1160 = vpop.permute.xlu0 %1159
        %v1162 = vsel %vm1066, %v1158, 0
        %v1165 = vsel %vm1104, %v1160, 0
        %1167 = vmatpush.bf16.msra.mxu0 0
        %1168 = vmatpush.bf16.msra.mxu0 0
        %1169 = vmatpush.bf16.msra.mxu0 0
        %1170 = vmatpush.bf16.msra.mxu0 0
        %1171 = vmatpush.bf16.msra.mxu0 0
        %1172 = vmatpush.bf16.msra.mxu0 0
        %1173 = vmatpush.bf16.msra.mxu0 0
        %1174 = vmatpush.bf16.msra.mxu0 %v1165
        %1175 = vmatmul.bf16.gmra.mxu0 %v1162
        %v1176 = vpop.f32.mrf.mxu0
        %v1177 = vadd.f32 0.0, %v1176
        %v1178 = vpop.f32.mrf.mxu0
        %1179 = vdwg.mxu0
        %v1180 = vpack.c.bf16 %v1177, %v1177
        %v1181 = vld [vmem:[#allocation8 + $0x4] sm:$0xf]
        %v1183 = vsel %vm1066, %v1180, 0
        %v1186 = vsel %vm1104, %v1181, 0
        %1188 = vmatpush.bf16.msra.mxu0 0
        %1189 = vmatpush.bf16.msra.mxu0 0
        %1190 = vmatpush.bf16.msra.mxu0 0
        %1191 = vmatpush.bf16.msra.mxu0 0
        %1192 = vmatpush.bf16.msra.mxu0 0
        %1193 = vmatpush.bf16.msra.mxu0 0
        %1194 = vmatpush.bf16.msra.mxu0 0
        %1195 = vmatpush.bf16.msra.mxu0 %v1186
        %1196 = vmatmul.bf16.gmra.mxu0 %v1183
        %v1197 = vpop.f32.mrf.mxu0
        %v1198 = vadd.f32 0.0, %v1197
        %v1199 = vpop.f32.mrf.mxu0
        %1200 = vdwg.mxu0
        %v1202 = vsel %vm1066, %v1121, 0
        %v1205 = vsel %vm1104, %v1122, 0
        %1207 = vmatpush.bf16.msra.mxu0 0
        %1208 = vmatpush.bf16.msra.mxu0 0
        %1209 = vmatpush.bf16.msra.mxu0 0
        %1210 = vmatpush.bf16.msra.mxu0 0
        %1211 = vmatpush.bf16.msra.mxu0 0
        %1212 = vmatpush.bf16.msra.mxu0 0
        %1213 = vmatpush.bf16.msra.mxu0 0
        %1214 = vmatpush.bf16.msra.mxu0 %v1205
        %1215 = vmatmul.bf16.gmra.mxu0 %v1202
        %v1216 = vpop.f32.mrf.mxu0
        %v1217 = vadd.f32 %v1198, %v1216
        %v1218 = vpop.f32.mrf.mxu0
        %1219 = vdwg.mxu0
        %1220 = vrot.lane.b32.xlu0 %v1064, 112
        %v1221 = vpop.permute.xlu0 %1220
        %1222 = vrot.lane.b32.xlu0 %v1065, 112
        %v1223 = vpop.permute.xlu0 %1222
        %v1225 = vsel %vm1066, %v1221, 0
        %v1228 = vsel %vm1066, %v1223, 0
        %1230 = vmatpush.bf16.xpose.msra.mxu0 0
        %1231 = vmatpush.bf16.xpose.msra.mxu0 0
        %1232 = vmatpush.bf16.xpose.msra.mxu0 0
        %1233 = vmatpush.bf16.xpose.msra.mxu0 0
        %1234 = vmatpush.bf16.xpose.msra.mxu0 0
        %1235 = vmatpush.bf16.xpose.msra.mxu0 0
        %1236 = vmatpush.bf16.xpose.msra.mxu0 0
        %1237 = vmatpush.bf16.xpose.msra.mxu0 %v1228
        %1238 = vmatmul.bf16.gmra.mxu0 %v1225
        %v1239 = vpop.f32.mrf.mxu0
        %v1240 = vadd.f32 %v956, %v1239
        %v1241 = vpop.f32.mrf.mxu0
        %1242 = vdwg.mxu0
        %v1243 = vsel %vm1066, %v1240, -inf
        %1244 = vmax.xlane.f32.xlu0 %v1243
        %v1245 = vpop.xlane.xlu0 %1244
        %v1246 = vsub.f32 %v1240, %v1245
        %v1247 = vmul.f32 %v1246, 1.442695
        %v1248 = vpow.pop %v1247
        %v1249 = vsel %vm1066, %v1248, 0.0
        %1250 = vadd.xlane.f32.xlu0 %v1249
        %v1251 = vpop.xlane.xlu0 %1250
        %v1252 = vrcp.pop %v1251
        %v1253 = vmul.f32 %v1248, %v1252
        %v1254 = vpack.c.bf16 %v1253, %v1253
        %1255 = vrot.lane.b32.xlu0 %v1065, 80
        %v1256 = vpop.permute.xlu0 %1255
        %v1258 = vsel %vm1066, %v1254, 0
        %v1261 = vsel %vm1104, %v1256, 0
        %1263 = vmatpush.bf16.msra.mxu0 0
        %1264 = vmatpush.bf16.msra.mxu0 0
        %1265 = vmatpush.bf16.msra.mxu0 0
        %1266 = vmatpush.bf16.msra.mxu0 0
        %1267 = vmatpush.bf16.msra.mxu0 0
        %1268 = vmatpush.bf16.msra.mxu0 0
        %1269 = vmatpush.bf16.msra.mxu0 0
        %1270 = vmatpush.bf16.msra.mxu0 %v1261
        %1271 = vmatmul.bf16.gmra.mxu0 %v1258
        %v1272 = vpop.f32.mrf.mxu0
        %v1273 = vadd.f32 0.0, %v1272
        %v1274 = vpop.f32.mrf.mxu0
        %1275 = vdwg.mxu0
        %v1276 = vpack.c.bf16 %v1273, %v1273
        %v1277 = vld [vmem:[#allocation8 + $0x8] sm:$0xf]
        %v1279 = vsel %vm1066, %v1276, 0
        %v1282 = vsel %vm1104, %v1277, 0
        %1284 = vmatpush.bf16.msra.mxu0 0
        %1285 = vmatpush.bf16.msra.mxu0 0
        %1286 = vmatpush.bf16.msra.mxu0 0
        %1287 = vmatpush.bf16.msra.mxu0 0
        %1288 = vmatpush.bf16.msra.mxu0 0
        %1289 = vmatpush.bf16.msra.mxu0 0
        %1290 = vmatpush.bf16.msra.mxu0 0
        %1291 = vmatpush.bf16.msra.mxu0 %v1282
        %1292 = vmatmul.bf16.gmra.mxu0 %v1279
        %v1293 = vpop.f32.mrf.mxu0
        %v1294 = vadd.f32 0.0, %v1293
        %v1295 = vpop.f32.mrf.mxu0
        %1296 = vdwg.mxu0
        %v1297 = vadd.f32 %v1217, %v1294
        %1298 = vrot.lane.b32.xlu0 %v1064, 104
        %v1299 = vpop.permute.xlu0 %1298
        %1300 = vrot.lane.b32.xlu0 %v1065, 104
        %v1301 = vpop.permute.xlu0 %1300
        %v1303 = vsel %vm1066, %v1299, 0
        %v1306 = vsel %vm1066, %v1301, 0
        %1308 = vmatpush.bf16.xpose.msra.mxu0 0
        %1309 = vmatpush.bf16.xpose.msra.mxu0 0
        %1310 = vmatpush.bf16.xpose.msra.mxu0 0
        %1311 = vmatpush.bf16.xpose.msra.mxu0 0
        %1312 = vmatpush.bf16.xpose.msra.mxu0 0
        %1313 = vmatpush.bf16.xpose.msra.mxu0 0
        %1314 = vmatpush.bf16.xpose.msra.mxu0 0
        %1315 = vmatpush.bf16.xpose.msra.mxu0 %v1306
        %1316 = vmatmul.bf16.gmra.mxu0 %v1303
        %v1317 = vpop.f32.mrf.mxu0
        %v1318 = vadd.f32 %v956, %v1317
        %v1319 = vpop.f32.mrf.mxu0
        %1320 = vdwg.mxu0
        %v1321 = vsel %vm1066, %v1318, -inf
        %1322 = vmax.xlane.f32.xlu0 %v1321
        %v1323 = vpop.xlane.xlu0 %1322
        %v1324 = vsub.f32 %v1318, %v1323
        %v1325 = vmul.f32 %v1324, 1.442695
        %v1326 = vpow.pop %v1325
        %v1327 = vsel %vm1066, %v1326, 0.0
        %1328 = vadd.xlane.f32.xlu0 %v1327
        %v1329 = vpop.xlane.xlu0 %1328
        %v1330 = vrcp.pop %v1329
        %v1331 = vmul.f32 %v1326, %v1330
        %v1332 = vpack.c.bf16 %v1331, %v1331
        %1333 = vrot.lane.b32.xlu0 %v1065, 72
        %v1334 = vpop.permute.xlu0 %1333
        %v1336 = vsel %vm1066, %v1332, 0
        %v1339 = vsel %vm1104, %v1334, 0
        %1341 = vmatpush.bf16.msra.mxu0 0
        %1342 = vmatpush.bf16.msra.mxu0 0
        %1343 = vmatpush.bf16.msra.mxu0 0
        %1344 = vmatpush.bf16.msra.mxu0 0
        %1345 = vmatpush.bf16.msra.mxu0 0
        %1346 = vmatpush.bf16.msra.mxu0 0
        %1347 = vmatpush.bf16.msra.mxu0 0
        %1348 = vmatpush.bf16.msra.mxu0 %v1339
        %1349 = vmatmul.bf16.gmra.mxu0 %v1336
        %v1350 = vpop.f32.mrf.mxu0
        %v1351 = vadd.f32 0.0, %v1350
        %v1352 = vpop.f32.mrf.mxu0
        %1353 = vdwg.mxu0
        %v1354 = vpack.c.bf16 %v1351, %v1351
        %v1355 = vld [vmem:[#allocation8 + $0xc] sm:$0xf]
        %v1357 = vsel %vm1066, %v1354, 0
        %v1360 = vsel %vm1104, %v1355, 0
        %1362 = vmatpush.bf16.msra.mxu0 0
        %1363 = vmatpush.bf16.msra.mxu0 0
        %1364 = vmatpush.bf16.msra.mxu0 0
        %1365 = vmatpush.bf16.msra.mxu0 0
        %1366 = vmatpush.bf16.msra.mxu0 0
        %1367 = vmatpush.bf16.msra.mxu0 0
        %1368 = vmatpush.bf16.msra.mxu0 0
        %1369 = vmatpush.bf16.msra.mxu0 %v1360
        %1370 = vmatmul.bf16.gmra.mxu0 %v1357
        %v1371 = vpop.f32.mrf.mxu0
        %v1372 = vadd.f32 0.0, %v1371
        %v1373 = vpop.f32.mrf.mxu0
        %1374 = vdwg.mxu0
        %v1375 = vadd.f32 %v1297, %v1372
        %v1376 = vadd.f32 %v948, %v1375
        %v1377 = vld [vmem:[#allocation10] sm:$0x1]
        %v1379 = vperm.slane %v1377, 0
        %v1381 = vadd.f32 %v1376, %v1379
        %v1382 = vsel %vm957, %v1381, 0.0
        %1383 = vadd.xlane.f32.xlu0 %v1382
        %v1384 = vpop.xlane.xlu0 %1383
        %v1385 = vmul.f32 %v1384, %v967
        %v1386 = vsub.f32 %v1381, %v1385
        %v1387 = vmul.f32 %v1386, %v1386
        %v1388 = vsel %vm957, %v1387, 0.0
        %1389 = vadd.xlane.f32.xlu0 %v1388
        %v1390 = vpop.xlane.xlu0 %1389
        %v1391 = vmul.f32 %v1390, 0.032258064
        %v1392 = vrsqrt.pop %v1391
        %v1393 = vmul.f32 %v1392, %v1391
        %v1394 = vmul.f32 %v1393, %v1392
        %v1395 = vmul.f32 0.5, %v1394
        %v1396 = vsub.f32 1.5, %v1395
        %v1397 = vmul.f32 %v1392, %v1396
        %v1398 = vmul.f32 %v1391, %v1397
        %vm1399 = vcmp.eq.f32.partialorder %v1391, inf
        %v1400 = vsel %vm1399, %v1391, %v1398
        %vm1401 = vcmp.eq.f32.partialorder %v1391, 0.0
        %v1402 = vand.u32 %v1391, 2147483648
        %v1403 = vsel %vm1401, %v1402, %v1400
        %v1404 = vadd.f32 %v1403, 1e-06
        %v1405 = vrcp.pop %v1404
        %v1406 = vperm.slane %v946, 1
        %v1407 = vmul.f32 %v1406, %v1386
        %v1408 = vmul.f32 %v1407, %v1405
        %v1409 = vperm.slane %v947, 1
        %v1410 = vadd.f32 %v1408, %v1409
        %v1411 = vpack.c.bf16 %v1410, %v1410
        %v1412 = vld [vmem:[#allocation11] sm:$0xf]
        %v1413 = vld [vmem:[#allocation11 + $0x4] sm:$0xf]
        %v1414 = vld [vmem:[#allocation11 + $0x8] sm:$0xf]
        %v1415 = vld [vmem:[#allocation11 + $0xc] sm:$0xf]
        %v1416 = vld [vmem:[#allocation13] sm:$0x1]
        %v1418 = vperm.slane %v1416, 0
        %v1424 = vunpack.c.l.b16 %v1412
        %v1425 = vunpack.c.l.b16 %v1413
        %v1426 = vunpack.c.l.b16 %v1414
        %v1427 = vunpack.c.l.b16 %v1415
        %v1428 = vpack.c.b16 %v1425, %v1424
        %v1429 = vpack.c.b16 %v1427, %v1426
        %v1433 = vsel %vm957, %v1411, 0
        %1435 = vmatpush.bf16.msra.mxu0 0
        %1436 = vmatpush.bf16.msra.mxu0 0
        %1437 = vmatpush.bf16.msra.mxu0 0
        %1438 = vmatpush.bf16.msra.mxu0 0
        %1439 = vmatpush.bf16.msra.mxu0 0
        %1440 = vmatpush.bf16.msra.mxu0 0
        %1441 = vmatpush.bf16.msra.mxu0 %v1429
        %1442 = vmatpush.bf16.msra.mxu0 %v1428
        %1443 = vmatmul.bf16.gmra.mxu0 %v1433
        %v1444 = vpop.f32.mrf.mxu0
        %v1445 = vadd.f32 %v1418, %v1444
        %v1446 = vpop.f32.mrf.mxu0
        %1447 = vdwg.mxu0
        %v1448 = vld [vmem:[%s936] sm:$0xff]
        %v1449 = vld [vmem:[%s936 + $0x8] sm:$0xff]
        %v1450 = vpack.c.bf16 %v1449, %v1448
        %v1451 = vld [vmem:[#allocation14] sm:$0xf]
        %v1452 = vld [vmem:[#allocation14 + $0x4] sm:$0xf]
        %v1453 = vld [vmem:[#allocation14 + $0x8] sm:$0xf]
        %v1454 = vld [vmem:[#allocation14 + $0xc] sm:$0xf]
        %v1455 = vld [vmem:[#allocation16] sm:$0x1]
        %v1457 = vperm.slane %v1455, 0
        %v1463 = vunpack.c.l.b16 %v1451
        %v1464 = vunpack.c.l.b16 %v1452
        %v1465 = vunpack.c.l.b16 %v1453
        %v1466 = vunpack.c.l.b16 %v1454
        %v1467 = vpack.c.b16 %v1464, %v1463
        %v1468 = vpack.c.b16 %v1466, %v1465
        %v1472 = vsel %vm957, %v1450, 0
        %1474 = vmatpush.bf16.msra.mxu0 0
        %1475 = vmatpush.bf16.msra.mxu0 0
        %1476 = vmatpush.bf16.msra.mxu0 0
        %1477 = vmatpush.bf16.msra.mxu0 0
        %1478 = vmatpush.bf16.msra.mxu0 0
        %1479 = vmatpush.bf16.msra.mxu0 0
        %1480 = vmatpush.bf16.msra.mxu0 %v1468
        %1481 = vmatpush.bf16.msra.mxu0 %v1467
        %1482 = vmatmul.bf16.gmra.mxu0 %v1472
        %v1483 = vpop.f32.mrf.mxu0
        %v1484 = vadd.f32 %v1457, %v1483
        %v1485 = vpop.f32.mrf.mxu0
        %v1486 = vadd.f32 %v1457, %v1485
        %1487 = vdwg.mxu0
        %v1488 = vld [vmem:[%s943] sm:$0xff]
        %v1489 = vpack.c.bf16 %v1445, %v1445
        %v1490 = vpack.c.bf16 %v1486, %v1484
        %v1492 = vsel %vm1066, %v1489, 0
        %v1495 = vsel %vm1066, %v1490, 0
        %1497 = vmatpush.bf16.xpose.msra.mxu0 0
        %1498 = vmatpush.bf16.xpose.msra.mxu0 0
        %1499 = vmatpush.bf16.xpose.msra.mxu0 0
        %1500 = vmatpush.bf16.xpose.msra.mxu0 0
        %1501 = vmatpush.bf16.xpose.msra.mxu0 0
        %1502 = vmatpush.bf16.xpose.msra.mxu0 0
        %1503 = vmatpush.bf16.xpose.msra.mxu0 0
        %1504 = vmatpush.bf16.xpose.msra.mxu0 %v1495
        %1505 = vmatmul.bf16.gmra.mxu0 %v1492
        %v1506 = vpop.f32.mrf.mxu0
        %v1507 = vadd.f32 %v1488, %v1506
        %v1508 = vpop.f32.mrf.mxu0
        %1509 = vdwg.mxu0
        %vm1510 = vcmask 130048
        %v1511 = vsel %vm1510, %v1507, -inf
        %1512 = vmax.xlane.f32.xlu0 %v1511
        %v1513 = vpop.xlane.xlu0 %1512
        %v1514 = vsub.f32 %v1507, %v1513
        %v1515 = vmul.f32 %v1514, 1.442695
        %v1516 = vpow.pop %v1515
        %v1517 = vsel %vm1510, %v1516, 0.0
        %1518 = vadd.xlane.f32.xlu0 %v1517
        %v1519 = vpop.xlane.xlu0 %1518
        %v1520 = vrcp.pop %v1519
        %v1521 = vmul.f32 %v1516, %v1520
        %v1522 = vpack.c.bf16 %v1521, %v1521
        %1524 = vrot.lane.b32.xlu0 %v1490, 96
        %v1525 = vpop.permute.xlu0 %1524
        %v1528 = vsel %vm1510, %v1522, 0
        %1530 = vmatpush.bf16.msra.mxu0 0
        %1531 = vmatpush.bf16.msra.mxu0 0
        %1532 = vmatpush.bf16.msra.mxu0 0
        %1533 = vmatpush.bf16.msra.mxu0 0
        %1534 = vmatpush.bf16.msra.mxu0 0
        %1535 = vmatpush.bf16.msra.mxu0 0
        %1536 = vmatpush.bf16.msra.mxu0 0
        %1537 = vmatpush.bf16.msra.mxu0 %v1525
        %1538 = vmatmul.bf16.gmra.mxu0 %v1528
        %v1539 = vpop.f32.mrf.mxu0
        %v1540 = vadd.f32 0.0, %v1539
        %v1541 = vpop.f32.mrf.mxu0
        %1542 = vdwg.mxu0
        %v1543 = vpack.c.bf16 %v1540, %v1540
        %v1544 = vld [vmem:[#allocation17] sm:$0xf]
        %1546 = vrot.lane.b32.xlu0 %v1489, 120
        %v1547 = vpop.permute.xlu0 %1546
        %1548 = vrot.lane.b32.xlu0 %v1490, 120
        %v1549 = vpop.permute.xlu0 %1548
        %v1551 = vsel %vm1066, %v1547, 0
        %v1554 = vsel %vm1066, %v1549, 0
        %1556 = vmatpush.bf16.xpose.msra.mxu0 0
        %1557 = vmatpush.bf16.xpose.msra.mxu0 0
        %1558 = vmatpush.bf16.xpose.msra.mxu0 0
        %1559 = vmatpush.bf16.xpose.msra.mxu0 0
        %1560 = vmatpush.bf16.xpose.msra.mxu0 0
        %1561 = vmatpush.bf16.xpose.msra.mxu0 0
        %1562 = vmatpush.bf16.xpose.msra.mxu0 0
        %1563 = vmatpush.bf16.xpose.msra.mxu0 %v1554
        %1564 = vmatmul.bf16.gmra.mxu0 %v1551
        %v1565 = vpop.f32.mrf.mxu0
        %v1566 = vadd.f32 %v1488, %v1565
        %v1567 = vpop.f32.mrf.mxu0
        %1568 = vdwg.mxu0
        %v1569 = vsel %vm1510, %v1566, -inf
        %1570 = vmax.xlane.f32.xlu0 %v1569
        %v1571 = vpop.xlane.xlu0 %1570
        %v1572 = vsub.f32 %v1566, %v1571
        %v1573 = vmul.f32 %v1572, 1.442695
        %v1574 = vpow.pop %v1573
        %v1575 = vsel %vm1510, %v1574, 0.0
        %1576 = vadd.xlane.f32.xlu0 %v1575
        %v1577 = vpop.xlane.xlu0 %1576
        %v1578 = vrcp.pop %v1577
        %v1579 = vmul.f32 %v1574, %v1578
        %v1580 = vpack.c.bf16 %v1579, %v1579
        %1581 = vrot.lane.b32.xlu0 %v1490, 88
        %v1582 = vpop.permute.xlu0 %1581
        %v1585 = vsel %vm1510, %v1580, 0
        %1587 = vmatpush.bf16.msra.mxu0 0
        %1588 = vmatpush.bf16.msra.mxu0 0
        %1589 = vmatpush.bf16.msra.mxu0 0
        %1590 = vmatpush.bf16.msra.mxu0 0
        %1591 = vmatpush.bf16.msra.mxu0 0
        %1592 = vmatpush.bf16.msra.mxu0 0
        %1593 = vmatpush.bf16.msra.mxu0 0
        %1594 = vmatpush.bf16.msra.mxu0 %v1582
        %1595 = vmatmul.bf16.gmra.mxu0 %v1585
        %v1596 = vpop.f32.mrf.mxu0
        %v1597 = vadd.f32 0.0, %v1596
        %v1598 = vpop.f32.mrf.mxu0
        %1599 = vdwg.mxu0
        %v1600 = vpack.c.bf16 %v1597, %v1597
        %v1601 = vld [vmem:[#allocation17 + $0x4] sm:$0xf]
        %v1603 = vsel %vm1066, %v1600, 0
        %v1606 = vsel %vm1104, %v1601, 0
        %1608 = vmatpush.bf16.msra.mxu0 0
        %1609 = vmatpush.bf16.msra.mxu0 0
        %1610 = vmatpush.bf16.msra.mxu0 0
        %1611 = vmatpush.bf16.msra.mxu0 0
        %1612 = vmatpush.bf16.msra.mxu0 0
        %1613 = vmatpush.bf16.msra.mxu0 0
        %1614 = vmatpush.bf16.msra.mxu0 0
        %1615 = vmatpush.bf16.msra.mxu0 %v1606
        %1616 = vmatmul.bf16.gmra.mxu0 %v1603
        %v1617 = vpop.f32.mrf.mxu0
        %v1618 = vadd.f32 0.0, %v1617
        %v1619 = vpop.f32.mrf.mxu0
        %1620 = vdwg.mxu0
        %v1622 = vsel %vm1066, %v1543, 0
        %v1625 = vsel %vm1104, %v1544, 0
        %1627 = vmatpush.bf16.msra.mxu0 0
        %1628 = vmatpush.bf16.msra.mxu0 0
        %1629 = vmatpush.bf16.msra.mxu0 0
        %1630 = vmatpush.bf16.msra.mxu0 0
        %1631 = vmatpush.bf16.msra.mxu0 0
        %1632 = vmatpush.bf16.msra.mxu0 0
        %1633 = vmatpush.bf16.msra.mxu0 0
        %1634 = vmatpush.bf16.msra.mxu0 %v1625
        %1635 = vmatmul.bf16.gmra.mxu0 %v1622
        %v1636 = vpop.f32.mrf.mxu0
        %v1637 = vadd.f32 %v1618, %v1636
        %v1638 = vpop.f32.mrf.mxu0
        %1639 = vdwg.mxu0
        %1640 = vrot.lane.b32.xlu0 %v1489, 112
        %v1641 = vpop.permute.xlu0 %1640
        %1642 = vrot.lane.b32.xlu0 %v1490, 112
        %v1643 = vpop.permute.xlu0 %1642
        %v1645 = vsel %vm1066, %v1641, 0
        %v1648 = vsel %vm1066, %v1643, 0
        %1650 = vmatpush.bf16.xpose.msra.mxu0 0
        %1651 = vmatpush.bf16.xpose.msra.mxu0 0
        %1652 = vmatpush.bf16.xpose.msra.mxu0 0
        %1653 = vmatpush.bf16.xpose.msra.mxu0 0
        %1654 = vmatpush.bf16.xpose.msra.mxu0 0
        %1655 = vmatpush.bf16.xpose.msra.mxu0 0
        %1656 = vmatpush.bf16.xpose.msra.mxu0 0
        %1657 = vmatpush.bf16.xpose.msra.mxu0 %v1648
        %1658 = vmatmul.bf16.gmra.mxu0 %v1645
        %v1659 = vpop.f32.mrf.mxu0
        %v1660 = vadd.f32 %v1488, %v1659
        %v1661 = vpop.f32.mrf.mxu0
        %1662 = vdwg.mxu0
        %v1663 = vsel %vm1510, %v1660, -inf
        %1664 = vmax.xlane.f32.xlu0 %v1663
        %v1665 = vpop.xlane.xlu0 %1664
        %v1666 = vsub.f32 %v1660, %v1665
        %v1667 = vmul.f32 %v1666, 1.442695
        %v1668 = vpow.pop %v1667
        %v1669 = vsel %vm1510, %v1668, 0.0
        %1670 = vadd.xlane.f32.xlu0 %v1669
        %v1671 = vpop.xlane.xlu0 %1670
        %v1672 = vrcp.pop %v1671
        %v1673 = vmul.f32 %v1668, %v1672
        %v1674 = vpack.c.bf16 %v1673, %v1673
        %1675 = vrot.lane.b32.xlu0 %v1490, 80
        %v1676 = vpop.permute.xlu0 %1675
        %v1679 = vsel %vm1510, %v1674, 0
        %1681 = vmatpush.bf16.msra.mxu0 0
        %1682 = vmatpush.bf16.msra.mxu0 0
        %1683 = vmatpush.bf16.msra.mxu0 0
        %1684 = vmatpush.bf16.msra.mxu0 0
        %1685 = vmatpush.bf16.msra.mxu0 0
        %1686 = vmatpush.bf16.msra.mxu0 0
        %1687 = vmatpush.bf16.msra.mxu0 0
        %1688 = vmatpush.bf16.msra.mxu0 %v1676
        %1689 = vmatmul.bf16.gmra.mxu0 %v1679
        %v1690 = vpop.f32.mrf.mxu0
        %v1691 = vadd.f32 0.0, %v1690
        %v1692 = vpop.f32.mrf.mxu0
        %1693 = vdwg.mxu0
        %v1694 = vpack.c.bf16 %v1691, %v1691
        %v1695 = vld [vmem:[#allocation17 + $0x8] sm:$0xf]
        %v1697 = vsel %vm1066, %v1694, 0
        %v1700 = vsel %vm1104, %v1695, 0
        %1702 = vmatpush.bf16.msra.mxu0 0
        %1703 = vmatpush.bf16.msra.mxu0 0
        %1704 = vmatpush.bf16.msra.mxu0 0
        %1705 = vmatpush.bf16.msra.mxu0 0
        %1706 = vmatpush.bf16.msra.mxu0 0
        %1707 = vmatpush.bf16.msra.mxu0 0
        %1708 = vmatpush.bf16.msra.mxu0 0
        %1709 = vmatpush.bf16.msra.mxu0 %v1700
        %1710 = vmatmul.bf16.gmra.mxu0 %v1697
        %v1711 = vpop.f32.mrf.mxu0
        %v1712 = vadd.f32 0.0, %v1711
        %v1713 = vpop.f32.mrf.mxu0
        %1714 = vdwg.mxu0
        %v1715 = vadd.f32 %v1637, %v1712
        %1716 = vrot.lane.b32.xlu0 %v1489, 104
        %v1717 = vpop.permute.xlu0 %1716
        %1718 = vrot.lane.b32.xlu0 %v1490, 104
        %v1719 = vpop.permute.xlu0 %1718
        %v1721 = vsel %vm1066, %v1717, 0
        %v1724 = vsel %vm1066, %v1719, 0
        %1726 = vmatpush.bf16.xpose.msra.mxu0 0
        %1727 = vmatpush.bf16.xpose.msra.mxu0 0
        %1728 = vmatpush.bf16.xpose.msra.mxu0 0
        %1729 = vmatpush.bf16.xpose.msra.mxu0 0
        %1730 = vmatpush.bf16.xpose.msra.mxu0 0
        %1731 = vmatpush.bf16.xpose.msra.mxu0 0
        %1732 = vmatpush.bf16.xpose.msra.mxu0 0
        %1733 = vmatpush.bf16.xpose.msra.mxu0 %v1724
        %1734 = vmatmul.bf16.gmra.mxu0 %v1721
        %v1735 = vpop.f32.mrf.mxu0
        %v1736 = vadd.f32 %v1488, %v1735
        %v1737 = vpop.f32.mrf.mxu0
        %1738 = vdwg.mxu0
        %v1739 = vsel %vm1510, %v1736, -inf
        %1740 = vmax.xlane.f32.xlu0 %v1739
        %v1741 = vpop.xlane.xlu0 %1740
        %v1742 = vsub.f32 %v1736, %v1741
        %v1743 = vmul.f32 %v1742, 1.442695
        %v1744 = vpow.pop %v1743
        %v1745 = vsel %vm1510, %v1744, 0.0
        %1746 = vadd.xlane.f32.xlu0 %v1745
        %v1747 = vpop.xlane.xlu0 %1746
        %v1748 = vrcp.pop %v1747
        %v1749 = vmul.f32 %v1744, %v1748
        %v1750 = vpack.c.bf16 %v1749, %v1749
        %1751 = vrot.lane.b32.xlu0 %v1490, 72
        %v1752 = vpop.permute.xlu0 %1751
        %v1755 = vsel %vm1510, %v1750, 0
        %1757 = vmatpush.bf16.msra.mxu0 0
        %1758 = vmatpush.bf16.msra.mxu0 0
        %1759 = vmatpush.bf16.msra.mxu0 0
        %1760 = vmatpush.bf16.msra.mxu0 0
        %1761 = vmatpush.bf16.msra.mxu0 0
        %1762 = vmatpush.bf16.msra.mxu0 0
        %1763 = vmatpush.bf16.msra.mxu0 0
        %1764 = vmatpush.bf16.msra.mxu0 %v1752
        %1765 = vmatmul.bf16.gmra.mxu0 %v1755
        %v1766 = vpop.f32.mrf.mxu0
        %v1767 = vadd.f32 0.0, %v1766
        %v1768 = vpop.f32.mrf.mxu0
        %1769 = vdwg.mxu0
        %v1770 = vpack.c.bf16 %v1767, %v1767
        %v1771 = vld [vmem:[#allocation17 + $0xc] sm:$0xf]
        %v1773 = vsel %vm1066, %v1770, 0
        %v1776 = vsel %vm1104, %v1771, 0
        %1778 = vmatpush.bf16.msra.mxu0 0
        %1779 = vmatpush.bf16.msra.mxu0 0
        %1780 = vmatpush.bf16.msra.mxu0 0
        %1781 = vmatpush.bf16.msra.mxu0 0
        %1782 = vmatpush.bf16.msra.mxu0 0
        %1783 = vmatpush.bf16.msra.mxu0 0
        %1784 = vmatpush.bf16.msra.mxu0 0
        %1785 = vmatpush.bf16.msra.mxu0 %v1776
        %1786 = vmatmul.bf16.gmra.mxu0 %v1773
        %v1787 = vpop.f32.mrf.mxu0
        %v1788 = vadd.f32 0.0, %v1787
        %v1789 = vpop.f32.mrf.mxu0
        %1790 = vdwg.mxu0
        %v1791 = vadd.f32 %v1715, %v1788
        %v1792 = vadd.f32 %v1381, %v1791
        %v1793 = vld [vmem:[#allocation19] sm:$0x1]
        %v1795 = vperm.slane %v1793, 0
        %v1797 = vadd.f32 %v1792, %v1795
        %v1798 = vsel %vm957, %v1797, 0.0
        %1799 = vadd.xlane.f32.xlu0 %v1798
        %v1800 = vpop.xlane.xlu0 %1799
        %v1801 = vmul.f32 %v1800, %v967
        %v1802 = vsub.f32 %v1797, %v1801
        %v1803 = vmul.f32 %v1802, %v1802
        %v1804 = vsel %vm957, %v1803, 0.0
        %1805 = vadd.xlane.f32.xlu0 %v1804
        %v1806 = vpop.xlane.xlu0 %1805
        %v1807 = vmul.f32 %v1806, 0.032258064
        %v1808 = vrsqrt.pop %v1807
        %v1809 = vmul.f32 %v1808, %v1807
        %v1810 = vmul.f32 %v1809, %v1808
        %v1811 = vmul.f32 0.5, %v1810
        %v1812 = vsub.f32 1.5, %v1811
        %v1813 = vmul.f32 %v1808, %v1812
        %v1814 = vmul.f32 %v1807, %v1813
        %vm1815 = vcmp.eq.f32.partialorder %v1807, inf
        %v1816 = vsel %vm1815, %v1807, %v1814
        %vm1817 = vcmp.eq.f32.partialorder %v1807, 0.0
        %v1818 = vand.u32 %v1807, 2147483648
        %v1819 = vsel %vm1817, %v1818, %v1816
        %v1820 = vadd.f32 %v1819, 1e-06
        %v1821 = vrcp.pop %v1820
        %v1822 = vperm.slane %v946, 2
        %v1823 = vmul.f32 %v1822, %v1802
        %v1824 = vmul.f32 %v1823, %v1821
        %v1825 = vperm.slane %v947, 2
        %v1826 = vadd.f32 %v1824, %v1825
        %v1827 = vpack.c.bf16 %v1826, %v1826
        %v1828 = vld [vmem:[#allocation20] sm:$0xf]
        %v1829 = vld [vmem:[#allocation20 + $0x4] sm:$0xf]
        %v1830 = vld [vmem:[#allocation20 + $0x8] sm:$0xf]
        %v1831 = vld [vmem:[#allocation20 + $0xc] sm:$0xf]
        %v1832 = vld [vmem:[#allocation22] sm:$0x1]
        %v1834 = vperm.slane %v1832, 0
        %v1840 = vunpack.c.l.b16 %v1828
        %v1841 = vunpack.c.l.b16 %v1829
        %v1842 = vunpack.c.l.b16 %v1830
        %v1843 = vunpack.c.l.b16 %v1831
        %v1844 = vpack.c.b16 %v1841, %v1840
        %v1845 = vpack.c.b16 %v1843, %v1842
        %v1849 = vsel %vm957, %v1827, 0
        %1851 = vmatpush.bf16.msra.mxu0 0
        %1852 = vmatpush.bf16.msra.mxu0 0
        %1853 = vmatpush.bf16.msra.mxu0 0
        %1854 = vmatpush.bf16.msra.mxu0 0
        %1855 = vmatpush.bf16.msra.mxu0 0
        %1856 = vmatpush.bf16.msra.mxu0 0
        %1857 = vmatpush.bf16.msra.mxu0 %v1845
        %1858 = vmatpush.bf16.msra.mxu0 %v1844
        %1859 = vmatmul.bf16.gmra.mxu0 %v1849
        %v1860 = vpop.f32.mrf.mxu0
        %v1861 = vadd.f32 %v1834, %v1860
        %v1862 = vpop.f32.mrf.mxu0
        %1863 = vdwg.mxu0
        %v1864 = vmax.f32 %v1861, 0.0
        %v1865 = vpack.c.bf16 %v1864, %v1864
        %v1866 = vld [vmem:[%s17] sm:$0xf]
        %v1867 = vld [vmem:[%s17 + $0x4] sm:$0xf]
        %v1868 = vld [vmem:[%s17 + $0x8] sm:$0xf]
        %v1869 = vld [vmem:[%s17 + $0xc] sm:$0xf]
        %v1870 = vld [vmem:[%s17 + $0x10] sm:$0xf]
        %v1871 = vld [vmem:[%s17 + $0x14] sm:$0xf]
        %v1872 = vld [vmem:[%s17 + $0x18] sm:$0xf]
        %v1873 = vld [vmem:[%s17 + $0x1c] sm:$0xf]
        %v1874 = vld [vmem:[%s17 + $0x20] sm:$0xf]
        %v1875 = vld [vmem:[%s17 + $0x24] sm:$0xf]
        %v1876 = vld [vmem:[%s17 + $0x28] sm:$0xf]
        %v1877 = vld [vmem:[%s17 + $0x2c] sm:$0xf]
        %v1878 = vld [vmem:[%s17 + $0x30] sm:$0xf]
        %v1879 = vld [vmem:[%s17 + $0x34] sm:$0xf]
        %v1880 = vld [vmem:[%s17 + $0x38] sm:$0xf]
        %v1881 = vld [vmem:[%s17 + $0x3c] sm:$0xf]
        %v1882 = vld [vmem:[%s18] sm:$0x1]
        %v1884 = vperm.slane %v1882, 0
        %v1902 = vunpack.c.l.b16 %v1866
        %v1903 = vunpack.c.l.b16 %v1867
        %v1904 = vunpack.c.l.b16 %v1868
        %v1905 = vunpack.c.l.b16 %v1869
        %v1906 = vunpack.c.l.b16 %v1870
        %v1907 = vunpack.c.l.b16 %v1871
        %v1908 = vunpack.c.l.b16 %v1872
        %v1909 = vunpack.c.l.b16 %v1873
        %v1910 = vunpack.c.l.b16 %v1874
        %v1911 = vunpack.c.l.b16 %v1875
        %v1912 = vunpack.c.l.b16 %v1876
        %v1913 = vunpack.c.l.b16 %v1877
        %v1914 = vunpack.c.l.b16 %v1878
        %v1915 = vunpack.c.l.b16 %v1879
        %v1916 = vunpack.c.l.b16 %v1880
        %v1917 = vunpack.c.l.b16 %v1881
        %v1918 = vpack.c.b16 %v1903, %v1902
        %v1919 = vpack.c.b16 %v1905, %v1904
        %v1920 = vpack.c.b16 %v1907, %v1906
        %v1921 = vpack.c.b16 %v1909, %v1908
        %v1922 = vpack.c.b16 %v1911, %v1910
        %v1923 = vpack.c.b16 %v1913, %v1912
        %v1924 = vpack.c.b16 %v1915, %v1914
        %v1925 = vpack.c.b16 %v1917, %v1916
        %1934 = vmatpush.bf16.msra.mxu0 %v1925
        %1935 = vmatpush.bf16.msra.mxu0 %v1924
        %1936 = vmatpush.bf16.msra.mxu0 %v1923
        %1937 = vmatpush.bf16.msra.mxu0 %v1922
        %1938 = vmatpush.bf16.msra.mxu0 %v1921
        %1939 = vmatpush.bf16.msra.mxu0 %v1920
        %1940 = vmatpush.bf16.msra.mxu0 %v1919
        %1941 = vmatpush.bf16.msra.mxu0 %v1918
        %1942 = vmatmul.bf16.gmra.mxu0 %v1865
        %v1943 = vpop.f32.mrf.mxu0
        %v1944 = vadd.f32 %v1884, %v1943
        %v1945 = vpop.f32.mrf.mxu0
        %1946 = vdwg.mxu0
        %v1947 = vadd.f32 %v1797, %v1944
        %1948 = vst.msk [vmem:[%s927] sm:$0xff] %vm957, %v1947
        %s1949 = sand.u32 %s523, 1
        %s1950 = scalar_lea.sflag [#allocation4], %s1949
        %s1951 = sand.u32 %s523, 1
        %s1952 = smul.addr %s1951, 8
        %s1953 = scalar_lea.vmem [#allocation26], %s1952
        // Predicated region
        $region165: #{tpu_custom_call.1} parent=103 // pred_check
          %p1954 = pneg %p533
        $region166: #{tpu_custom_call.1} parent=103 // pred_check_branch
          %1956 = sbr.rel (%p1954) target = $region168
        $region167: #{tpu_custom_call.1} parent=103 // pred_region
          %1958 = vsyncadd %s1950, 0
          %s1959 = sadd.s32 %s48, %s47
          %s1960 = smul.addr %s1959, 8
          %s1961 = scalar_lea.hbm %s21, %s1960
          %s1963 = sshll.u32 %s1953, 4
          %s1964 = int_to_ptr.vmem [resolvable:$true] %s1963
          %s1965 = sshll.u32 %s1961, 4
          %s1966 = int_to_ptr.hbm [resolvable:$true] %s1965
          %1968 = dma.vmem_to_hbm [thread:$0]  %s1964, 128, %s1966, %s1950
        $region168: #{tpu_custom_call.1} parent=103 // pred_fallthru
          _
      $region104: #{tpu_custom_call.1} parent=5 // pred_fallthru
        _
      %p1969 = scmp.le.s32.totalorder 2, %s38
      // Predicated region
      $region169: #{tpu_custom_call.1} parent=5 // pred_check
        %p1970 = pneg %p1969
      $region170: #{tpu_custom_call.1} parent=5 // pred_check_branch
        %1972 = sbr.rel (%p1970) target = $region172
      $region171: #{tpu_custom_call.1} parent=5 // pred_region
        %s1973 = ssub.s32 %s38, 2
        // Predicated region
        $region173: #{tpu_custom_call.1} parent=171 // pred_check
          %p1974 = pneg %p539
        $region174: #{tpu_custom_call.1} parent=171 // pred_check_branch
          %1976 = sbr.rel (%p1974) target = $region176
        $region175: #{tpu_custom_call.1} parent=171 // pred_region
          %s1977 = sand.u32 %s524, 1
          %s1978 = scalar_lea.sflag [#allocation4], %s1977
          %s1979 = sand.u32 %s524, 1
          %s1980 = smul.addr %s1979, 8
          %s1981 = scalar_lea.vmem [#allocation26], %s1980
          %1983 = dma.done %s1978, 128
        $region176: #{tpu_custom_call.1} parent=171 // pred_fallthru
          _
      $region172: #{tpu_custom_call.1} parent=5 // pred_fallthru
        _
    $region6: #{tpu_custom_call.1} parent=1 // loop_footer
      %s42 = sadd.s32 1, %s38
    $region7: #{tpu_custom_call.1} parent=1 // loop_footer_branch
      %37 = sbr.rel target = $region3
    $region8: #{tpu_custom_call.1} parent=1 // loop_exit
      _
    %1984 = vsyncpa [#allocation3], 1
    %s1985 = scalar_lea.sflag [#allocation3], 1
    %1986 = vsyncpa %s1985, 1
    %1987 = vsyncpa [#allocation6], 1
    %1988 = vsyncpa [#allocation9], 1
    %1989 = vsyncpa [#allocation12], 1
    %1990 = vsyncpa [#allocation15], 1
    %1991 = vsyncpa [#allocation18], 1
    %1992 = vsyncpa [#allocation21], 1
    %1993 = vsyncpa [#allocation24], 1
    %1994 = vsyncpa [#allocation4], 1
    %s1995 = scalar_lea.sflag [#allocation4], 1
    %1996 = vsyncpa %s1995, 1

</llo_original>
